<compile_context>
chip_gen: v7x
topology: tpu7x:2x2x1
jax: 0.10.0
libtpu: 0.0.40
codegen_flags: <defaults>
</compile_context>

<pallas_src>
import functools
import math

import numpy as np
import jax
import jax.numpy as jnp
from jax.experimental import pallas as pl
from jax.experimental.pallas import tpu as pltpu  # noqa: F401  (TPU backend)

EPS = 1e-5


# --------------------------------------------------------------------------
# Fused Pallas kernel: whole INSTA forward for the batch in one invocation.
# --------------------------------------------------------------------------
def _insta_kernel(xpad_ref, conv_w_ref, conv_b_ref, fnp_ref, dct_ref,
                  fc1_ref, fc2_ref, fnc_ref,
                  u1w_ref, u1ss_ref, u2w_ref, u2ss_ref,
                  l1w_ref, l1ss_ref, l2w_ref, l2ss_ref,
                  adapted_ref, skt_ref, ckt_ref,
                  *, N, C, H, W, k):
    HW = H * W
    KK = k * k
    pad = (k - 1) // 2

    xpad = xpad_ref[...]                              # (N, H+2p, W+2p, C) NHWC, zero-padded
    x4 = xpad[:, pad:pad + H, pad:pad + W, :]         # (N, H, W, C)
    x_rows = x4.reshape(N * HW, C)                    # (N*H*W, C)  rows x channels

    def fc_bn_act(v, w_ref, ss_ref, act):
        # 1x1 conv as matmul; conv-bias + BN folded into per-column scale/shift.
        y = jnp.dot(v, w_ref[...], preferred_element_type=jnp.float32)
        y = y * ss_ref[0:1, :] + ss_ref[1:2, :]
        return jnp.maximum(y, 0.0) if act == "relu" else jax.nn.sigmoid(y)

    def spatial_kernel(rows, m):
        # conv1x1 (C -> k^2) + bias, then fn_partial BN (per-HW-position affine).
        sk = jnp.dot(rows, conv_w_ref[...], preferred_element_type=jnp.float32)
        sk = (sk + conv_b_ref[...]).reshape(m, HW, KK)
        return sk * fnp_ref[:, 0:1][None] + fnp_ref[:, 1:2][None]       # (m, HW, KK)

    def channel_kernel(rows, m):
        # FcaNet attention: DCT-weighted pool -> FC/ReLU -> FC/Sigmoid,
        # then fn_channel BN.  Output columns are tap-major: index = t*C + c.
        x3 = rows.reshape(m, HW, C)
        y = jnp.sum(x3 * dct_ref[...][None], axis=1)                    # (m, C)
        h = jnp.maximum(
            jnp.dot(y, fc1_ref[...], preferred_element_type=jnp.float32), 0.0)
        z = jax.nn.sigmoid(
            jnp.dot(h, fc2_ref[...], preferred_element_type=jnp.float32))  # (m, KK*C)
        return z * fnc_ref[0:1, :] + fnc_ref[1:2, :]                    # (m, KK*C)

    # ---- CLM: task attention map (sum over the support/batch dim) --------
    y = fc_bn_act(x_rows, u1w_ref, u1ss_ref, "relu")                    # (N*HW, 2C)
    y = fc_bn_act(y, u2w_ref, u2ss_ref, "relu")                         # (N*HW, 2C)
    y = jnp.sum(y.reshape(N, HW, 2 * C), axis=0)                        # (HW, 2C)
    y = fc_bn_act(y, l1w_ref, l1ss_ref, "relu")                         # (HW, 2C)
    task_rows = fc_bn_act(y, l2w_ref, l2ss_ref, "sigmoid")              # (HW, C)

    # ---- instance & task dynamic-kernel factors ---------------------------
    sk_i = spatial_kernel(x_rows, N)                                    # (N, HW, KK)
    ck_i = channel_kernel(x_rows, N)                                    # (N, KK*C)
    sk_t = spatial_kernel(task_rows, 1)                                 # (1, HW, KK)
    ck_t = channel_kernel(task_rows, 1)                                 # (1, KK*C)

    skt_ref[...] = sk_t.reshape(HW, KK)                                 # task spatial factor
    ckt_ref[...] = ck_t                                                 # task channel factor

    # combined (instance * task) kernel, kept factorized (rank-1 per tap)
    spc = (sk_i * sk_t).reshape(N, H, W, KK)                            # spatial factor
    chc = ck_i * ck_t                                                   # (N, KK*C), tap-major

    # ---- apply dynamic kernel: out = mean_t(xpad_shift_t * spc_t * chc_t) + x
    acc = jnp.zeros_like(x4)
    for t in range(KK):                                                 # k*k unrolled taps
        dy, dx = t // k, t % k
        patch = xpad[:, dy:dy + H, dx:dx + W, :]                        # (N, H, W, C)
        s = spc[:, :, :, t:t + 1]                                       # (N, H, W, 1)
        c = chc[:, t * C:(t + 1) * C][:, None, None, :]                 # (N, 1, 1, C)
        acc = acc + patch * s * c
    adapted_ref[...] = (acc * (1.0 / KK) + x4).reshape(N * HW, C)


def _full_spec(shape):
    return pl.BlockSpec(shape, lambda: (0,) * len(shape))


# --------------------------------------------------------------------------
# Wrapper: BN folding, layout prep, single pallas_call, output assembly.
# --------------------------------------------------------------------------
def _fold_bn(bn, eps=EPS):
    gamma, beta, mean, var = bn
    scale = gamma * jax.lax.rsqrt(var + eps)
    return scale, beta - mean * scale


def _fold_conv_bn(bias, bn):
    s, t = _fold_bn(bn)
    return jnp.stack([s, bias * s + t])               # (2, Cout): row0 scale, row1 shift


def insta_forward(x, params, k, sigma):
    N, C, H, W = x.shape
    HW, KK = H * W, k * k
    Cs = C // sigma
    pad = (k - 1) // 2

    # Single NCHW -> NHWC transpose at the API boundary + tiny halo pad.
    x_nhwc = jnp.transpose(x, (0, 2, 3, 1))
    x_pad = jnp.pad(x_nhwc, ((0, 0), (pad, pad), (pad, pad), (0, 0)))

    # Parameter preprocessing (tiny XLA ops): fold BN stats; permute fc2 to
    # tap-major columns so the kernel never reshapes across the lane axis.
    conv_b = params["conv_b"].reshape(1, KK)
    fnp = jnp.stack(_fold_bn(params["fn_partial"]), axis=1)             # (HW, 2)
    fnc_s, fnc_t = _fold_bn(params["fn_channel"])
    fnc = jnp.stack([jnp.tile(fnc_s, KK), jnp.tile(fnc_t, KK)])         # (2, KK*C)
    dct2 = params["dct_w"].reshape(C, HW).T                             # (HW, C)
    fc2_wp = params["fc2_w"].reshape(Cs, C, KK).transpose(0, 2, 1).reshape(Cs, KK * C)
    u1_ss = _fold_conv_bn(params["clm_u1_b"], params["clm_u1_bn"])
    u2_ss = _fold_conv_bn(params["clm_u2_b"], params["clm_u2_bn"])
    l1_ss = _fold_conv_bn(params["clm_l1_b"], params["clm_l1_bn"])
    l2_ss = _fold_conv_bn(params["clm_l2_b"], params["clm_l2_bn"])

    inputs = [x_pad, params["conv_w"], conv_b, fnp, dct2,
              params["fc1_w"], fc2_wp, fnc,
              params["clm_u1_w"], u1_ss, params["clm_u2_w"], u2_ss,
              params["clm_l1_w"], l1_ss, params["clm_l2_w"], l2_ss]

    adapted_rows, skt, ckt = pl.pallas_call(
        functools.partial(_insta_kernel, N=N, C=C, H=H, W=W, k=k),
        out_shape=(jax.ShapeDtypeStruct((N * HW, C), jnp.float32),
                   jax.ShapeDtypeStruct((HW, KK), jnp.float32),
                   jax.ShapeDtypeStruct((1, KK * C), jnp.float32)),
        in_specs=[_full_spec(a.shape) for a in inputs],
        out_specs=(_full_spec((N * HW, C)),
                   _full_spec((HW, KK)),
                   _full_spec((1, KK * C))),
    )(*inputs)

    # Assemble PyTorch-facing outputs (single transpose back to NCHW).
    adapted = adapted_rows.reshape(N, H, W, C).transpose(0, 3, 1, 2)    # (N, C, H, W)
    ck_t = ckt.reshape(KK, C).T                                         # (C, KK)
    task_kernel = (skt[None, None, :, :] * ck_t[None, :, None, :]
                   ).reshape(1, C, H, W, k, k)
    return adapted, task_kernel


# --------------------------------------------------------------------------
# Deterministic parameter construction (matches the reference module layout).
# --------------------------------------------------------------------------
def _low16_indices():
    mx = [0, 0, 1, 1, 0, 2, 2, 1, 2, 0, 3, 4, 0, 1, 3, 0]
    my = [0, 1, 0, 1, 2, 0, 1, 2, 2, 3, 0, 0, 4, 3, 1, 5]
    return mx, my


def build_dct_filter(tile_x, tile_y, channel):
    mx, my = _low16_indices()
    mx = [v * (tile_x // 7) for v in mx]
    my = [v * (tile_y // 7) for v in my]

    def bf(pos, freq, pos_total):
        r = math.cos(math.pi * freq * (pos + 0.5) / pos_total) / math.sqrt(pos_total)
        return r if freq == 0 else r * math.sqrt(2)

    f = np.zeros((channel, tile_x, tile_y), np.float32)
    c_part = channel // len(mx)
    for i, (ux, vy) in enumerate(zip(mx, my)):
        for tx in range(tile_x):
            for ty in range(tile_y):
                f[i * c_part:(i + 1) * c_part, tx, ty] = bf(tx, ux, tile_x) * bf(ty, vy, tile_y)
    return jnp.asarray(f)


def init_params(key, C, H, W, k, sigma):
    HW = H * W
    keys = jax.random.split(key, 48)
    it = iter(keys)

    def w(shape):
        return 0.1 * jax.random.normal(next(it), shape, jnp.float32)

    def bn(n):
        return (1.0 + 0.1 * jax.random.normal(next(it), (n,), jnp.float32),
                0.1 * jax.random.normal(next(it), (n,), jnp.float32),
                0.1 * jax.random.normal(next(it), (n,), jnp.float32),
                jax.random.uniform(next(it), (n,), jnp.float32, 0.5, 1.5))

    return {
        "conv_w": w((C, k * k)), "conv_b": w((k * k,)),
        "fn_partial": bn(HW),
        "fn_channel": bn(C),
        "dct_w": build_dct_filter(H, W, C),
        "fc1_w": w((C, C // sigma)),
        "fc2_w": w((C // sigma, C * k * k)),
        "clm_u1_w": w((C, 2 * C)), "clm_u1_b": w((2 * C,)), "clm_u1_bn": bn(2 * C),
        "clm_u2_w": w((2 * C, 2 * C)), "clm_u2_b": w((2 * C,)), "clm_u2_bn": bn(2 * C),
        "clm_l1_w": w((2 * C, 2 * C)), "clm_l1_b": w((2 * C,)), "clm_l1_bn": bn(2 * C),
        "clm_l2_w": w((2 * C, C)), "clm_l2_b": w((C,)), "clm_l2_bn": bn(C),
    }


# --------------------------------------------------------------------------
if __name__ == "__main__":
    N, C, H, W = 2, 16, 8, 8     # batch, channels (div by 16 & sigma), spatial
    k, sigma = 3, 4

    key = jax.random.PRNGKey(0)
    kx, kp = jax.random.split(key)
    x = jax.random.normal(kx, (N, C, H, W), jnp.float32)
    params = init_params(kp, C, H, W, k, sigma)

    fwd = jax.jit(lambda xx, pp: insta_forward(xx, pp, k=k, sigma=sigma))
    adapted, task_kernel = fwd(x, params)
    jax.block_until_ready((adapted, task_kernel))

    assert adapted.shape == (N, C, H, W)
    assert task_kernel.shape == (1, C, H, W, k, k)
    assert bool(jnp.all(jnp.isfinite(adapted)))
    assert bool(jnp.all(jnp.isfinite(task_kernel)))
    print("KERNEL_OK")
</pallas_src>

<mosaic_0001>
module attributes {stable_mosaic.version = 11 : i64} {
  func.func @_insta_kernel(%arg0: memref<2x10x10x16xf32, #tpu.memory_space<vmem>>, %arg1: memref<16x9xf32, #tpu.memory_space<vmem>>, %arg2: memref<1x9xf32, #tpu.memory_space<vmem>>, %arg3: memref<64x2xf32, #tpu.memory_space<vmem>>, %arg4: memref<64x16xf32, #tpu.memory_space<vmem>>, %arg5: memref<16x4xf32, #tpu.memory_space<vmem>>, %arg6: memref<4x144xf32, #tpu.memory_space<vmem>>, %arg7: memref<2x144xf32, #tpu.memory_space<vmem>>, %arg8: memref<16x32xf32, #tpu.memory_space<vmem>>, %arg9: memref<2x32xf32, #tpu.memory_space<vmem>>, %arg10: memref<32x32xf32, #tpu.memory_space<vmem>>, %arg11: memref<2x32xf32, #tpu.memory_space<vmem>>, %arg12: memref<32x32xf32, #tpu.memory_space<vmem>>, %arg13: memref<2x32xf32, #tpu.memory_space<vmem>>, %arg14: memref<32x16xf32, #tpu.memory_space<vmem>>, %arg15: memref<2x16xf32, #tpu.memory_space<vmem>>, %arg16: memref<128x16xf32, #tpu.memory_space<vmem>>, %arg17: memref<64x9xf32, #tpu.memory_space<vmem>>, %arg18: memref<1x144xf32, #tpu.memory_space<vmem>>) attributes {dimension_semantics = [], scalar_prefetch = 0 : i64, scratch_operands = 0 : i64, tpu.core_type = #tpu.core_type<tc>} {
    %c0 = arith.constant 0 : index
    %c0_0 = arith.constant 0 : index
    %c0_1 = arith.constant 0 : index
    %c0_2 = arith.constant 0 : index
    %0 = vector.load %arg0[%c0, %c0_0, %c0_1, %c0_2] : memref<2x10x10x16xf32, #tpu.memory_space<vmem>>, vector<2x10x10x16xf32>
    %1 = vector.extract_strided_slice %0 {offsets = [0, 1, 1, 0], sizes = [2, 8, 8, 16], strides = [1, 1, 1, 1]} : vector<2x10x10x16xf32> to vector<2x8x8x16xf32>
    %2 = vector.shape_cast %1 : vector<2x8x8x16xf32> to vector<128x16xf32>
    %c0_3 = arith.constant 0 : index
    %c0_4 = arith.constant 0 : index
    %3 = vector.load %arg8[%c0_3, %c0_4] : memref<16x32xf32, #tpu.memory_space<vmem>>, vector<16x32xf32>
    %cst = arith.constant dense<0.000000e+00> : vector<128x32xf32>
    %4 = tpu.matmul %2, %3, %cst {dimension_numbers = #tpu.dot_dimension_numbers<[1], [0], [0], [1], [0, 0, 1, 1], [], []>} : vector<128x16xf32>, vector<16x32xf32>, vector<128x32xf32> -> vector<128x32xf32>
    %c0_5 = arith.constant 0 : index
    %c0_6 = arith.constant 0 : index
    %5 = vector.load %arg9[%c0_5, %c0_6] : memref<2x32xf32, #tpu.memory_space<vmem>>, vector<1x32xf32>
    %6 = vector.broadcast %5 : vector<1x32xf32> to vector<128x32xf32>
    %7 = arith.mulf %4, %6 : vector<128x32xf32>
    %c1 = arith.constant 1 : index
    %c0_7 = arith.constant 0 : index
    %8 = vector.load %arg9[%c1, %c0_7] : memref<2x32xf32, #tpu.memory_space<vmem>>, vector<1x32xf32>
    %9 = vector.broadcast %8 : vector<1x32xf32> to vector<128x32xf32>
    %10 = arith.addf %7, %9 : vector<128x32xf32>
    %cst_8 = arith.constant 0.000000e+00 : f32
    %11 = vector.broadcast %cst_8 : f32 to vector<128x32xf32>
    %12 = arith.maximumf %10, %11 : vector<128x32xf32>
    %c0_9 = arith.constant 0 : index
    %c0_10 = arith.constant 0 : index
    %13 = vector.load %arg10[%c0_9, %c0_10] : memref<32x32xf32, #tpu.memory_space<vmem>>, vector<32x32xf32>
    %cst_11 = arith.constant dense<0.000000e+00> : vector<128x32xf32>
    %14 = tpu.matmul %12, %13, %cst_11 {dimension_numbers = #tpu.dot_dimension_numbers<[1], [0], [0], [1], [0, 0, 1, 1], [], []>} : vector<128x32xf32>, vector<32x32xf32>, vector<128x32xf32> -> vector<128x32xf32>
    %c0_12 = arith.constant 0 : index
    %c0_13 = arith.constant 0 : index
    %15 = vector.load %arg11[%c0_12, %c0_13] : memref<2x32xf32, #tpu.memory_space<vmem>>, vector<1x32xf32>
    %16 = vector.broadcast %15 : vector<1x32xf32> to vector<128x32xf32>
    %17 = arith.mulf %14, %16 : vector<128x32xf32>
    %c1_14 = arith.constant 1 : index
    %c0_15 = arith.constant 0 : index
    %18 = vector.load %arg11[%c1_14, %c0_15] : memref<2x32xf32, #tpu.memory_space<vmem>>, vector<1x32xf32>
    %19 = vector.broadcast %18 : vector<1x32xf32> to vector<128x32xf32>
    %20 = arith.addf %17, %19 : vector<128x32xf32>
    %cst_16 = arith.constant 0.000000e+00 : f32
    %21 = vector.broadcast %cst_16 : f32 to vector<128x32xf32>
    %22 = arith.maximumf %20, %21 : vector<128x32xf32>
    %23 = vector.shape_cast %22 : vector<128x32xf32> to vector<2x64x32xf32>
    %cst_17 = arith.constant dense<0.000000e+00> : vector<64x32xf32>
    %24 = vector.multi_reduction <add>, %23, %cst_17 [0] : vector<2x64x32xf32> to vector<64x32xf32>
    %c0_18 = arith.constant 0 : index
    %c0_19 = arith.constant 0 : index
    %25 = vector.load %arg12[%c0_18, %c0_19] : memref<32x32xf32, #tpu.memory_space<vmem>>, vector<32x32xf32>
    %cst_20 = arith.constant dense<0.000000e+00> : vector<64x32xf32>
    %26 = tpu.matmul %24, %25, %cst_20 {dimension_numbers = #tpu.dot_dimension_numbers<[1], [0], [0], [1], [0, 0, 1, 1], [], []>} : vector<64x32xf32>, vector<32x32xf32>, vector<64x32xf32> -> vector<64x32xf32>
    %c0_21 = arith.constant 0 : index
    %c0_22 = arith.constant 0 : index
    %27 = vector.load %arg13[%c0_21, %c0_22] : memref<2x32xf32, #tpu.memory_space<vmem>>, vector<1x32xf32>
    %28 = vector.broadcast %27 : vector<1x32xf32> to vector<64x32xf32>
    %29 = arith.mulf %26, %28 : vector<64x32xf32>
    %c1_23 = arith.constant 1 : index
    %c0_24 = arith.constant 0 : index
    %30 = vector.load %arg13[%c1_23, %c0_24] : memref<2x32xf32, #tpu.memory_space<vmem>>, vector<1x32xf32>
    %31 = vector.broadcast %30 : vector<1x32xf32> to vector<64x32xf32>
    %32 = arith.addf %29, %31 : vector<64x32xf32>
    %cst_25 = arith.constant 0.000000e+00 : f32
    %33 = vector.broadcast %cst_25 : f32 to vector<64x32xf32>
    %34 = arith.maximumf %32, %33 : vector<64x32xf32>
    %c0_26 = arith.constant 0 : index
    %c0_27 = arith.constant 0 : index
    %35 = vector.load %arg14[%c0_26, %c0_27] : memref<32x16xf32, #tpu.memory_space<vmem>>, vector<32x16xf32>
    %cst_28 = arith.constant dense<0.000000e+00> : vector<64x16xf32>
    %36 = tpu.matmul %34, %35, %cst_28 {dimension_numbers = #tpu.dot_dimension_numbers<[1], [0], [0], [1], [0, 0, 1, 1], [], []>} : vector<64x32xf32>, vector<32x16xf32>, vector<64x16xf32> -> vector<64x16xf32>
    %c0_29 = arith.constant 0 : index
    %c0_30 = arith.constant 0 : index
    %37 = vector.load %arg15[%c0_29, %c0_30] : memref<2x16xf32, #tpu.memory_space<vmem>>, vector<1x16xf32>
    %38 = vector.broadcast %37 : vector<1x16xf32> to vector<64x16xf32>
    %39 = arith.mulf %36, %38 : vector<64x16xf32>
    %c1_31 = arith.constant 1 : index
    %c0_32 = arith.constant 0 : index
    %40 = vector.load %arg15[%c1_31, %c0_32] : memref<2x16xf32, #tpu.memory_space<vmem>>, vector<1x16xf32>
    %41 = vector.broadcast %40 : vector<1x16xf32> to vector<64x16xf32>
    %42 = arith.addf %39, %41 : vector<64x16xf32>
    %43 = arith.negf %42 : vector<64x16xf32>
    %44 = math.exp %43 : vector<64x16xf32>
    %cst_33 = arith.constant 1.000000e+00 : f32
    %45 = vector.broadcast %cst_33 : f32 to vector<64x16xf32>
    %46 = arith.addf %45, %44 : vector<64x16xf32>
    %47 = arith.divf %45, %46 : vector<64x16xf32>
    %c0_34 = arith.constant 0 : index
    %c0_35 = arith.constant 0 : index
    %48 = vector.load %arg1[%c0_34, %c0_35] : memref<16x9xf32, #tpu.memory_space<vmem>>, vector<16x9xf32>
    %cst_36 = arith.constant dense<0.000000e+00> : vector<128x9xf32>
    %49 = tpu.matmul %2, %48, %cst_36 {dimension_numbers = #tpu.dot_dimension_numbers<[1], [0], [0], [1], [0, 0, 1, 1], [], []>} : vector<128x16xf32>, vector<16x9xf32>, vector<128x9xf32> -> vector<128x9xf32>
    %c0_37 = arith.constant 0 : index
    %c0_38 = arith.constant 0 : index
    %50 = vector.load %arg2[%c0_37, %c0_38] : memref<1x9xf32, #tpu.memory_space<vmem>>, vector<1x9xf32>
    %51 = vector.broadcast %50 : vector<1x9xf32> to vector<128x9xf32>
    %52 = arith.addf %49, %51 : vector<128x9xf32>
    %53 = vector.shape_cast %52 : vector<128x9xf32> to vector<2x64x9xf32>
    %c0_39 = arith.constant 0 : index
    %c0_40 = arith.constant 0 : index
    %54 = vector.load %arg3[%c0_39, %c0_40] : memref<64x2xf32, #tpu.memory_space<vmem>>, vector<64x1xf32>
    %55 = vector.shape_cast %54 : vector<64x1xf32> to vector<1x64x1xf32>
    %56 = vector.broadcast %55 : vector<1x64x1xf32> to vector<2x64x9xf32>
    %57 = arith.mulf %53, %56 : vector<2x64x9xf32>
    %c0_41 = arith.constant 0 : index
    %c1_42 = arith.constant 1 : index
    %58 = vector.load %arg3[%c0_41, %c1_42] : memref<64x2xf32, #tpu.memory_space<vmem>>, vector<64x1xf32>
    %59 = vector.shape_cast %58 : vector<64x1xf32> to vector<1x64x1xf32>
    %60 = vector.broadcast %59 : vector<1x64x1xf32> to vector<2x64x9xf32>
    %61 = arith.addf %57, %60 : vector<2x64x9xf32>
    %62 = vector.shape_cast %2 : vector<128x16xf32> to vector<2x64x16xf32>
    %c0_43 = arith.constant 0 : index
    %c0_44 = arith.constant 0 : index
    %63 = vector.load %arg4[%c0_43, %c0_44] : memref<64x16xf32, #tpu.memory_space<vmem>>, vector<64x16xf32>
    %64 = vector.shape_cast %63 : vector<64x16xf32> to vector<1x64x16xf32>
    %65 = vector.broadcast %64 : vector<1x64x16xf32> to vector<2x64x16xf32>
    %66 = arith.mulf %62, %65 : vector<2x64x16xf32>
    %cst_45 = arith.constant dense<0.000000e+00> : vector<2x16xf32>
    %67 = vector.multi_reduction <add>, %66, %cst_45 [1] : vector<2x64x16xf32> to vector<2x16xf32>
    %c0_46 = arith.constant 0 : index
    %c0_47 = arith.constant 0 : index
    %68 = vector.load %arg5[%c0_46, %c0_47] : memref<16x4xf32, #tpu.memory_space<vmem>>, vector<16x4xf32>
    %cst_48 = arith.constant dense<0.000000e+00> : vector<2x4xf32>
    %69 = tpu.matmul %67, %68, %cst_48 {dimension_numbers = #tpu.dot_dimension_numbers<[1], [0], [0], [1], [0, 0, 1, 1], [], []>} : vector<2x16xf32>, vector<16x4xf32>, vector<2x4xf32> -> vector<2x4xf32>
    %cst_49 = arith.constant 0.000000e+00 : f32
    %70 = vector.broadcast %cst_49 : f32 to vector<2x4xf32>
    %71 = arith.maximumf %69, %70 : vector<2x4xf32>
    %c0_50 = arith.constant 0 : index
    %c0_51 = arith.constant 0 : index
    %72 = vector.load %arg6[%c0_50, %c0_51] : memref<4x144xf32, #tpu.memory_space<vmem>>, vector<4x144xf32>
    %cst_52 = arith.constant dense<0.000000e+00> : vector<2x144xf32>
    %73 = tpu.matmul %71, %72, %cst_52 {dimension_numbers = #tpu.dot_dimension_numbers<[1], [0], [0], [1], [0, 0, 1, 1], [], []>} : vector<2x4xf32>, vector<4x144xf32>, vector<2x144xf32> -> vector<2x144xf32>
    %74 = arith.negf %73 : vector<2x144xf32>
    %75 = math.exp %74 : vector<2x144xf32>
    %cst_53 = arith.constant 1.000000e+00 : f32
    %76 = vector.broadcast %cst_53 : f32 to vector<2x144xf32>
    %77 = arith.addf %76, %75 : vector<2x144xf32>
    %78 = arith.divf %76, %77 : vector<2x144xf32>
    %c0_54 = arith.constant 0 : index
    %c0_55 = arith.constant 0 : index
    %79 = vector.load %arg7[%c0_54, %c0_55] : memref<2x144xf32, #tpu.memory_space<vmem>>, vector<1x144xf32>
    %80 = vector.broadcast %79 : vector<1x144xf32> to vector<2x144xf32>
    %81 = arith.mulf %78, %80 : vector<2x144xf32>
    %c1_56 = arith.constant 1 : index
    %c0_57 = arith.constant 0 : index
    %82 = vector.load %arg7[%c1_56, %c0_57] : memref<2x144xf32, #tpu.memory_space<vmem>>, vector<1x144xf32>
    %83 = vector.broadcast %82 : vector<1x144xf32> to vector<2x144xf32>
    %84 = arith.addf %81, %83 : vector<2x144xf32>
    %c0_58 = arith.constant 0 : index
    %c0_59 = arith.constant 0 : index
    %85 = vector.load %arg1[%c0_58, %c0_59] : memref<16x9xf32, #tpu.memory_space<vmem>>, vector<16x9xf32>
    %cst_60 = arith.constant dense<0.000000e+00> : vector<64x9xf32>
    %86 = tpu.matmul %47, %85, %cst_60 {dimension_numbers = #tpu.dot_dimension_numbers<[1], [0], [0], [1], [0, 0, 1, 1], [], []>} : vector<64x16xf32>, vector<16x9xf32>, vector<64x9xf32> -> vector<64x9xf32>
    %c0_61 = arith.constant 0 : index
    %c0_62 = arith.constant 0 : index
    %87 = vector.load %arg2[%c0_61, %c0_62] : memref<1x9xf32, #tpu.memory_space<vmem>>, vector<1x9xf32>
    %88 = vector.broadcast %87 : vector<1x9xf32> to vector<64x9xf32>
    %89 = arith.addf %86, %88 : vector<64x9xf32>
    %90 = vector.shape_cast %89 : vector<64x9xf32> to vector<1x64x9xf32>
    %c0_63 = arith.constant 0 : index
    %c0_64 = arith.constant 0 : index
    %91 = vector.load %arg3[%c0_63, %c0_64] : memref<64x2xf32, #tpu.memory_space<vmem>>, vector<64x1xf32>
    %92 = vector.shape_cast %91 : vector<64x1xf32> to vector<1x64x1xf32>
    %93 = vector.broadcast %92 : vector<1x64x1xf32> to vector<1x64x9xf32>
    %94 = arith.mulf %90, %93 : vector<1x64x9xf32>
    %c0_65 = arith.constant 0 : index
    %c1_66 = arith.constant 1 : index
    %95 = vector.load %arg3[%c0_65, %c1_66] : memref<64x2xf32, #tpu.memory_space<vmem>>, vector<64x1xf32>
    %96 = vector.shape_cast %95 : vector<64x1xf32> to vector<1x64x1xf32>
    %97 = vector.broadcast %96 : vector<1x64x1xf32> to vector<1x64x9xf32>
    %98 = arith.addf %94, %97 : vector<1x64x9xf32>
    %99 = vector.shape_cast %47 : vector<64x16xf32> to vector<1x64x16xf32>
    %c0_67 = arith.constant 0 : index
    %c0_68 = arith.constant 0 : index
    %100 = vector.load %arg4[%c0_67, %c0_68] : memref<64x16xf32, #tpu.memory_space<vmem>>, vector<64x16xf32>
    %101 = vector.shape_cast %100 : vector<64x16xf32> to vector<1x64x16xf32>
    %102 = arith.mulf %99, %101 : vector<1x64x16xf32>
    %cst_69 = arith.constant dense<0.000000e+00> : vector<1x16xf32>
    %103 = vector.multi_reduction <add>, %102, %cst_69 [1] : vector<1x64x16xf32> to vector<1x16xf32>
    %c0_70 = arith.constant 0 : index
    %c0_71 = arith.constant 0 : index
    %104 = vector.load %arg5[%c0_70, %c0_71] : memref<16x4xf32, #tpu.memory_space<vmem>>, vector<16x4xf32>
    %cst_72 = arith.constant dense<0.000000e+00> : vector<1x4xf32>
    %105 = tpu.matmul %103, %104, %cst_72 {dimension_numbers = #tpu.dot_dimension_numbers<[1], [0], [0], [1], [0, 0, 1, 1], [], []>} : vector<1x16xf32>, vector<16x4xf32>, vector<1x4xf32> -> vector<1x4xf32>
    %cst_73 = arith.constant 0.000000e+00 : f32
    %106 = vector.broadcast %cst_73 : f32 to vector<1x4xf32>
    %107 = arith.maximumf %105, %106 : vector<1x4xf32>
    %c0_74 = arith.constant 0 : index
    %c0_75 = arith.constant 0 : index
    %108 = vector.load %arg6[%c0_74, %c0_75] : memref<4x144xf32, #tpu.memory_space<vmem>>, vector<4x144xf32>
    %cst_76 = arith.constant dense<0.000000e+00> : vector<1x144xf32>
    %109 = tpu.matmul %107, %108, %cst_76 {dimension_numbers = #tpu.dot_dimension_numbers<[1], [0], [0], [1], [0, 0, 1, 1], [], []>} : vector<1x4xf32>, vector<4x144xf32>, vector<1x144xf32> -> vector<1x144xf32>
    %110 = arith.negf %109 : vector<1x144xf32>
    %111 = math.exp %110 : vector<1x144xf32>
    %cst_77 = arith.constant 1.000000e+00 : f32
    %112 = vector.broadcast %cst_77 : f32 to vector<1x144xf32>
    %113 = arith.addf %112, %111 : vector<1x144xf32>
    %114 = arith.divf %112, %113 : vector<1x144xf32>
    %c0_78 = arith.constant 0 : index
    %c0_79 = arith.constant 0 : index
    %115 = vector.load %arg7[%c0_78, %c0_79] : memref<2x144xf32, #tpu.memory_space<vmem>>, vector<1x144xf32>
    %116 = arith.mulf %114, %115 : vector<1x144xf32>
    %c1_80 = arith.constant 1 : index
    %c0_81 = arith.constant 0 : index
    %117 = vector.load %arg7[%c1_80, %c0_81] : memref<2x144xf32, #tpu.memory_space<vmem>>, vector<1x144xf32>
    %118 = arith.addf %116, %117 : vector<1x144xf32>
    %119 = vector.shape_cast %98 : vector<1x64x9xf32> to vector<64x9xf32>
    %c0_82 = arith.constant 0 : index
    %c0_83 = arith.constant 0 : index
    %120 = vector.load %arg17[%c0_82, %c0_83] : memref<64x9xf32, #tpu.memory_space<vmem>>, vector<64x9xf32>
    tpu.vector_store %arg17[%c0_82, %c0_83], %119 {strides = array<i32>} : memref<64x9xf32, #tpu.memory_space<vmem>>, vector<64x9xf32>,
    %c0_84 = arith.constant 0 : index
    %c0_85 = arith.constant 0 : index
    %121 = vector.load %arg18[%c0_84, %c0_85] : memref<1x144xf32, #tpu.memory_space<vmem>>, vector<1x144xf32>
    tpu.vector_store %arg18[%c0_84, %c0_85], %118 {strides = array<i32>} : memref<1x144xf32, #tpu.memory_space<vmem>>, vector<1x144xf32>,
    %122 = vector.broadcast %98 : vector<1x64x9xf32> to vector<2x64x9xf32>
    %123 = arith.mulf %61, %122 : vector<2x64x9xf32>
    %124 = vector.shape_cast %123 : vector<2x64x9xf32> to vector<2x8x8x9xf32>
    %125 = vector.broadcast %118 : vector<1x144xf32> to vector<2x144xf32>
    %126 = arith.mulf %84, %125 : vector<2x144xf32>
    %cst_86 = arith.constant 0.000000e+00 : f32
    %127 = vector.broadcast %cst_86 : f32 to vector<2x8x8x16xf32>
    %128 = vector.extract_strided_slice %0 {offsets = [0, 0, 0, 0], sizes = [2, 8, 8, 16], strides = [1, 1, 1, 1]} : vector<2x10x10x16xf32> to vector<2x8x8x16xf32>
    %129 = vector.extract_strided_slice %124 {offsets = [0, 0, 0, 0], sizes = [2, 8, 8, 1], strides = [1, 1, 1, 1]} : vector<2x8x8x9xf32> to vector<2x8x8x1xf32>
    %130 = vector.extract_strided_slice %126 {offsets = [0, 0], sizes = [2, 16], strides = [1, 1]} : vector<2x144xf32> to vector<2x16xf32>
    %131 = vector.shape_cast %130 : vector<2x16xf32> to vector<2x1x1x16xf32>
    %132 = vector.broadcast %129 : vector<2x8x8x1xf32> to vector<2x8x8x16xf32>
    %133 = arith.mulf %128, %132 : vector<2x8x8x16xf32>
    %134 = vector.broadcast %131 : vector<2x1x1x16xf32> to vector<2x8x8x16xf32>
    %135 = arith.mulf %133, %134 : vector<2x8x8x16xf32>
    %136 = arith.addf %127, %135 : vector<2x8x8x16xf32>
    %137 = vector.extract_strided_slice %0 {offsets = [0, 0, 1, 0], sizes = [2, 8, 8, 16], strides = [1, 1, 1, 1]} : vector<2x10x10x16xf32> to vector<2x8x8x16xf32>
    %138 = vector.extract_strided_slice %124 {offsets = [0, 0, 0, 1], sizes = [2, 8, 8, 1], strides = [1, 1, 1, 1]} : vector<2x8x8x9xf32> to vector<2x8x8x1xf32>
    %139 = vector.extract_strided_slice %126 {offsets = [0, 16], sizes = [2, 16], strides = [1, 1]} : vector<2x144xf32> to vector<2x16xf32>
    %140 = vector.shape_cast %139 : vector<2x16xf32> to vector<2x1x1x16xf32>
    %141 = vector.broadcast %138 : vector<2x8x8x1xf32> to vector<2x8x8x16xf32>
    %142 = arith.mulf %137, %141 : vector<2x8x8x16xf32>
    %143 = vector.broadcast %140 : vector<2x1x1x16xf32> to vector<2x8x8x16xf32>
    %144 = arith.mulf %142, %143 : vector<2x8x8x16xf32>
    %145 = arith.addf %136, %144 : vector<2x8x8x16xf32>
    %146 = vector.extract_strided_slice %0 {offsets = [0, 0, 2, 0], sizes = [2, 8, 8, 16], strides = [1, 1, 1, 1]} : vector<2x10x10x16xf32> to vector<2x8x8x16xf32>
    %147 = vector.extract_strided_slice %124 {offsets = [0, 0, 0, 2], sizes = [2, 8, 8, 1], strides = [1, 1, 1, 1]} : vector<2x8x8x9xf32> to vector<2x8x8x1xf32>
    %148 = vector.extract_strided_slice %126 {offsets = [0, 32], sizes = [2, 16], strides = [1, 1]} : vector<2x144xf32> to vector<2x16xf32>
    %149 = vector.shape_cast %148 : vector<2x16xf32> to vector<2x1x1x16xf32>
    %150 = vector.broadcast %147 : vector<2x8x8x1xf32> to vector<2x8x8x16xf32>
    %151 = arith.mulf %146, %150 : vector<2x8x8x16xf32>
    %152 = vector.broadcast %149 : vector<2x1x1x16xf32> to vector<2x8x8x16xf32>
    %153 = arith.mulf %151, %152 : vector<2x8x8x16xf32>
    %154 = arith.addf %145, %153 : vector<2x8x8x16xf32>
    %155 = vector.extract_strided_slice %0 {offsets = [0, 1, 0, 0], sizes = [2, 8, 8, 16], strides = [1, 1, 1, 1]} : vector<2x10x10x16xf32> to vector<2x8x8x16xf32>
    %156 = vector.extract_strided_slice %124 {offsets = [0, 0, 0, 3], sizes = [2, 8, 8, 1], strides = [1, 1, 1, 1]} : vector<2x8x8x9xf32> to vector<2x8x8x1xf32>
    %157 = vector.extract_strided_slice %126 {offsets = [0, 48], sizes = [2, 16], strides = [1, 1]} : vector<2x144xf32> to vector<2x16xf32>
    %158 = vector.shape_cast %157 : vector<2x16xf32> to vector<2x1x1x16xf32>
    %159 = vector.broadcast %156 : vector<2x8x8x1xf32> to vector<2x8x8x16xf32>
    %160 = arith.mulf %155, %159 : vector<2x8x8x16xf32>
    %161 = vector.broadcast %158 : vector<2x1x1x16xf32> to vector<2x8x8x16xf32>
    %162 = arith.mulf %160, %161 : vector<2x8x8x16xf32>
    %163 = arith.addf %154, %162 : vector<2x8x8x16xf32>
    %164 = vector.extract_strided_slice %0 {offsets = [0, 1, 1, 0], sizes = [2, 8, 8, 16], strides = [1, 1, 1, 1]} : vector<2x10x10x16xf32> to vector<2x8x8x16xf32>
    %165 = vector.extract_strided_slice %124 {offsets = [0, 0, 0, 4], sizes = [2, 8, 8, 1], strides = [1, 1, 1, 1]} : vector<2x8x8x9xf32> to vector<2x8x8x1xf32>
    %166 = vector.extract_strided_slice %126 {offsets = [0, 64], sizes = [2, 16], strides = [1, 1]} : vector<2x144xf32> to vector<2x16xf32>
    %167 = vector.shape_cast %166 : vector<2x16xf32> to vector<2x1x1x16xf32>
    %168 = vector.broadcast %165 : vector<2x8x8x1xf32> to vector<2x8x8x16xf32>
    %169 = arith.mulf %164, %168 : vector<2x8x8x16xf32>
    %170 = vector.broadcast %167 : vector<2x1x1x16xf32> to vector<2x8x8x16xf32>
    %171 = arith.mulf %169, %170 : vector<2x8x8x16xf32>
    %172 = arith.addf %163, %171 : vector<2x8x8x16xf32>
    %173 = vector.extract_strided_slice %0 {offsets = [0, 1, 2, 0], sizes = [2, 8, 8, 16], strides = [1, 1, 1, 1]} : vector<2x10x10x16xf32> to vector<2x8x8x16xf32>
    %174 = vector.extract_strided_slice %124 {offsets = [0, 0, 0, 5], sizes = [2, 8, 8, 1], strides = [1, 1, 1, 1]} : vector<2x8x8x9xf32> to vector<2x8x8x1xf32>
    %175 = vector.extract_strided_slice %126 {offsets = [0, 80], sizes = [2, 16], strides = [1, 1]} : vector<2x144xf32> to vector<2x16xf32>
    %176 = vector.shape_cast %175 : vector<2x16xf32> to vector<2x1x1x16xf32>
    %177 = vector.broadcast %174 : vector<2x8x8x1xf32> to vector<2x8x8x16xf32>
    %178 = arith.mulf %173, %177 : vector<2x8x8x16xf32>
    %179 = vector.broadcast %176 : vector<2x1x1x16xf32> to vector<2x8x8x16xf32>
    %180 = arith.mulf %178, %179 : vector<2x8x8x16xf32>
    %181 = arith.addf %172, %180 : vector<2x8x8x16xf32>
    %182 = vector.extract_strided_slice %0 {offsets = [0, 2, 0, 0], sizes = [2, 8, 8, 16], strides = [1, 1, 1, 1]} : vector<2x10x10x16xf32> to vector<2x8x8x16xf32>
    %183 = vector.extract_strided_slice %124 {offsets = [0, 0, 0, 6], sizes = [2, 8, 8, 1], strides = [1, 1, 1, 1]} : vector<2x8x8x9xf32> to vector<2x8x8x1xf32>
    %184 = vector.extract_strided_slice %126 {offsets = [0, 96], sizes = [2, 16], strides = [1, 1]} : vector<2x144xf32> to vector<2x16xf32>
    %185 = vector.shape_cast %184 : vector<2x16xf32> to vector<2x1x1x16xf32>
    %186 = vector.broadcast %183 : vector<2x8x8x1xf32> to vector<2x8x8x16xf32>
    %187 = arith.mulf %182, %186 : vector<2x8x8x16xf32>
    %188 = vector.broadcast %185 : vector<2x1x1x16xf32> to vector<2x8x8x16xf32>
    %189 = arith.mulf %187, %188 : vector<2x8x8x16xf32>
    %190 = arith.addf %181, %189 : vector<2x8x8x16xf32>
    %191 = vector.extract_strided_slice %0 {offsets = [0, 2, 1, 0], sizes = [2, 8, 8, 16], strides = [1, 1, 1, 1]} : vector<2x10x10x16xf32> to vector<2x8x8x16xf32>
    %192 = vector.extract_strided_slice %124 {offsets = [0, 0, 0, 7], sizes = [2, 8, 8, 1], strides = [1, 1, 1, 1]} : vector<2x8x8x9xf32> to vector<2x8x8x1xf32>
    %193 = vector.extract_strided_slice %126 {offsets = [0, 112], sizes = [2, 16], strides = [1, 1]} : vector<2x144xf32> to vector<2x16xf32>
    %194 = vector.shape_cast %193 : vector<2x16xf32> to vector<2x1x1x16xf32>
    %195 = vector.broadcast %192 : vector<2x8x8x1xf32> to vector<2x8x8x16xf32>
    %196 = arith.mulf %191, %195 : vector<2x8x8x16xf32>
    %197 = vector.broadcast %194 : vector<2x1x1x16xf32> to vector<2x8x8x16xf32>
    %198 = arith.mulf %196, %197 : vector<2x8x8x16xf32>
    %199 = arith.addf %190, %198 : vector<2x8x8x16xf32>
    %200 = vector.extract_strided_slice %0 {offsets = [0, 2, 2, 0], sizes = [2, 8, 8, 16], strides = [1, 1, 1, 1]} : vector<2x10x10x16xf32> to vector<2x8x8x16xf32>
    %201 = vector.extract_strided_slice %124 {offsets = [0, 0, 0, 8], sizes = [2, 8, 8, 1], strides = [1, 1, 1, 1]} : vector<2x8x8x9xf32> to vector<2x8x8x1xf32>
    %202 = vector.extract_strided_slice %126 {offsets = [0, 128], sizes = [2, 16], strides = [1, 1]} : vector<2x144xf32> to vector<2x16xf32>
    %203 = vector.shape_cast %202 : vector<2x16xf32> to vector<2x1x1x16xf32>
    %204 = vector.broadcast %201 : vector<2x8x8x1xf32> to vector<2x8x8x16xf32>
    %205 = arith.mulf %200, %204 : vector<2x8x8x16xf32>
    %206 = vector.broadcast %203 : vector<2x1x1x16xf32> to vector<2x8x8x16xf32>
    %207 = arith.mulf %205, %206 : vector<2x8x8x16xf32>
    %208 = arith.addf %199, %207 : vector<2x8x8x16xf32>
    %cst_87 = arith.constant 0.111111112 : f32
    %209 = vector.broadcast %cst_87 : f32 to vector<2x8x8x16xf32>
    %210 = arith.mulf %208, %209 : vector<2x8x8x16xf32>
    %211 = arith.addf %210, %1 : vector<2x8x8x16xf32>
    %212 = vector.shape_cast %211 : vector<2x8x8x16xf32> to vector<128x16xf32>
    %c0_88 = arith.constant 0 : index
    %c0_89 = arith.constant 0 : index
    %213 = vector.load %arg16[%c0_88, %c0_89] : memref<128x16xf32, #tpu.memory_space<vmem>>, vector<128x16xf32>
    tpu.vector_store %arg16[%c0_88, %c0_89], %212 {strides = array<i32>} : memref<128x16xf32, #tpu.memory_space<vmem>>, vector<128x16xf32>,
    return
  }
}

</mosaic_0001>

<llo_original>
// kernel: tile.17
$region0: #{tile.17}
  #allocation0 [shape = 's32[1]{0}', space=sflag, size = 0x4, scoped, tag = 'scoped memory for tile.17']
  %s0 = inlined_call_operand.vmem [shape: f32[16], index: 0, kind: input, shape index: {}]
  %s1 = inlined_call_operand.vmem [shape: f32[9,16], index: 1, kind: output, shape index: {}]
  // Predicated region
  $region2: #{tile.17} parent=0 // pred_check
    _
  $region3: #{tile.17} parent=0 // pred_check_branch
    %3 = sbr.rel (0) target = $region5
  $region4: #{tile.17} parent=0 // pred_region
    _
  $region5: #{tile.17} parent=0 // pred_fallthru
    _
  %v4 = vld [vmem:[%s0] ss:$0 sm:$0xff]
  %5 = vst [vmem:[%s1] sm:$0xff] %v4
  %s6 = scalar_lea.vmem %s1, 8
  %7 = vst [vmem:[%s6] sm:$0xff] %v4

// kernel: tile.19
$region0: #{tile.19}
  %s0 = inlined_call_operand.vmem [shape: f32[9,16], index: 0, kind: input, shape index: {}]
  %s1 = inlined_call_operand.vmem [shape: f32[1,144], index: 1, kind: output, shape index: {}]
  $region1: #{tile.19} parent=0
    #allocation0 [shape = 'u8[8192]{0}', space=vmem, size = 0x2000, scoped, tag = 'scoped mem for output reshape']
    %s2 = smov 3
    %v3 = vld [vmem:[%s0] ss:$8 sm:%s2]
    %vm4 = vcmask 130048
    %5 = vst.msk [vmem:[#allocation0] ss:$8 sm:$0x3] %vm4, %v3
    %s6 = scalar_lea.vmem %s0, 7
    %v7 = vld [vmem:[%s6] sm:$0x1]
    %8 = vrot.lane.b32.xlu0 %v7, 112
    %v9 = vpop.permute.xlu0 %8
    %vm10 = vcmask 1048448
    %11 = vst.msk [vmem:[#allocation0] sm:$0x1] %vm10, %v9
    %s12 = scalar_lea.vmem %s0, 6
    %v13 = vld [vmem:[%s12] sm:$0x1]
    %14 = vrot.lane.b32.xlu0 %v13, 96
    %v15 = vpop.permute.xlu0 %14
    %vm16 = vcmask 917248
    %17 = vst.msk [vmem:[#allocation0] sm:$0x1] %vm16, %v15
    %s18 = scalar_lea.vmem %s0, 5
    %v19 = vld [vmem:[%s18] sm:$0x1]
    %20 = vrot.lane.b32.xlu0 %v19, 80
    %v21 = vpop.permute.xlu0 %20
    %vm22 = vcmask 786048
    %23 = vst.msk [vmem:[#allocation0] sm:$0x1] %vm22, %v21
    %s24 = scalar_lea.vmem %s0, 4
    %v25 = vld [vmem:[%s24] sm:$0x1]
    %26 = vrot.lane.b32.xlu0 %v25, 64
    %v27 = vpop.permute.xlu0 %26
    %vm28 = vcmask 654848
    %29 = vst.msk [vmem:[#allocation0] sm:$0x1] %vm28, %v27
    %s30 = scalar_lea.vmem %s0, 3
    %v31 = vld [vmem:[%s30] sm:$0x1]
    %32 = vrot.lane.b32.xlu0 %v31, 48
    %v33 = vpop.permute.xlu0 %32
    %vm34 = vcmask 523648
    %35 = vst.msk [vmem:[#allocation0] sm:$0x1] %vm34, %v33
    %s36 = scalar_lea.vmem %s0, 2
    %v37 = vld [vmem:[%s36] sm:$0x1]
    %38 = vrot.lane.b32.xlu0 %v37, 32
    %v39 = vpop.permute.xlu0 %38
    %vm40 = vcmask 392448
    %41 = vst.msk [vmem:[#allocation0] sm:$0x1] %vm40, %v39
    %s42 = scalar_lea.vmem %s0, 1
    %v43 = vld [vmem:[%s42] sm:$0x1]
    %44 = vrot.lane.b32.xlu0 %v43, 16
    %v45 = vpop.permute.xlu0 %44
    %vm46 = vcmask 261248
    %47 = vst.msk [vmem:[#allocation0] sm:$0x1] %vm46, %v45
    %s49 = sshllo.u32 0, 1
    %v51 = vld [vmem:[#allocation0] sm:%s49]
    %s52 = sshllo.u32 0, 1
    %53 = vst [vmem:[%s1] sm:%s52] %v51
    %s54 = scalar_lea.vmem [#allocation0], 8
    %v55 = vld [vmem:[%s54] sm:%s49]
    %s56 = sshllo.u32 0, 1
    %s57 = scalar_lea.vmem %s1, 1
    %58 = vst [vmem:[%s57] sm:%s56] %v55

// kernel: _lambda_.1
$region0: #{_lambda_.1}
  #allocation0 [shape = 'u32[]', space=smem, size = 0x4, offset = 0x4, fixed_abs, tag = 'smem constant byte address 0x4 - core index']
  #allocation1 [shape = 'u32[144,128]{1,0:T(1,128)}', space=vmem, size = 0x12000, scoped, tag = 'internal scratch']
  %s0 = inlined_call_operand.vmem [shape: f32[2,10,10,16], index: 0, kind: input, shape index: {}]
  %s1 = inlined_call_operand.vmem [shape: f32[16,9], index: 1, kind: input, shape index: {}]
  %s2 = inlined_call_operand.vmem [shape: f32[1,9], index: 2, kind: input, shape index: {}]
  %s3 = inlined_call_operand.vmem [shape: f32[64,2], index: 3, kind: input, shape index: {}]
  %s4 = inlined_call_operand.vmem [shape: f32[64,16], index: 4, kind: input, shape index: {}]
  %s5 = inlined_call_operand.vmem [shape: f32[16,4], index: 5, kind: input, shape index: {}]
  %s6 = inlined_call_operand.vmem [shape: f32[4,144], index: 6, kind: input, shape index: {}]
  %s7 = inlined_call_operand.vmem [shape: f32[2,144], index: 7, kind: input, shape index: {}]
  %s8 = inlined_call_operand.vmem [shape: f32[16,32], index: 8, kind: input, shape index: {}]
  %s9 = inlined_call_operand.vmem [shape: f32[2,32], index: 9, kind: input, shape index: {}]
  %s10 = inlined_call_operand.vmem [shape: f32[32,32], index: 10, kind: input, shape index: {}]
  %s11 = inlined_call_operand.vmem [shape: f32[2,32], index: 11, kind: input, shape index: {}]
  %s12 = inlined_call_operand.vmem [shape: f32[32,32], index: 12, kind: input, shape index: {}]
  %s13 = inlined_call_operand.vmem [shape: f32[2,32], index: 13, kind: input, shape index: {}]
  %s14 = inlined_call_operand.vmem [shape: f32[32,16], index: 14, kind: input, shape index: {}]
  %s15 = inlined_call_operand.vmem [shape: f32[2,16], index: 15, kind: input, shape index: {}]
  %s16 = inlined_call_operand.hbm [shape: f32[128,16], index: 16, kind: output, shape index: {0}]
  %s17 = inlined_call_operand.vmem [shape: f32[64,9], index: 17, kind: output, shape index: {1}]
  %s18 = inlined_call_operand.vmem [shape: f32[1,144], index: 18, kind: output, shape index: {2}]
  %19 = xla_tuple %s16, %s17, %s18
  %s20 = sld [smem:[#allocation0]]
  $region90: #{_lambda_.1} parent=0
    _
  %s22 = ssub.s32 1, %s20
  %s23 = scalar_select 0, %s22, %s20
  $region1: #{_lambda_.1} parent=0
    #allocation2 [shape = 'u8[65536]{0}', space=vmem, size = 0x10000, scoped, tag = 'output window, operand 0, single buffered']
    #allocation3 [shape = 's32[1]{0}', space=sflag, size = 0x4, scoped, tag = 'scoped memory for _lambda_.1']
    %24 = vsyncpa [#allocation3], 0
    // Predicated region
    $region2: #{_lambda_.1} parent=1 // pred_check
      _
    $region3: #{_lambda_.1} parent=1 // pred_check_branch
      %26 = sbr.rel (0) target = $region5
    $region4: #{_lambda_.1} parent=1 // pred_region
      _
    $region5: #{_lambda_.1} parent=1 // pred_fallthru
      _
    // Predicated region
    $region6: #{_lambda_.1} parent=1 // pred_check
      _
    $region7: #{_lambda_.1} parent=1 // pred_check_branch
      %28 = sbr.rel (0) target = $region9
    $region8: #{_lambda_.1} parent=1 // pred_region
      _
    $region9: #{_lambda_.1} parent=1 // pred_fallthru
      _
    // Predicated region
    $region10: #{_lambda_.1} parent=1 // pred_check
      _
    $region11: #{_lambda_.1} parent=1 // pred_check_branch
      %30 = sbr.rel (0) target = $region13
    $region12: #{_lambda_.1} parent=1 // pred_region
      _
    $region13: #{_lambda_.1} parent=1 // pred_fallthru
      _
    // Predicated region
    $region14: #{_lambda_.1} parent=1 // pred_check
      _
    $region15: #{_lambda_.1} parent=1 // pred_check_branch
      %32 = sbr.rel (0) target = $region17
    $region16: #{_lambda_.1} parent=1 // pred_region
      _
    $region17: #{_lambda_.1} parent=1 // pred_fallthru
      _
    // Predicated region
    $region18: #{_lambda_.1} parent=1 // pred_check
      _
    $region19: #{_lambda_.1} parent=1 // pred_check_branch
      %34 = sbr.rel (0) target = $region21
    $region20: #{_lambda_.1} parent=1 // pred_region
      _
    $region21: #{_lambda_.1} parent=1 // pred_fallthru
      _
    // Predicated region
    $region22: #{_lambda_.1} parent=1 // pred_check
      _
    $region23: #{_lambda_.1} parent=1 // pred_check_branch
      %36 = sbr.rel (0) target = $region25
    $region24: #{_lambda_.1} parent=1 // pred_region
      _
    $region25: #{_lambda_.1} parent=1 // pred_fallthru
      _
    // Predicated region
    $region26: #{_lambda_.1} parent=1 // pred_check
      _
    $region27: #{_lambda_.1} parent=1 // pred_check_branch
      %38 = sbr.rel (0) target = $region29
    $region28: #{_lambda_.1} parent=1 // pred_region
      _
    $region29: #{_lambda_.1} parent=1 // pred_fallthru
      _
    // Predicated region
    $region30: #{_lambda_.1} parent=1 // pred_check
      _
    $region31: #{_lambda_.1} parent=1 // pred_check_branch
      %40 = sbr.rel (0) target = $region33
    $region32: #{_lambda_.1} parent=1 // pred_region
      _
    $region33: #{_lambda_.1} parent=1 // pred_fallthru
      _
    // Predicated region
    $region34: #{_lambda_.1} parent=1 // pred_check
      _
    $region35: #{_lambda_.1} parent=1 // pred_check_branch
      %42 = sbr.rel (0) target = $region37
    $region36: #{_lambda_.1} parent=1 // pred_region
      _
    $region37: #{_lambda_.1} parent=1 // pred_fallthru
      _
    // Predicated region
    $region38: #{_lambda_.1} parent=1 // pred_check
      _
    $region39: #{_lambda_.1} parent=1 // pred_check_branch
      %44 = sbr.rel (0) target = $region41
    $region40: #{_lambda_.1} parent=1 // pred_region
      _
    $region41: #{_lambda_.1} parent=1 // pred_fallthru
      _
    // Predicated region
    $region42: #{_lambda_.1} parent=1 // pred_check
      _
    $region43: #{_lambda_.1} parent=1 // pred_check_branch
      %46 = sbr.rel (0) target = $region45
    $region44: #{_lambda_.1} parent=1 // pred_region
      _
    $region45: #{_lambda_.1} parent=1 // pred_fallthru
      _
    // Predicated region
    $region46: #{_lambda_.1} parent=1 // pred_check
      _
    $region47: #{_lambda_.1} parent=1 // pred_check_branch
      %48 = sbr.rel (0) target = $region49
    $region48: #{_lambda_.1} parent=1 // pred_region
      _
    $region49: #{_lambda_.1} parent=1 // pred_fallthru
      _
    // Predicated region
    $region50: #{_lambda_.1} parent=1 // pred_check
      _
    $region51: #{_lambda_.1} parent=1 // pred_check_branch
      %50 = sbr.rel (0) target = $region53
    $region52: #{_lambda_.1} parent=1 // pred_region
      _
    $region53: #{_lambda_.1} parent=1 // pred_fallthru
      _
    // Predicated region
    $region54: #{_lambda_.1} parent=1 // pred_check
      _
    $region55: #{_lambda_.1} parent=1 // pred_check_branch
      %52 = sbr.rel (0) target = $region57
    $region56: #{_lambda_.1} parent=1 // pred_region
      _
    $region57: #{_lambda_.1} parent=1 // pred_fallthru
      _
    // Predicated region
    $region58: #{_lambda_.1} parent=1 // pred_check
      _
    $region59: #{_lambda_.1} parent=1 // pred_check_branch
      %54 = sbr.rel (0) target = $region61
    $region60: #{_lambda_.1} parent=1 // pred_region
      _
    $region61: #{_lambda_.1} parent=1 // pred_fallthru
      _
    // Predicated region
    $region62: #{_lambda_.1} parent=1 // pred_check
      _
    $region63: #{_lambda_.1} parent=1 // pred_check_branch
      %56 = sbr.rel (0) target = $region65
    $region64: #{_lambda_.1} parent=1 // pred_region
      _
    $region65: #{_lambda_.1} parent=1 // pred_fallthru
      _
    %v57 = vld [vmem:[%s0] sm:$0xff]
    %v58 = vld [vmem:[%s0 + $0x8] sm:$0x3]
    %v59 = vld [vmem:[%s0 + $0x10] sm:$0xff]
    %v60 = vld [vmem:[%s0 + $0x18] sm:$0x3]
    %v61 = vld [vmem:[%s0 + $0x20] sm:$0xff]
    %v62 = vld [vmem:[%s0 + $0x28] sm:$0x3]
    %v63 = vld [vmem:[%s0 + $0x30] sm:$0xff]
    %v64 = vld [vmem:[%s0 + $0x38] sm:$0x3]
    %v65 = vld [vmem:[%s0 + $0x40] sm:$0xff]
    %v66 = vld [vmem:[%s0 + $0x48] sm:$0x3]
    %v67 = vld [vmem:[%s0 + $0x50] sm:$0xff]
    %v68 = vld [vmem:[%s0 + $0x58] sm:$0x3]
    %v69 = vld [vmem:[%s0 + $0x60] sm:$0xff]
    %v70 = vld [vmem:[%s0 + $0x68] sm:$0x3]
    %v71 = vld [vmem:[%s0 + $0x70] sm:$0xff]
    %v72 = vld [vmem:[%s0 + $0x78] sm:$0x3]
    %v73 = vld [vmem:[%s0 + $0x80] sm:$0xff]
    %v74 = vld [vmem:[%s0 + $0x88] sm:$0x3]
    %v75 = vld [vmem:[%s0 + $0x90] sm:$0xff]
    %v76 = vld [vmem:[%s0 + $0x98] sm:$0x3]
    %v77 = vld [vmem:[%s0 + $0xa0] sm:$0xff]
    %v78 = vld [vmem:[%s0 + $0xa8] sm:$0x3]
    %v79 = vld [vmem:[%s0 + $0xb0] sm:$0xff]
    %v80 = vld [vmem:[%s0 + $0xb8] sm:$0x3]
    %v81 = vld [vmem:[%s0 + $0xc0] sm:$0xff]
    %v82 = vld [vmem:[%s0 + $0xc8] sm:$0x3]
    %v83 = vld [vmem:[%s0 + $0xd0] sm:$0xff]
    %v84 = vld [vmem:[%s0 + $0xd8] sm:$0x3]
    %v85 = vld [vmem:[%s0 + $0xe0] sm:$0xff]
    %v86 = vld [vmem:[%s0 + $0xe8] sm:$0x3]
    %v87 = vld [vmem:[%s0 + $0xf0] sm:$0xff]
    %v88 = vld [vmem:[%s0 + $0xf8] sm:$0x3]
    %v89 = vld [vmem:[%s0 + $0x100] sm:$0xff]
    %v90 = vld [vmem:[%s0 + $0x108] sm:$0x3]
    %v91 = vld [vmem:[%s0 + $0x110] sm:$0xff]
    %v92 = vld [vmem:[%s0 + $0x118] sm:$0x3]
    %v93 = vld [vmem:[%s0 + $0x120] sm:$0xff]
    %v94 = vld [vmem:[%s0 + $0x128] sm:$0x3]
    %v95 = vld [vmem:[%s0 + $0x130] sm:$0xff]
    %v96 = vld [vmem:[%s0 + $0x138] sm:$0x3]
    %vm129 = vcmask 1046528
    %v130 = vrot.slane %v59, 1
    %v131 = vrot.slane %v60, 1
    %v132 = vsel %vm129, %v130, %v131
    %v133 = vrot.slane %v61, 1
    %v134 = vrot.slane %v62, 1
    %v135 = vsel %vm129, %v133, %v134
    %v136 = vrot.slane %v63, 1
    %v137 = vrot.slane %v64, 1
    %v138 = vsel %vm129, %v136, %v137
    %v139 = vrot.slane %v65, 1
    %v140 = vrot.slane %v66, 1
    %v141 = vsel %vm129, %v139, %v140
    %v142 = vrot.slane %v67, 1
    %v143 = vrot.slane %v68, 1
    %v144 = vsel %vm129, %v142, %v143
    %v145 = vrot.slane %v69, 1
    %v146 = vrot.slane %v70, 1
    %v147 = vsel %vm129, %v145, %v146
    %v148 = vrot.slane %v71, 1
    %v149 = vrot.slane %v72, 1
    %v150 = vsel %vm129, %v148, %v149
    %v151 = vrot.slane %v73, 1
    %v152 = vrot.slane %v74, 1
    %v153 = vsel %vm129, %v151, %v152
    %v154 = vrot.slane %v79, 1
    %v155 = vrot.slane %v80, 1
    %v156 = vsel %vm129, %v154, %v155
    %v157 = vrot.slane %v81, 1
    %v158 = vrot.slane %v82, 1
    %v159 = vsel %vm129, %v157, %v158
    %v160 = vrot.slane %v83, 1
    %v161 = vrot.slane %v84, 1
    %v162 = vsel %vm129, %v160, %v161
    %v163 = vrot.slane %v85, 1
    %v164 = vrot.slane %v86, 1
    %v165 = vsel %vm129, %v163, %v164
    %v166 = vrot.slane %v87, 1
    %v167 = vrot.slane %v88, 1
    %v168 = vsel %vm129, %v166, %v167
    %v169 = vrot.slane %v89, 1
    %v170 = vrot.slane %v90, 1
    %v171 = vsel %vm129, %v169, %v170
    %v172 = vrot.slane %v91, 1
    %v173 = vrot.slane %v92, 1
    %v174 = vsel %vm129, %v172, %v173
    %v175 = vrot.slane %v93, 1
    %v176 = vrot.slane %v94, 1
    %v177 = vsel %vm129, %v175, %v176
    %v178 = vld [vmem:[%s8] sm:$0xff]
    %v179 = vld [vmem:[%s8 + $0x8] sm:$0xff]
    %vm180 = vcmask 130048
    %v181 = vsel %vm180, %v132, 0
    %v183 = vsel %vm180, %v135, 0
    %v185 = vsel %vm180, %v138, 0
    %v187 = vsel %vm180, %v141, 0
    %v189 = vsel %vm180, %v144, 0
    %v191 = vsel %vm180, %v147, 0
    %v193 = vsel %vm180, %v150, 0
    %v195 = vsel %vm180, %v153, 0
    %v197 = vsel %vm180, %v156, 0
    %v199 = vsel %vm180, %v159, 0
    %v201 = vsel %vm180, %v162, 0
    %v203 = vsel %vm180, %v165, 0
    %v205 = vsel %vm180, %v168, 0
    %v207 = vsel %vm180, %v171, 0
    %v209 = vsel %vm180, %v174, 0
    %v211 = vsel %vm180, %v177, 0
    %213 = vmatprep.subr.mxu0 0.0
    %214 = vmatpush1.msra.mxu0 %v178
    %215 = vmatprep.subr.mxu0 0.0
    %216 = vmatpush1.msra.mxu0 %v179
    %217 = vmatprep.subr.mxu0 0.0
    %218 = vmatpush1.msra.mxu0 0.0
    %219 = vmatprep.subr.mxu0 0.0
    %220 = vmatpush1.msra.mxu0 0.0
    %221 = vmatprep.subr.mxu0 0.0
    %222 = vmatpush1.msra.mxu0 0.0
    %223 = vmatprep.subr.mxu0 0.0
    %224 = vmatpush1.msra.mxu0 0.0
    %225 = vmatprep.subr.mxu0 0.0
    %226 = vmatpush1.msra.mxu0 0.0
    %227 = vmatprep.subr.mxu0 0.0
    %228 = vmatpush1.msra.mxu0 0.0
    %229 = vmatprep.subr.mxu0 0.0
    %230 = vmatpush1.msra.mxu0 0.0
    %231 = vmatprep.subr.mxu0 0.0
    %232 = vmatpush1.msra.mxu0 0.0
    %233 = vmatprep.subr.mxu0 0.0
    %234 = vmatpush1.msra.mxu0 0.0
    %235 = vmatprep.subr.mxu0 0.0
    %236 = vmatpush1.msra.mxu0 0.0
    %237 = vmatprep.subr.mxu0 0.0
    %238 = vmatpush1.msra.mxu0 0.0
    %239 = vmatprep.subr.mxu0 0.0
    %240 = vmatpush1.msra.mxu0 0.0
    %241 = vmatprep.subr.mxu0 0.0
    %242 = vmatpush1.msra.mxu0 0.0
    %243 = vmatprep.subr.mxu0 0.0
    %244 = vmatpush1.msra.mxu0 0.0
    %245 = vmatprep.subr.mxu0 0.0
    %246 = vmatpush1.msra.mxu0 0.0
    %247 = vmatprep.subr.mxu0 0.0
    %248 = vmatpush1.msra.mxu0 0.0
    %249 = vmatprep.subr.mxu0 0.0
    %250 = vmatpush1.msra.mxu0 0.0
    %251 = vmatprep.subr.mxu0 0.0
    %252 = vmatpush1.msra.mxu0 0.0
    %253 = vmatprep.subr.mxu0 0.0
    %254 = vmatpush1.msra.mxu0 0.0
    %255 = vmatprep.subr.mxu0 0.0
    %256 = vmatpush1.msra.mxu0 0.0
    %257 = vmatprep.subr.mxu0 0.0
    %258 = vmatpush1.msra.mxu0 0.0
    %259 = vmatprep.subr.mxu0 0.0
    %260 = vmatpush1.msra.mxu0 0.0
    %261 = vmatprep.subr.mxu0 0.0
    %262 = vmatpush1.msra.mxu0 0.0
    %263 = vmatprep.subr.mxu0 0.0
    %264 = vmatpush1.msra.mxu0 0.0
    %265 = vmatprep.subr.mxu0 0.0
    %266 = vmatpush1.msra.mxu0 0.0
    %267 = vmatprep.subr.mxu0 0.0
    %268 = vmatpush1.msra.mxu0 0.0
    %269 = vmatprep.subr.mxu0 0.0
    %270 = vmatpush1.msra.mxu0 0.0
    %271 = vmatprep.subr.mxu0 0.0
    %272 = vmatpush1.msra.mxu0 0.0
    %273 = vmatprep.subr.mxu0 0.0
    %274 = vmatpush1.msra.mxu0 0.0
    %275 = vmatprep.subr.mxu0 0.0
    %276 = vmatpush1.msra.mxu0 0.0
    %277 = vmatprep.mubr.f32.mxu0 0.0
    %278 = vmatmul.mubr.f32.gmra.mrb[0].mxu0 %v181
    %v279 = vpop.f32.mrb[0].mxu0
    %v280 = vadd.f32 0.0, %v279
    %v281 = vpop.f32.mrb[0].mxu0
    %282 = vmatprep.mubr.f32.mxu0 0.0
    %283 = vmatmul.mubr.f32.gmra.mrb[0].mxu0 %v183
    %v284 = vpop.f32.mrb[0].mxu0
    %v285 = vadd.f32 0.0, %v284
    %v286 = vpop.f32.mrb[0].mxu0
    %287 = vmatprep.mubr.f32.mxu0 0.0
    %288 = vmatmul.mubr.f32.gmra.mrb[0].mxu0 %v185
    %v289 = vpop.f32.mrb[0].mxu0
    %v290 = vadd.f32 0.0, %v289
    %v291 = vpop.f32.mrb[0].mxu0
    %292 = vmatprep.mubr.f32.mxu0 0.0
    %293 = vmatmul.mubr.f32.gmra.mrb[0].mxu0 %v187
    %v294 = vpop.f32.mrb[0].mxu0
    %v295 = vadd.f32 0.0, %v294
    %v296 = vpop.f32.mrb[0].mxu0
    %297 = vmatprep.mubr.f32.mxu0 0.0
    %298 = vmatmul.mubr.f32.gmra.mrb[0].mxu0 %v189
    %v299 = vpop.f32.mrb[0].mxu0
    %v300 = vadd.f32 0.0, %v299
    %v301 = vpop.f32.mrb[0].mxu0
    %302 = vmatprep.mubr.f32.mxu0 0.0
    %303 = vmatmul.mubr.f32.gmra.mrb[0].mxu0 %v191
    %v304 = vpop.f32.mrb[0].mxu0
    %v305 = vadd.f32 0.0, %v304
    %v306 = vpop.f32.mrb[0].mxu0
    %307 = vmatprep.mubr.f32.mxu0 0.0
    %308 = vmatmul.mubr.f32.gmra.mrb[0].mxu0 %v193
    %v309 = vpop.f32.mrb[0].mxu0
    %v310 = vadd.f32 0.0, %v309
    %v311 = vpop.f32.mrb[0].mxu0
    %312 = vmatprep.mubr.f32.mxu0 0.0
    %313 = vmatmul.mubr.f32.gmra.mrb[0].mxu0 %v195
    %v314 = vpop.f32.mrb[0].mxu0
    %v315 = vadd.f32 0.0, %v314
    %v316 = vpop.f32.mrb[0].mxu0
    %317 = vmatprep.mubr.f32.mxu0 0.0
    %318 = vmatmul.mubr.f32.gmra.mrb[0].mxu0 %v197
    %v319 = vpop.f32.mrb[0].mxu0
    %v320 = vadd.f32 0.0, %v319
    %v321 = vpop.f32.mrb[0].mxu0
    %322 = vmatprep.mubr.f32.mxu0 0.0
    %323 = vmatmul.mubr.f32.gmra.mrb[0].mxu0 %v199
    %v324 = vpop.f32.mrb[0].mxu0
    %v325 = vadd.f32 0.0, %v324
    %v326 = vpop.f32.mrb[0].mxu0
    %327 = vmatprep.mubr.f32.mxu0 0.0
    %328 = vmatmul.mubr.f32.gmra.mrb[0].mxu0 %v201
    %v329 = vpop.f32.mrb[0].mxu0
    %v330 = vadd.f32 0.0, %v329
    %v331 = vpop.f32.mrb[0].mxu0
    %332 = vmatprep.mubr.f32.mxu0 0.0
    %333 = vmatmul.mubr.f32.gmra.mrb[0].mxu0 %v203
    %v334 = vpop.f32.mrb[0].mxu0
    %v335 = vadd.f32 0.0, %v334
    %v336 = vpop.f32.mrb[0].mxu0
    %337 = vmatprep.mubr.f32.mxu0 0.0
    %338 = vmatmul.mubr.f32.gmra.mrb[0].mxu0 %v205
    %v339 = vpop.f32.mrb[0].mxu0
    %v340 = vadd.f32 0.0, %v339
    %v341 = vpop.f32.mrb[0].mxu0
    %342 = vmatprep.mubr.f32.mxu0 0.0
    %343 = vmatmul.mubr.f32.gmra.mrb[0].mxu0 %v207
    %v344 = vpop.f32.mrb[0].mxu0
    %v345 = vadd.f32 0.0, %v344
    %v346 = vpop.f32.mrb[0].mxu0
    %347 = vmatprep.mubr.f32.mxu0 0.0
    %348 = vmatmul.mubr.f32.gmra.mrb[0].mxu0 %v209
    %v349 = vpop.f32.mrb[0].mxu0
    %v350 = vadd.f32 0.0, %v349
    %v351 = vpop.f32.mrb[0].mxu0
    %352 = vmatprep.mubr.f32.mxu0 0.0
    %353 = vmatmul.mubr.f32.gmra.mrb[0].mxu0 %v211
    %v354 = vpop.f32.mrb[0].mxu0
    %v355 = vadd.f32 0.0, %v354
    %v356 = vpop.f32.mrb[0].mxu0
    %357 = vdwg.mxu0
    %v358 = vld [vmem:[%s9] sm:$0x1]
    %v359 = vlaneseq
    %v360 = vshrl.u32 %v359, 7
    %v361 = vsub.s32 0, %v360
    %v362 = vrot.slane %v358, %v361
    %v363 = vmul.f32 %v280, %v362
    %v364 = vmul.f32 %v285, %v362
    %v365 = vmul.f32 %v290, %v362
    %v366 = vmul.f32 %v295, %v362
    %v367 = vmul.f32 %v300, %v362
    %v368 = vmul.f32 %v305, %v362
    %v369 = vmul.f32 %v310, %v362
    %v370 = vmul.f32 %v315, %v362
    %v371 = vmul.f32 %v320, %v362
    %v372 = vmul.f32 %v325, %v362
    %v373 = vmul.f32 %v330, %v362
    %v374 = vmul.f32 %v335, %v362
    %v375 = vmul.f32 %v340, %v362
    %v376 = vmul.f32 %v345, %v362
    %v377 = vmul.f32 %v350, %v362
    %v378 = vmul.f32 %v355, %v362
    %v379 = vld [vmem:[%s9 + $0x1] sm:$0x1]
    %v380 = vlaneseq
    %v381 = vshrl.u32 %v380, 7
    %v382 = vsub.s32 0, %v381
    %v383 = vrot.slane %v379, %v382
    %v384 = vadd.f32 %v363, %v383
    %v385 = vadd.f32 %v364, %v383
    %v386 = vadd.f32 %v365, %v383
    %v387 = vadd.f32 %v366, %v383
    %v388 = vadd.f32 %v367, %v383
    %v389 = vadd.f32 %v368, %v383
    %v390 = vadd.f32 %v369, %v383
    %v391 = vadd.f32 %v370, %v383
    %v392 = vadd.f32 %v371, %v383
    %v393 = vadd.f32 %v372, %v383
    %v394 = vadd.f32 %v373, %v383
    %v395 = vadd.f32 %v374, %v383
    %v396 = vadd.f32 %v375, %v383
    %v397 = vadd.f32 %v376, %v383
    %v398 = vadd.f32 %v377, %v383
    %v399 = vadd.f32 %v378, %v383
    %v400 = vmax.f32 %v384, 0.0
    %v401 = vmax.f32 %v385, 0.0
    %v402 = vmax.f32 %v386, 0.0
    %v403 = vmax.f32 %v387, 0.0
    %v404 = vmax.f32 %v388, 0.0
    %v405 = vmax.f32 %v389, 0.0
    %v406 = vmax.f32 %v390, 0.0
    %v407 = vmax.f32 %v391, 0.0
    %v408 = vmax.f32 %v392, 0.0
    %v409 = vmax.f32 %v393, 0.0
    %v410 = vmax.f32 %v394, 0.0
    %v411 = vmax.f32 %v395, 0.0
    %v412 = vmax.f32 %v396, 0.0
    %v413 = vmax.f32 %v397, 0.0
    %v414 = vmax.f32 %v398, 0.0
    %v415 = vmax.f32 %v399, 0.0
    %v416 = vld [vmem:[%s10] sm:$0xff]
    %v417 = vld [vmem:[%s10 + $0x8] sm:$0xff]
    %v418 = vld [vmem:[%s10 + $0x10] sm:$0xff]
    %v419 = vld [vmem:[%s10 + $0x18] sm:$0xff]
    %vm420 = vcmask 261120
    %v422 = vsel %vm420, %v400, 0
    %v425 = vsel %vm420, %v401, 0
    %v428 = vsel %vm420, %v402, 0
    %v431 = vsel %vm420, %v403, 0
    %v434 = vsel %vm420, %v404, 0
    %v437 = vsel %vm420, %v405, 0
    %v440 = vsel %vm420, %v406, 0
    %v443 = vsel %vm420, %v407, 0
    %v446 = vsel %vm420, %v408, 0
    %v449 = vsel %vm420, %v409, 0
    %v452 = vsel %vm420, %v410, 0
    %v455 = vsel %vm420, %v411, 0
    %v458 = vsel %vm420, %v412, 0
    %v461 = vsel %vm420, %v413, 0
    %v464 = vsel %vm420, %v414, 0
    %v467 = vsel %vm420, %v415, 0
    %469 = vmatprep.subr.mxu0 0.0
    %470 = vmatpush1.msra.mxu0 %v416
    %471 = vmatprep.subr.mxu0 0.0
    %472 = vmatpush1.msra.mxu0 %v417
    %473 = vmatprep.subr.mxu0 0.0
    %474 = vmatpush1.msra.mxu0 %v418
    %475 = vmatprep.subr.mxu0 0.0
    %476 = vmatpush1.msra.mxu0 %v419
    %477 = vmatprep.subr.mxu0 0.0
    %478 = vmatpush1.msra.mxu0 0.0
    %479 = vmatprep.subr.mxu0 0.0
    %480 = vmatpush1.msra.mxu0 0.0
    %481 = vmatprep.subr.mxu0 0.0
    %482 = vmatpush1.msra.mxu0 0.0
    %483 = vmatprep.subr.mxu0 0.0
    %484 = vmatpush1.msra.mxu0 0.0
    %485 = vmatprep.subr.mxu0 0.0
    %486 = vmatpush1.msra.mxu0 0.0
    %487 = vmatprep.subr.mxu0 0.0
    %488 = vmatpush1.msra.mxu0 0.0
    %489 = vmatprep.subr.mxu0 0.0
    %490 = vmatpush1.msra.mxu0 0.0
    %491 = vmatprep.subr.mxu0 0.0
    %492 = vmatpush1.msra.mxu0 0.0
    %493 = vmatprep.subr.mxu0 0.0
    %494 = vmatpush1.msra.mxu0 0.0
    %495 = vmatprep.subr.mxu0 0.0
    %496 = vmatpush1.msra.mxu0 0.0
    %497 = vmatprep.subr.mxu0 0.0
    %498 = vmatpush1.msra.mxu0 0.0
    %499 = vmatprep.subr.mxu0 0.0
    %500 = vmatpush1.msra.mxu0 0.0
    %501 = vmatprep.subr.mxu0 0.0
    %502 = vmatpush1.msra.mxu0 0.0
    %503 = vmatprep.subr.mxu0 0.0
    %504 = vmatpush1.msra.mxu0 0.0
    %505 = vmatprep.subr.mxu0 0.0
    %506 = vmatpush1.msra.mxu0 0.0
    %507 = vmatprep.subr.mxu0 0.0
    %508 = vmatpush1.msra.mxu0 0.0
    %509 = vmatprep.subr.mxu0 0.0
    %510 = vmatpush1.msra.mxu0 0.0
    %511 = vmatprep.subr.mxu0 0.0
    %512 = vmatpush1.msra.mxu0 0.0
    %513 = vmatprep.subr.mxu0 0.0
    %514 = vmatpush1.msra.mxu0 0.0
    %515 = vmatprep.subr.mxu0 0.0
    %516 = vmatpush1.msra.mxu0 0.0
    %517 = vmatprep.subr.mxu0 0.0
    %518 = vmatpush1.msra.mxu0 0.0
    %519 = vmatprep.subr.mxu0 0.0
    %520 = vmatpush1.msra.mxu0 0.0
    %521 = vmatprep.subr.mxu0 0.0
    %522 = vmatpush1.msra.mxu0 0.0
    %523 = vmatprep.subr.mxu0 0.0
    %524 = vmatpush1.msra.mxu0 0.0
    %525 = vmatprep.subr.mxu0 0.0
    %526 = vmatpush1.msra.mxu0 0.0
    %527 = vmatprep.subr.mxu0 0.0
    %528 = vmatpush1.msra.mxu0 0.0
    %529 = vmatprep.subr.mxu0 0.0
    %530 = vmatpush1.msra.mxu0 0.0
    %531 = vmatprep.subr.mxu0 0.0
    %532 = vmatpush1.msra.mxu0 0.0
    %533 = vmatprep.mubr.f32.mxu0 0.0
    %534 = vmatmul.mubr.f32.gmra.mrb[0].mxu0 %v422
    %v535 = vpop.f32.mrb[0].mxu0
    %v536 = vadd.f32 0.0, %v535
    %v537 = vpop.f32.mrb[0].mxu0
    %538 = vmatprep.mubr.f32.mxu0 0.0
    %539 = vmatmul.mubr.f32.gmra.mrb[0].mxu0 %v425
    %v540 = vpop.f32.mrb[0].mxu0
    %v541 = vadd.f32 0.0, %v540
    %v542 = vpop.f32.mrb[0].mxu0
    %543 = vmatprep.mubr.f32.mxu0 0.0
    %544 = vmatmul.mubr.f32.gmra.mrb[0].mxu0 %v428
    %v545 = vpop.f32.mrb[0].mxu0
    %v546 = vadd.f32 0.0, %v545
    %v547 = vpop.f32.mrb[0].mxu0
    %548 = vmatprep.mubr.f32.mxu0 0.0
    %549 = vmatmul.mubr.f32.gmra.mrb[0].mxu0 %v431
    %v550 = vpop.f32.mrb[0].mxu0
    %v551 = vadd.f32 0.0, %v550
    %v552 = vpop.f32.mrb[0].mxu0
    %553 = vmatprep.mubr.f32.mxu0 0.0
    %554 = vmatmul.mubr.f32.gmra.mrb[0].mxu0 %v434
    %v555 = vpop.f32.mrb[0].mxu0
    %v556 = vadd.f32 0.0, %v555
    %v557 = vpop.f32.mrb[0].mxu0
    %558 = vmatprep.mubr.f32.mxu0 0.0
    %559 = vmatmul.mubr.f32.gmra.mrb[0].mxu0 %v437
    %v560 = vpop.f32.mrb[0].mxu0
    %v561 = vadd.f32 0.0, %v560
    %v562 = vpop.f32.mrb[0].mxu0
    %563 = vmatprep.mubr.f32.mxu0 0.0
    %564 = vmatmul.mubr.f32.gmra.mrb[0].mxu0 %v440
    %v565 = vpop.f32.mrb[0].mxu0
    %v566 = vadd.f32 0.0, %v565
    %v567 = vpop.f32.mrb[0].mxu0
    %568 = vmatprep.mubr.f32.mxu0 0.0
    %569 = vmatmul.mubr.f32.gmra.mrb[0].mxu0 %v443
    %v570 = vpop.f32.mrb[0].mxu0
    %v571 = vadd.f32 0.0, %v570
    %v572 = vpop.f32.mrb[0].mxu0
    %573 = vmatprep.mubr.f32.mxu0 0.0
    %574 = vmatmul.mubr.f32.gmra.mrb[0].mxu0 %v446
    %v575 = vpop.f32.mrb[0].mxu0
    %v576 = vadd.f32 0.0, %v575
    %v577 = vpop.f32.mrb[0].mxu0
    %578 = vmatprep.mubr.f32.mxu0 0.0
    %579 = vmatmul.mubr.f32.gmra.mrb[0].mxu0 %v449
    %v580 = vpop.f32.mrb[0].mxu0
    %v581 = vadd.f32 0.0, %v580
    %v582 = vpop.f32.mrb[0].mxu0
    %583 = vmatprep.mubr.f32.mxu0 0.0
    %584 = vmatmul.mubr.f32.gmra.mrb[0].mxu0 %v452
    %v585 = vpop.f32.mrb[0].mxu0
    %v586 = vadd.f32 0.0, %v585
    %v587 = vpop.f32.mrb[0].mxu0
    %588 = vmatprep.mubr.f32.mxu0 0.0
    %589 = vmatmul.mubr.f32.gmra.mrb[0].mxu0 %v455
    %v590 = vpop.f32.mrb[0].mxu0
    %v591 = vadd.f32 0.0, %v590
    %v592 = vpop.f32.mrb[0].mxu0
    %593 = vmatprep.mubr.f32.mxu0 0.0
    %594 = vmatmul.mubr.f32.gmra.mrb[0].mxu0 %v458
    %v595 = vpop.f32.mrb[0].mxu0
    %v596 = vadd.f32 0.0, %v595
    %v597 = vpop.f32.mrb[0].mxu0
    %598 = vmatprep.mubr.f32.mxu0 0.0
    %599 = vmatmul.mubr.f32.gmra.mrb[0].mxu0 %v461
    %v600 = vpop.f32.mrb[0].mxu0
    %v601 = vadd.f32 0.0, %v600
    %v602 = vpop.f32.mrb[0].mxu0
    %603 = vmatprep.mubr.f32.mxu0 0.0
    %604 = vmatmul.mubr.f32.gmra.mrb[0].mxu0 %v464
    %v605 = vpop.f32.mrb[0].mxu0
    %v606 = vadd.f32 0.0, %v605
    %v607 = vpop.f32.mrb[0].mxu0
    %608 = vmatprep.mubr.f32.mxu0 0.0
    %609 = vmatmul.mubr.f32.gmra.mrb[0].mxu0 %v467
    %v610 = vpop.f32.mrb[0].mxu0
    %v611 = vadd.f32 0.0, %v610
    %v612 = vpop.f32.mrb[0].mxu0
    %613 = vdwg.mxu0
    %v614 = vld [vmem:[%s11] sm:$0x1]
    %v615 = vlaneseq
    %v616 = vshrl.u32 %v615, 7
    %v617 = vsub.s32 0, %v616
    %v618 = vrot.slane %v614, %v617
    %v619 = vmul.f32 %v536, %v618
    %v620 = vmul.f32 %v541, %v618
    %v621 = vmul.f32 %v546, %v618
    %v622 = vmul.f32 %v551, %v618
    %v623 = vmul.f32 %v556, %v618
    %v624 = vmul.f32 %v561, %v618
    %v625 = vmul.f32 %v566, %v618
    %v626 = vmul.f32 %v571, %v618
    %v627 = vmul.f32 %v576, %v618
    %v628 = vmul.f32 %v581, %v618
    %v629 = vmul.f32 %v586, %v618
    %v630 = vmul.f32 %v591, %v618
    %v631 = vmul.f32 %v596, %v618
    %v632 = vmul.f32 %v601, %v618
    %v633 = vmul.f32 %v606, %v618
    %v634 = vmul.f32 %v611, %v618
    %v635 = vld [vmem:[%s11 + $0x1] sm:$0x1]
    %v636 = vlaneseq
    %v637 = vshrl.u32 %v636, 7
    %v638 = vsub.s32 0, %v637
    %v639 = vrot.slane %v635, %v638
    %v640 = vadd.f32 %v619, %v639
    %v641 = vadd.f32 %v620, %v639
    %v642 = vadd.f32 %v621, %v639
    %v643 = vadd.f32 %v622, %v639
    %v644 = vadd.f32 %v623, %v639
    %v645 = vadd.f32 %v624, %v639
    %v646 = vadd.f32 %v625, %v639
    %v647 = vadd.f32 %v626, %v639
    %v648 = vadd.f32 %v627, %v639
    %v649 = vadd.f32 %v628, %v639
    %v650 = vadd.f32 %v629, %v639
    %v651 = vadd.f32 %v630, %v639
    %v652 = vadd.f32 %v631, %v639
    %v653 = vadd.f32 %v632, %v639
    %v654 = vadd.f32 %v633, %v639
    %v655 = vadd.f32 %v634, %v639
    %v656 = vmax.f32 %v640, 0.0
    %v657 = vmax.f32 %v641, 0.0
    %v658 = vmax.f32 %v642, 0.0
    %v659 = vmax.f32 %v643, 0.0
    %v660 = vmax.f32 %v644, 0.0
    %v661 = vmax.f32 %v645, 0.0
    %v662 = vmax.f32 %v646, 0.0
    %v663 = vmax.f32 %v647, 0.0
    %v664 = vmax.f32 %v648, 0.0
    %v665 = vmax.f32 %v649, 0.0
    %v666 = vmax.f32 %v650, 0.0
    %v667 = vmax.f32 %v651, 0.0
    %v668 = vmax.f32 %v652, 0.0
    %v669 = vmax.f32 %v653, 0.0
    %v670 = vmax.f32 %v654, 0.0
    %v671 = vmax.f32 %v655, 0.0
    %v672 = vsel %vm420, %v656, 0.0
    %v673 = vsel %vm420, %v664, 0.0
    %v674 = vadd.f32 %v672, %v673
    %v675 = vsel %vm420, %v657, 0.0
    %v676 = vsel %vm420, %v665, 0.0
    %v677 = vadd.f32 %v675, %v676
    %v678 = vsel %vm420, %v658, 0.0
    %v679 = vsel %vm420, %v666, 0.0
    %v680 = vadd.f32 %v678, %v679
    %v681 = vsel %vm420, %v659, 0.0
    %v682 = vsel %vm420, %v667, 0.0
    %v683 = vadd.f32 %v681, %v682
    %v684 = vsel %vm420, %v660, 0.0
    %v685 = vsel %vm420, %v668, 0.0
    %v686 = vadd.f32 %v684, %v685
    %v687 = vsel %vm420, %v661, 0.0
    %v688 = vsel %vm420, %v669, 0.0
    %v689 = vadd.f32 %v687, %v688
    %v690 = vsel %vm420, %v662, 0.0
    %v691 = vsel %vm420, %v670, 0.0
    %v692 = vadd.f32 %v690, %v691
    %v693 = vsel %vm420, %v663, 0.0
    %v694 = vsel %vm420, %v671, 0.0
    %v695 = vadd.f32 %v693, %v694
    %v696 = vld [vmem:[%s12] sm:$0xff]
    %v697 = vld [vmem:[%s12 + $0x8] sm:$0xff]
    %v698 = vld [vmem:[%s12 + $0x10] sm:$0xff]
    %v699 = vld [vmem:[%s12 + $0x18] sm:$0xff]
    %v701 = vsel %vm420, %v674, 0
    %v704 = vsel %vm420, %v677, 0
    %v707 = vsel %vm420, %v680, 0
    %v710 = vsel %vm420, %v683, 0
    %v713 = vsel %vm420, %v686, 0
    %v716 = vsel %vm420, %v689, 0
    %v719 = vsel %vm420, %v692, 0
    %v722 = vsel %vm420, %v695, 0
    %724 = vmatprep.subr.mxu0 0.0
    %725 = vmatpush1.msra.mxu0 %v696
    %726 = vmatprep.subr.mxu0 0.0
    %727 = vmatpush1.msra.mxu0 %v697
    %728 = vmatprep.subr.mxu0 0.0
    %729 = vmatpush1.msra.mxu0 %v698
    %730 = vmatprep.subr.mxu0 0.0
    %731 = vmatpush1.msra.mxu0 %v699
    %732 = vmatprep.subr.mxu0 0.0
    %733 = vmatpush1.msra.mxu0 0.0
    %734 = vmatprep.subr.mxu0 0.0
    %735 = vmatpush1.msra.mxu0 0.0
    %736 = vmatprep.subr.mxu0 0.0
    %737 = vmatpush1.msra.mxu0 0.0
    %738 = vmatprep.subr.mxu0 0.0
    %739 = vmatpush1.msra.mxu0 0.0
    %740 = vmatprep.subr.mxu0 0.0
    %741 = vmatpush1.msra.mxu0 0.0
    %742 = vmatprep.subr.mxu0 0.0
    %743 = vmatpush1.msra.mxu0 0.0
    %744 = vmatprep.subr.mxu0 0.0
    %745 = vmatpush1.msra.mxu0 0.0
    %746 = vmatprep.subr.mxu0 0.0
    %747 = vmatpush1.msra.mxu0 0.0
    %748 = vmatprep.subr.mxu0 0.0
    %749 = vmatpush1.msra.mxu0 0.0
    %750 = vmatprep.subr.mxu0 0.0
    %751 = vmatpush1.msra.mxu0 0.0
    %752 = vmatprep.subr.mxu0 0.0
    %753 = vmatpush1.msra.mxu0 0.0
    %754 = vmatprep.subr.mxu0 0.0
    %755 = vmatpush1.msra.mxu0 0.0
    %756 = vmatprep.subr.mxu0 0.0
    %757 = vmatpush1.msra.mxu0 0.0
    %758 = vmatprep.subr.mxu0 0.0
    %759 = vmatpush1.msra.mxu0 0.0
    %760 = vmatprep.subr.mxu0 0.0
    %761 = vmatpush1.msra.mxu0 0.0
    %762 = vmatprep.subr.mxu0 0.0
    %763 = vmatpush1.msra.mxu0 0.0
    %764 = vmatprep.subr.mxu0 0.0
    %765 = vmatpush1.msra.mxu0 0.0
    %766 = vmatprep.subr.mxu0 0.0
    %767 = vmatpush1.msra.mxu0 0.0
    %768 = vmatprep.subr.mxu0 0.0
    %769 = vmatpush1.msra.mxu0 0.0
    %770 = vmatprep.subr.mxu0 0.0
    %771 = vmatpush1.msra.mxu0 0.0
    %772 = vmatprep.subr.mxu0 0.0
    %773 = vmatpush1.msra.mxu0 0.0
    %774 = vmatprep.subr.mxu0 0.0
    %775 = vmatpush1.msra.mxu0 0.0
    %776 = vmatprep.subr.mxu0 0.0
    %777 = vmatpush1.msra.mxu0 0.0
    %778 = vmatprep.subr.mxu0 0.0
    %779 = vmatpush1.msra.mxu0 0.0
    %780 = vmatprep.subr.mxu0 0.0
    %781 = vmatpush1.msra.mxu0 0.0
    %782 = vmatprep.subr.mxu0 0.0
    %783 = vmatpush1.msra.mxu0 0.0
    %784 = vmatprep.subr.mxu0 0.0
    %785 = vmatpush1.msra.mxu0 0.0
    %786 = vmatprep.subr.mxu0 0.0
    %787 = vmatpush1.msra.mxu0 0.0
    %788 = vmatprep.mubr.f32.mxu0 0.0
    %789 = vmatmul.mubr.f32.gmra.mrb[0].mxu0 %v701
    %v790 = vpop.f32.mrb[0].mxu0
    %v791 = vadd.f32 0.0, %v790
    %v792 = vpop.f32.mrb[0].mxu0
    %793 = vmatprep.mubr.f32.mxu0 0.0
    %794 = vmatmul.mubr.f32.gmra.mrb[0].mxu0 %v704
    %v795 = vpop.f32.mrb[0].mxu0
    %v796 = vadd.f32 0.0, %v795
    %v797 = vpop.f32.mrb[0].mxu0
    %798 = vmatprep.mubr.f32.mxu0 0.0
    %799 = vmatmul.mubr.f32.gmra.mrb[0].mxu0 %v707
    %v800 = vpop.f32.mrb[0].mxu0
    %v801 = vadd.f32 0.0, %v800
    %v802 = vpop.f32.mrb[0].mxu0
    %803 = vmatprep.mubr.f32.mxu0 0.0
    %804 = vmatmul.mubr.f32.gmra.mrb[0].mxu0 %v710
    %v805 = vpop.f32.mrb[0].mxu0
    %v806 = vadd.f32 0.0, %v805
    %v807 = vpop.f32.mrb[0].mxu0
    %808 = vmatprep.mubr.f32.mxu0 0.0
    %809 = vmatmul.mubr.f32.gmra.mrb[0].mxu0 %v713
    %v810 = vpop.f32.mrb[0].mxu0
    %v811 = vadd.f32 0.0, %v810
    %v812 = vpop.f32.mrb[0].mxu0
    %813 = vmatprep.mubr.f32.mxu0 0.0
    %814 = vmatmul.mubr.f32.gmra.mrb[0].mxu0 %v716
    %v815 = vpop.f32.mrb[0].mxu0
    %v816 = vadd.f32 0.0, %v815
    %v817 = vpop.f32.mrb[0].mxu0
    %818 = vmatprep.mubr.f32.mxu0 0.0
    %819 = vmatmul.mubr.f32.gmra.mrb[0].mxu0 %v719
    %v820 = vpop.f32.mrb[0].mxu0
    %v821 = vadd.f32 0.0, %v820
    %v822 = vpop.f32.mrb[0].mxu0
    %823 = vmatprep.mubr.f32.mxu0 0.0
    %824 = vmatmul.mubr.f32.gmra.mrb[0].mxu0 %v722
    %v825 = vpop.f32.mrb[0].mxu0
    %v826 = vadd.f32 0.0, %v825
    %v827 = vpop.f32.mrb[0].mxu0
    %828 = vdwg.mxu0
    %v829 = vld [vmem:[%s13] sm:$0x1]
    %v830 = vlaneseq
    %v831 = vshrl.u32 %v830, 7
    %v832 = vsub.s32 0, %v831
    %v833 = vrot.slane %v829, %v832
    %v834 = vmul.f32 %v791, %v833
    %v835 = vmul.f32 %v796, %v833
    %v836 = vmul.f32 %v801, %v833
    %v837 = vmul.f32 %v806, %v833
    %v838 = vmul.f32 %v811, %v833
    %v839 = vmul.f32 %v816, %v833
    %v840 = vmul.f32 %v821, %v833
    %v841 = vmul.f32 %v826, %v833
    %v842 = vld [vmem:[%s13 + $0x1] sm:$0x1]
    %v843 = vlaneseq
    %v844 = vshrl.u32 %v843, 7
    %v845 = vsub.s32 0, %v844
    %v846 = vrot.slane %v842, %v845
    %v847 = vadd.f32 %v834, %v846
    %v848 = vadd.f32 %v835, %v846
    %v849 = vadd.f32 %v836, %v846
    %v850 = vadd.f32 %v837, %v846
    %v851 = vadd.f32 %v838, %v846
    %v852 = vadd.f32 %v839, %v846
    %v853 = vadd.f32 %v840, %v846
    %v854 = vadd.f32 %v841, %v846
    %v855 = vmax.f32 %v847, 0.0
    %v856 = vmax.f32 %v848, 0.0
    %v857 = vmax.f32 %v849, 0.0
    %v858 = vmax.f32 %v850, 0.0
    %v859 = vmax.f32 %v851, 0.0
    %v860 = vmax.f32 %v852, 0.0
    %v861 = vmax.f32 %v853, 0.0
    %v862 = vmax.f32 %v854, 0.0
    %v863 = vld [vmem:[%s14] sm:$0xff]
    %v864 = vld [vmem:[%s14 + $0x8] sm:$0xff]
    %v865 = vld [vmem:[%s14 + $0x10] sm:$0xff]
    %v866 = vld [vmem:[%s14 + $0x18] sm:$0xff]
    %v868 = vsel %vm420, %v855, 0
    %v871 = vsel %vm420, %v856, 0
    %v874 = vsel %vm420, %v857, 0
    %v877 = vsel %vm420, %v858, 0
    %v880 = vsel %vm420, %v859, 0
    %v883 = vsel %vm420, %v860, 0
    %v886 = vsel %vm420, %v861, 0
    %v889 = vsel %vm420, %v862, 0
    %891 = vmatprep.subr.mxu0 0.0
    %892 = vmatpush1.msra.mxu0 %v863
    %893 = vmatprep.subr.mxu0 0.0
    %894 = vmatpush1.msra.mxu0 %v864
    %895 = vmatprep.subr.mxu0 0.0
    %896 = vmatpush1.msra.mxu0 %v865
    %897 = vmatprep.subr.mxu0 0.0
    %898 = vmatpush1.msra.mxu0 %v866
    %899 = vmatprep.subr.mxu0 0.0
    %900 = vmatpush1.msra.mxu0 0.0
    %901 = vmatprep.subr.mxu0 0.0
    %902 = vmatpush1.msra.mxu0 0.0
    %903 = vmatprep.subr.mxu0 0.0
    %904 = vmatpush1.msra.mxu0 0.0
    %905 = vmatprep.subr.mxu0 0.0
    %906 = vmatpush1.msra.mxu0 0.0
    %907 = vmatprep.subr.mxu0 0.0
    %908 = vmatpush1.msra.mxu0 0.0
    %909 = vmatprep.subr.mxu0 0.0
    %910 = vmatpush1.msra.mxu0 0.0
    %911 = vmatprep.subr.mxu0 0.0
    %912 = vmatpush1.msra.mxu0 0.0
    %913 = vmatprep.subr.mxu0 0.0
    %914 = vmatpush1.msra.mxu0 0.0
    %915 = vmatprep.subr.mxu0 0.0
    %916 = vmatpush1.msra.mxu0 0.0
    %917 = vmatprep.subr.mxu0 0.0
    %918 = vmatpush1.msra.mxu0 0.0
    %919 = vmatprep.subr.mxu0 0.0
    %920 = vmatpush1.msra.mxu0 0.0
    %921 = vmatprep.subr.mxu0 0.0
    %922 = vmatpush1.msra.mxu0 0.0
    %923 = vmatprep.subr.mxu0 0.0
    %924 = vmatpush1.msra.mxu0 0.0
    %925 = vmatprep.subr.mxu0 0.0
    %926 = vmatpush1.msra.mxu0 0.0
    %927 = vmatprep.subr.mxu0 0.0
    %928 = vmatpush1.msra.mxu0 0.0
    %929 = vmatprep.subr.mxu0 0.0
    %930 = vmatpush1.msra.mxu0 0.0
    %931 = vmatprep.subr.mxu0 0.0
    %932 = vmatpush1.msra.mxu0 0.0
    %933 = vmatprep.subr.mxu0 0.0
    %934 = vmatpush1.msra.mxu0 0.0
    %935 = vmatprep.subr.mxu0 0.0
    %936 = vmatpush1.msra.mxu0 0.0
    %937 = vmatprep.subr.mxu0 0.0
    %938 = vmatpush1.msra.mxu0 0.0
    %939 = vmatprep.subr.mxu0 0.0
    %940 = vmatpush1.msra.mxu0 0.0
    %941 = vmatprep.subr.mxu0 0.0
    %942 = vmatpush1.msra.mxu0 0.0
    %943 = vmatprep.subr.mxu0 0.0
    %944 = vmatpush1.msra.mxu0 0.0
    %945 = vmatprep.subr.mxu0 0.0
    %946 = vmatpush1.msra.mxu0 0.0
    %947 = vmatprep.subr.mxu0 0.0
    %948 = vmatpush1.msra.mxu0 0.0
    %949 = vmatprep.subr.mxu0 0.0
    %950 = vmatpush1.msra.mxu0 0.0
    %951 = vmatprep.subr.mxu0 0.0
    %952 = vmatpush1.msra.mxu0 0.0
    %953 = vmatprep.subr.mxu0 0.0
    %954 = vmatpush1.msra.mxu0 0.0
    %955 = vmatprep.mubr.f32.mxu0 0.0
    %956 = vmatmul.mubr.f32.gmra.mrb[0].mxu0 %v868
    %v957 = vpop.f32.mrb[0].mxu0
    %v958 = vadd.f32 0.0, %v957
    %v959 = vpop.f32.mrb[0].mxu0
    %960 = vmatprep.mubr.f32.mxu0 0.0
    %961 = vmatmul.mubr.f32.gmra.mrb[0].mxu0 %v871
    %v962 = vpop.f32.mrb[0].mxu0
    %v963 = vadd.f32 0.0, %v962
    %v964 = vpop.f32.mrb[0].mxu0
    %965 = vmatprep.mubr.f32.mxu0 0.0
    %966 = vmatmul.mubr.f32.gmra.mrb[0].mxu0 %v874
    %v967 = vpop.f32.mrb[0].mxu0
    %v968 = vadd.f32 0.0, %v967
    %v969 = vpop.f32.mrb[0].mxu0
    %970 = vmatprep.mubr.f32.mxu0 0.0
    %971 = vmatmul.mubr.f32.gmra.mrb[0].mxu0 %v877
    %v972 = vpop.f32.mrb[0].mxu0
    %v973 = vadd.f32 0.0, %v972
    %v974 = vpop.f32.mrb[0].mxu0
    %975 = vmatprep.mubr.f32.mxu0 0.0
    %976 = vmatmul.mubr.f32.gmra.mrb[0].mxu0 %v880
    %v977 = vpop.f32.mrb[0].mxu0
    %v978 = vadd.f32 0.0, %v977
    %v979 = vpop.f32.mrb[0].mxu0
    %980 = vmatprep.mubr.f32.mxu0 0.0
    %981 = vmatmul.mubr.f32.gmra.mrb[0].mxu0 %v883
    %v982 = vpop.f32.mrb[0].mxu0
    %v983 = vadd.f32 0.0, %v982
    %v984 = vpop.f32.mrb[0].mxu0
    %985 = vmatprep.mubr.f32.mxu0 0.0
    %986 = vmatmul.mubr.f32.gmra.mrb[0].mxu0 %v886
    %v987 = vpop.f32.mrb[0].mxu0
    %v988 = vadd.f32 0.0, %v987
    %v989 = vpop.f32.mrb[0].mxu0
    %990 = vmatprep.mubr.f32.mxu0 0.0
    %991 = vmatmul.mubr.f32.gmra.mrb[0].mxu0 %v889
    %v992 = vpop.f32.mrb[0].mxu0
    %v993 = vadd.f32 0.0, %v992
    %v994 = vpop.f32.mrb[0].mxu0
    %995 = vdwg.mxu0
    %v996 = vld [vmem:[%s15] sm:$0x1]
    %v997 = vlaneseq
    %v998 = vshrl.u32 %v997, 7
    %v999 = vsub.s32 0, %v998
    %v1000 = vrot.slane %v996, %v999
    %v1001 = vmul.f32 %v958, %v1000
    %v1002 = vmul.f32 %v963, %v1000
    %v1003 = vmul.f32 %v968, %v1000
    %v1004 = vmul.f32 %v973, %v1000
    %v1005 = vmul.f32 %v978, %v1000
    %v1006 = vmul.f32 %v983, %v1000
    %v1007 = vmul.f32 %v988, %v1000
    %v1008 = vmul.f32 %v993, %v1000
    %v1009 = vld [vmem:[%s15 + $0x1] sm:$0x1]
    %v1010 = vlaneseq
    %v1011 = vshrl.u32 %v1010, 7
    %v1012 = vsub.s32 0, %v1011
    %v1013 = vrot.slane %v1009, %v1012
    %v1014 = vadd.f32 %v1001, %v1013
    %v1015 = vadd.f32 %v1002, %v1013
    %v1016 = vadd.f32 %v1003, %v1013
    %v1017 = vadd.f32 %v1004, %v1013
    %v1018 = vadd.f32 %v1005, %v1013
    %v1019 = vadd.f32 %v1006, %v1013
    %v1020 = vadd.f32 %v1007, %v1013
    %v1021 = vadd.f32 %v1008, %v1013
    %v1022 = vxor.u32 %v1014, 2147483648
    %v1023 = vxor.u32 %v1015, 2147483648
    %v1024 = vxor.u32 %v1016, 2147483648
    %v1025 = vxor.u32 %v1017, 2147483648
    %v1026 = vxor.u32 %v1018, 2147483648
    %v1027 = vxor.u32 %v1019, 2147483648
    %v1028 = vxor.u32 %v1020, 2147483648
    %v1029 = vxor.u32 %v1021, 2147483648
    %v1030 = vmul.f32 %v1022, 1.442695
    %v1031 = vpow.pop %v1030
    %v1032 = vmul.f32 %v1023, 1.442695
    %v1033 = vpow.pop %v1032
    %v1034 = vmul.f32 %v1024, 1.442695
    %v1035 = vpow.pop %v1034
    %v1036 = vmul.f32 %v1025, 1.442695
    %v1037 = vpow.pop %v1036
    %v1038 = vmul.f32 %v1026, 1.442695
    %v1039 = vpow.pop %v1038
    %v1040 = vmul.f32 %v1027, 1.442695
    %v1041 = vpow.pop %v1040
    %v1042 = vmul.f32 %v1028, 1.442695
    %v1043 = vpow.pop %v1042
    %v1044 = vmul.f32 %v1029, 1.442695
    %v1045 = vpow.pop %v1044
    %v1046 = vadd.f32 %v1031, 1.0
    %v1047 = vadd.f32 %v1033, 1.0
    %v1048 = vadd.f32 %v1035, 1.0
    %v1049 = vadd.f32 %v1037, 1.0
    %v1050 = vadd.f32 %v1039, 1.0
    %v1051 = vadd.f32 %v1041, 1.0
    %v1052 = vadd.f32 %v1043, 1.0
    %v1053 = vadd.f32 %v1045, 1.0
    %v1054 = vrcp.pop %v1046
    %v1055 = vmul.f32 1.0, %v1054
    %v1056 = vrcp.pop %v1047
    %v1057 = vmul.f32 1.0, %v1056
    %v1058 = vrcp.pop %v1048
    %v1059 = vmul.f32 1.0, %v1058
    %v1060 = vrcp.pop %v1049
    %v1061 = vmul.f32 1.0, %v1060
    %v1062 = vrcp.pop %v1050
    %v1063 = vmul.f32 1.0, %v1062
    %v1064 = vrcp.pop %v1051
    %v1065 = vmul.f32 1.0, %v1064
    %v1066 = vrcp.pop %v1052
    %v1067 = vmul.f32 1.0, %v1066
    %v1068 = vrcp.pop %v1053
    %v1069 = vmul.f32 1.0, %v1068
    %v1070 = vld [vmem:[%s1] sm:$0xff]
    %v1071 = vld [vmem:[%s1 + $0x8] sm:$0xff]
    %v1072 = vld [vmem:[%s2] sm:$0x1]
    %v1074 = vlaneseq
    %v1075 = vshrl.u32 %v1074, 7
    %v1076 = vsub.s32 0, %v1075
    %v1077 = vrot.slane %v1072, %v1076
    %1079 = vmatprep.subr.mxu0 0.0
    %1080 = vmatpush1.msra.mxu0 %v1070
    %1081 = vmatprep.subr.mxu0 0.0
    %1082 = vmatpush1.msra.mxu0 %v1071
    %1083 = vmatprep.subr.mxu0 0.0
    %1084 = vmatpush1.msra.mxu0 0.0
    %1085 = vmatprep.subr.mxu0 0.0
    %1086 = vmatpush1.msra.mxu0 0.0
    %1087 = vmatprep.subr.mxu0 0.0
    %1088 = vmatpush1.msra.mxu0 0.0
    %1089 = vmatprep.subr.mxu0 0.0
    %1090 = vmatpush1.msra.mxu0 0.0
    %1091 = vmatprep.subr.mxu0 0.0
    %1092 = vmatpush1.msra.mxu0 0.0
    %1093 = vmatprep.subr.mxu0 0.0
    %1094 = vmatpush1.msra.mxu0 0.0
    %1095 = vmatprep.subr.mxu0 0.0
    %1096 = vmatpush1.msra.mxu0 0.0
    %1097 = vmatprep.subr.mxu0 0.0
    %1098 = vmatpush1.msra.mxu0 0.0
    %1099 = vmatprep.subr.mxu0 0.0
    %1100 = vmatpush1.msra.mxu0 0.0
    %1101 = vmatprep.subr.mxu0 0.0
    %1102 = vmatpush1.msra.mxu0 0.0
    %1103 = vmatprep.subr.mxu0 0.0
    %1104 = vmatpush1.msra.mxu0 0.0
    %1105 = vmatprep.subr.mxu0 0.0
    %1106 = vmatpush1.msra.mxu0 0.0
    %1107 = vmatprep.subr.mxu0 0.0
    %1108 = vmatpush1.msra.mxu0 0.0
    %1109 = vmatprep.subr.mxu0 0.0
    %1110 = vmatpush1.msra.mxu0 0.0
    %1111 = vmatprep.subr.mxu0 0.0
    %1112 = vmatpush1.msra.mxu0 0.0
    %1113 = vmatprep.subr.mxu0 0.0
    %1114 = vmatpush1.msra.mxu0 0.0
    %1115 = vmatprep.subr.mxu0 0.0
    %1116 = vmatpush1.msra.mxu0 0.0
    %1117 = vmatprep.subr.mxu0 0.0
    %1118 = vmatpush1.msra.mxu0 0.0
    %1119 = vmatprep.subr.mxu0 0.0
    %1120 = vmatpush1.msra.mxu0 0.0
    %1121 = vmatprep.subr.mxu0 0.0
    %1122 = vmatpush1.msra.mxu0 0.0
    %1123 = vmatprep.subr.mxu0 0.0
    %1124 = vmatpush1.msra.mxu0 0.0
    %1125 = vmatprep.subr.mxu0 0.0
    %1126 = vmatpush1.msra.mxu0 0.0
    %1127 = vmatprep.subr.mxu0 0.0
    %1128 = vmatpush1.msra.mxu0 0.0
    %1129 = vmatprep.subr.mxu0 0.0
    %1130 = vmatpush1.msra.mxu0 0.0
    %1131 = vmatprep.subr.mxu0 0.0
    %1132 = vmatpush1.msra.mxu0 0.0
    %1133 = vmatprep.subr.mxu0 0.0
    %1134 = vmatpush1.msra.mxu0 0.0
    %1135 = vmatprep.subr.mxu0 0.0
    %1136 = vmatpush1.msra.mxu0 0.0
    %1137 = vmatprep.subr.mxu0 0.0
    %1138 = vmatpush1.msra.mxu0 0.0
    %1139 = vmatprep.subr.mxu0 0.0
    %1140 = vmatpush1.msra.mxu0 0.0
    %1141 = vmatprep.subr.mxu0 0.0
    %1142 = vmatpush1.msra.mxu0 0.0
    %1143 = vmatprep.mubr.f32.mxu0 0.0
    %1144 = vmatmul.mubr.f32.gmra.mrb[0].mxu0 %v181
    %v1145 = vpop.f32.mrb[0].mxu0
    %v1146 = vadd.f32 %v1077, %v1145
    %v1147 = vpop.f32.mrb[0].mxu0
    %1148 = vmatprep.mubr.f32.mxu0 0.0
    %1149 = vmatmul.mubr.f32.gmra.mrb[0].mxu0 %v183
    %v1150 = vpop.f32.mrb[0].mxu0
    %v1151 = vadd.f32 %v1077, %v1150
    %v1152 = vpop.f32.mrb[0].mxu0
    %1153 = vmatprep.mubr.f32.mxu0 0.0
    %1154 = vmatmul.mubr.f32.gmra.mrb[0].mxu0 %v185
    %v1155 = vpop.f32.mrb[0].mxu0
    %v1156 = vadd.f32 %v1077, %v1155
    %v1157 = vpop.f32.mrb[0].mxu0
    %1158 = vmatprep.mubr.f32.mxu0 0.0
    %1159 = vmatmul.mubr.f32.gmra.mrb[0].mxu0 %v187
    %v1160 = vpop.f32.mrb[0].mxu0
    %v1161 = vadd.f32 %v1077, %v1160
    %v1162 = vpop.f32.mrb[0].mxu0
    %1163 = vmatprep.mubr.f32.mxu0 0.0
    %1164 = vmatmul.mubr.f32.gmra.mrb[0].mxu0 %v189
    %v1165 = vpop.f32.mrb[0].mxu0
    %v1166 = vadd.f32 %v1077, %v1165
    %v1167 = vpop.f32.mrb[0].mxu0
    %1168 = vmatprep.mubr.f32.mxu0 0.0
    %1169 = vmatmul.mubr.f32.gmra.mrb[0].mxu0 %v191
    %v1170 = vpop.f32.mrb[0].mxu0
    %v1171 = vadd.f32 %v1077, %v1170
    %v1172 = vpop.f32.mrb[0].mxu0
    %1173 = vmatprep.mubr.f32.mxu0 0.0
    %1174 = vmatmul.mubr.f32.gmra.mrb[0].mxu0 %v193
    %v1175 = vpop.f32.mrb[0].mxu0
    %v1176 = vadd.f32 %v1077, %v1175
    %v1177 = vpop.f32.mrb[0].mxu0
    %1178 = vmatprep.mubr.f32.mxu0 0.0
    %1179 = vmatmul.mubr.f32.gmra.mrb[0].mxu0 %v195
    %v1180 = vpop.f32.mrb[0].mxu0
    %v1181 = vadd.f32 %v1077, %v1180
    %v1182 = vpop.f32.mrb[0].mxu0
    %1183 = vmatprep.mubr.f32.mxu0 0.0
    %1184 = vmatmul.mubr.f32.gmra.mrb[0].mxu0 %v197
    %v1185 = vpop.f32.mrb[0].mxu0
    %v1186 = vadd.f32 %v1077, %v1185
    %v1187 = vpop.f32.mrb[0].mxu0
    %1188 = vmatprep.mubr.f32.mxu0 0.0
    %1189 = vmatmul.mubr.f32.gmra.mrb[0].mxu0 %v199
    %v1190 = vpop.f32.mrb[0].mxu0
    %v1191 = vadd.f32 %v1077, %v1190
    %v1192 = vpop.f32.mrb[0].mxu0
    %1193 = vmatprep.mubr.f32.mxu0 0.0
    %1194 = vmatmul.mubr.f32.gmra.mrb[0].mxu0 %v201
    %v1195 = vpop.f32.mrb[0].mxu0
    %v1196 = vadd.f32 %v1077, %v1195
    %v1197 = vpop.f32.mrb[0].mxu0
    %1198 = vmatprep.mubr.f32.mxu0 0.0
    %1199 = vmatmul.mubr.f32.gmra.mrb[0].mxu0 %v203
    %v1200 = vpop.f32.mrb[0].mxu0
    %v1201 = vadd.f32 %v1077, %v1200
    %v1202 = vpop.f32.mrb[0].mxu0
    %1203 = vmatprep.mubr.f32.mxu0 0.0
    %1204 = vmatmul.mubr.f32.gmra.mrb[0].mxu0 %v205
    %v1205 = vpop.f32.mrb[0].mxu0
    %v1206 = vadd.f32 %v1077, %v1205
    %v1207 = vpop.f32.mrb[0].mxu0
    %1208 = vmatprep.mubr.f32.mxu0 0.0
    %1209 = vmatmul.mubr.f32.gmra.mrb[0].mxu0 %v207
    %v1210 = vpop.f32.mrb[0].mxu0
    %v1211 = vadd.f32 %v1077, %v1210
    %v1212 = vpop.f32.mrb[0].mxu0
    %1213 = vmatprep.mubr.f32.mxu0 0.0
    %1214 = vmatmul.mubr.f32.gmra.mrb[0].mxu0 %v209
    %v1215 = vpop.f32.mrb[0].mxu0
    %v1216 = vadd.f32 %v1077, %v1215
    %v1217 = vpop.f32.mrb[0].mxu0
    %1218 = vmatprep.mubr.f32.mxu0 0.0
    %1219 = vmatmul.mubr.f32.gmra.mrb[0].mxu0 %v211
    %v1220 = vpop.f32.mrb[0].mxu0
    %v1221 = vadd.f32 %v1077, %v1220
    %v1222 = vpop.f32.mrb[0].mxu0
    %1223 = vdwg.mxu0
    %v1224 = vld [vmem:[%s3] sm:$0xff]
    %v1225 = vld [vmem:[%s3 + $0x8] sm:$0xff]
    %v1226 = vld [vmem:[%s3 + $0x10] sm:$0xff]
    %v1227 = vld [vmem:[%s3 + $0x18] sm:$0xff]
    %v1228 = vld [vmem:[%s3 + $0x20] sm:$0xff]
    %v1229 = vld [vmem:[%s3 + $0x28] sm:$0xff]
    %v1230 = vld [vmem:[%s3 + $0x30] sm:$0xff]
    %v1231 = vld [vmem:[%s3 + $0x38] sm:$0xff]
    %1233 = vset.pattern.permute.xlu0 0
    %1234 = vperm.xlu0 %1233, %v1224
    %v1235 = vpop.permute.xlu0 %1234
    %1238 = vset.pattern.permute.xlu0 0
    %1239 = vperm.xlu0 %1238, %v1225
    %v1240 = vpop.permute.xlu0 %1239
    %1243 = vset.pattern.permute.xlu0 0
    %1244 = vperm.xlu0 %1243, %v1226
    %v1245 = vpop.permute.xlu0 %1244
    %1248 = vset.pattern.permute.xlu0 0
    %1249 = vperm.xlu0 %1248, %v1227
    %v1250 = vpop.permute.xlu0 %1249
    %1253 = vset.pattern.permute.xlu0 0
    %1254 = vperm.xlu0 %1253, %v1228
    %v1255 = vpop.permute.xlu0 %1254
    %1258 = vset.pattern.permute.xlu0 0
    %1259 = vperm.xlu0 %1258, %v1229
    %v1260 = vpop.permute.xlu0 %1259
    %1263 = vset.pattern.permute.xlu0 0
    %1264 = vperm.xlu0 %1263, %v1230
    %v1265 = vpop.permute.xlu0 %1264
    %1268 = vset.pattern.permute.xlu0 0
    %1269 = vperm.xlu0 %1268, %v1231
    %v1270 = vpop.permute.xlu0 %1269
    %v1272 = vmul.f32 %v1146, %v1235
    %v1273 = vmul.f32 %v1151, %v1240
    %v1274 = vmul.f32 %v1156, %v1245
    %v1275 = vmul.f32 %v1161, %v1250
    %v1276 = vmul.f32 %v1166, %v1255
    %v1277 = vmul.f32 %v1171, %v1260
    %v1278 = vmul.f32 %v1176, %v1265
    %v1279 = vmul.f32 %v1181, %v1270
    %v1280 = vmul.f32 %v1186, %v1235
    %v1281 = vmul.f32 %v1191, %v1240
    %v1282 = vmul.f32 %v1196, %v1245
    %v1283 = vmul.f32 %v1201, %v1250
    %v1284 = vmul.f32 %v1206, %v1255
    %v1285 = vmul.f32 %v1211, %v1260
    %v1286 = vmul.f32 %v1216, %v1265
    %v1287 = vmul.f32 %v1221, %v1270
    %1288 = vset.pattern.permute.xlu0 1
    %1289 = vperm.xlu0 %1288, %v1224
    %v1290 = vpop.permute.xlu0 %1289
    %1292 = vset.pattern.permute.xlu0 1
    %1293 = vperm.xlu0 %1292, %v1225
    %v1294 = vpop.permute.xlu0 %1293
    %1296 = vset.pattern.permute.xlu0 1
    %1297 = vperm.xlu0 %1296, %v1226
    %v1298 = vpop.permute.xlu0 %1297
    %1300 = vset.pattern.permute.xlu0 1
    %1301 = vperm.xlu0 %1300, %v1227
    %v1302 = vpop.permute.xlu0 %1301
    %1304 = vset.pattern.permute.xlu0 1
    %1305 = vperm.xlu0 %1304, %v1228
    %v1306 = vpop.permute.xlu0 %1305
    %1308 = vset.pattern.permute.xlu0 1
    %1309 = vperm.xlu0 %1308, %v1229
    %v1310 = vpop.permute.xlu0 %1309
    %1312 = vset.pattern.permute.xlu0 1
    %1313 = vperm.xlu0 %1312, %v1230
    %v1314 = vpop.permute.xlu0 %1313
    %1316 = vset.pattern.permute.xlu0 1
    %1317 = vperm.xlu0 %1316, %v1231
    %v1318 = vpop.permute.xlu0 %1317
    %v1320 = vadd.f32 %v1272, %v1290
    %v1321 = vadd.f32 %v1273, %v1294
    %v1322 = vadd.f32 %v1274, %v1298
    %v1323 = vadd.f32 %v1275, %v1302
    %v1324 = vadd.f32 %v1276, %v1306
    %v1325 = vadd.f32 %v1277, %v1310
    %v1326 = vadd.f32 %v1278, %v1314
    %v1327 = vadd.f32 %v1279, %v1318
    %v1328 = vadd.f32 %v1280, %v1290
    %v1329 = vadd.f32 %v1281, %v1294
    %v1330 = vadd.f32 %v1282, %v1298
    %v1331 = vadd.f32 %v1283, %v1302
    %v1332 = vadd.f32 %v1284, %v1306
    %v1333 = vadd.f32 %v1285, %v1310
    %v1334 = vadd.f32 %v1286, %v1314
    %v1335 = vadd.f32 %v1287, %v1318
    %v1352 = vld [vmem:[%s4] sm:$0xff]
    %v1353 = vld [vmem:[%s4 + $0x8] sm:$0xff]
    %v1354 = vld [vmem:[%s4 + $0x10] sm:$0xff]
    %v1355 = vld [vmem:[%s4 + $0x18] sm:$0xff]
    %v1356 = vld [vmem:[%s4 + $0x20] sm:$0xff]
    %v1357 = vld [vmem:[%s4 + $0x28] sm:$0xff]
    %v1358 = vld [vmem:[%s4 + $0x30] sm:$0xff]
    %v1359 = vld [vmem:[%s4 + $0x38] sm:$0xff]
    %v1360 = vmul.f32 %v132, %v1352
    %v1361 = vmul.f32 %v135, %v1353
    %v1362 = vmul.f32 %v138, %v1354
    %v1363 = vmul.f32 %v141, %v1355
    %v1364 = vmul.f32 %v144, %v1356
    %v1365 = vmul.f32 %v147, %v1357
    %v1366 = vmul.f32 %v150, %v1358
    %v1367 = vmul.f32 %v153, %v1359
    %v1368 = vmul.f32 %v156, %v1352
    %v1369 = vmul.f32 %v159, %v1353
    %v1370 = vmul.f32 %v162, %v1354
    %v1371 = vmul.f32 %v165, %v1355
    %v1372 = vmul.f32 %v168, %v1356
    %v1373 = vmul.f32 %v171, %v1357
    %v1374 = vmul.f32 %v174, %v1358
    %v1375 = vmul.f32 %v177, %v1359
    %v1376 = vsel %vm180, %v1360, 0.0
    %v1377 = vsel %vm180, %v1361, 0.0
    %v1378 = vadd.f32 %v1376, %v1377
    %v1379 = vsel %vm180, %v1362, 0.0
    %v1380 = vadd.f32 %v1378, %v1379
    %v1381 = vsel %vm180, %v1363, 0.0
    %v1382 = vadd.f32 %v1380, %v1381
    %v1383 = vsel %vm180, %v1364, 0.0
    %v1384 = vadd.f32 %v1382, %v1383
    %v1385 = vsel %vm180, %v1365, 0.0
    %v1386 = vadd.f32 %v1384, %v1385
    %v1387 = vsel %vm180, %v1366, 0.0
    %v1388 = vadd.f32 %v1386, %v1387
    %v1389 = vsel %vm180, %v1367, 0.0
    %v1390 = vadd.f32 %v1388, %v1389
    %v1391 = vrot.slane %v1390, 4
    %v1392 = vadd.f32 %v1390, %v1391
    %v1393 = vrot.slane %v1392, 2
    %v1394 = vadd.f32 %v1392, %v1393
    %v1395 = vrot.slane %v1394, 1
    %v1396 = vadd.f32 %v1394, %v1395
    %v1397 = vsel %vm180, %v1368, 0.0
    %v1398 = vsel %vm180, %v1369, 0.0
    %v1399 = vadd.f32 %v1397, %v1398
    %v1400 = vsel %vm180, %v1370, 0.0
    %v1401 = vadd.f32 %v1399, %v1400
    %v1402 = vsel %vm180, %v1371, 0.0
    %v1403 = vadd.f32 %v1401, %v1402
    %v1404 = vsel %vm180, %v1372, 0.0
    %v1405 = vadd.f32 %v1403, %v1404
    %v1406 = vsel %vm180, %v1373, 0.0
    %v1407 = vadd.f32 %v1405, %v1406
    %v1408 = vsel %vm180, %v1374, 0.0
    %v1409 = vadd.f32 %v1407, %v1408
    %v1410 = vsel %vm180, %v1375, 0.0
    %v1411 = vadd.f32 %v1409, %v1410
    %v1412 = vrot.slane %v1411, 4
    %v1413 = vadd.f32 %v1411, %v1412
    %v1414 = vrot.slane %v1413, 2
    %v1415 = vadd.f32 %v1413, %v1414
    %v1416 = vrot.slane %v1415, 1
    %v1417 = vadd.f32 %v1415, %v1416
    %v1418 = vld [vmem:[%s5] sm:$0xff]
    %v1419 = vld [vmem:[%s5 + $0x8] sm:$0xff]
    %vm1422 = vcmask 1041409
    %v1423 = vsel %vm1422, %v1417, %v1396
    %v1424 = vsel %vm180, %v1423, 0
    %1426 = vmatprep.subr.mxu0 0.0
    %1427 = vmatpush1.msra.mxu0 %v1418
    %1428 = vmatprep.subr.mxu0 0.0
    %1429 = vmatpush1.msra.mxu0 %v1419
    %1430 = vmatprep.subr.mxu0 0.0
    %1431 = vmatpush1.msra.mxu0 0.0
    %1432 = vmatprep.subr.mxu0 0.0
    %1433 = vmatpush1.msra.mxu0 0.0
    %1434 = vmatprep.subr.mxu0 0.0
    %1435 = vmatpush1.msra.mxu0 0.0
    %1436 = vmatprep.subr.mxu0 0.0
    %1437 = vmatpush1.msra.mxu0 0.0
    %1438 = vmatprep.subr.mxu0 0.0
    %1439 = vmatpush1.msra.mxu0 0.0
    %1440 = vmatprep.subr.mxu0 0.0
    %1441 = vmatpush1.msra.mxu0 0.0
    %1442 = vmatprep.subr.mxu0 0.0
    %1443 = vmatpush1.msra.mxu0 0.0
    %1444 = vmatprep.subr.mxu0 0.0
    %1445 = vmatpush1.msra.mxu0 0.0
    %1446 = vmatprep.subr.mxu0 0.0
    %1447 = vmatpush1.msra.mxu0 0.0
    %1448 = vmatprep.subr.mxu0 0.0
    %1449 = vmatpush1.msra.mxu0 0.0
    %1450 = vmatprep.subr.mxu0 0.0
    %1451 = vmatpush1.msra.mxu0 0.0
    %1452 = vmatprep.subr.mxu0 0.0
    %1453 = vmatpush1.msra.mxu0 0.0
    %1454 = vmatprep.subr.mxu0 0.0
    %1455 = vmatpush1.msra.mxu0 0.0
    %1456 = vmatprep.subr.mxu0 0.0
    %1457 = vmatpush1.msra.mxu0 0.0
    %1458 = vmatprep.subr.mxu0 0.0
    %1459 = vmatpush1.msra.mxu0 0.0
    %1460 = vmatprep.subr.mxu0 0.0
    %1461 = vmatpush1.msra.mxu0 0.0
    %1462 = vmatprep.subr.mxu0 0.0
    %1463 = vmatpush1.msra.mxu0 0.0
    %1464 = vmatprep.subr.mxu0 0.0
    %1465 = vmatpush1.msra.mxu0 0.0
    %1466 = vmatprep.subr.mxu0 0.0
    %1467 = vmatpush1.msra.mxu0 0.0
    %1468 = vmatprep.subr.mxu0 0.0
    %1469 = vmatpush1.msra.mxu0 0.0
    %1470 = vmatprep.subr.mxu0 0.0
    %1471 = vmatpush1.msra.mxu0 0.0
    %1472 = vmatprep.subr.mxu0 0.0
    %1473 = vmatpush1.msra.mxu0 0.0
    %1474 = vmatprep.subr.mxu0 0.0
    %1475 = vmatpush1.msra.mxu0 0.0
    %1476 = vmatprep.subr.mxu0 0.0
    %1477 = vmatpush1.msra.mxu0 0.0
    %1478 = vmatprep.subr.mxu0 0.0
    %1479 = vmatpush1.msra.mxu0 0.0
    %1480 = vmatprep.subr.mxu0 0.0
    %1481 = vmatpush1.msra.mxu0 0.0
    %1482 = vmatprep.subr.mxu0 0.0
    %1483 = vmatpush1.msra.mxu0 0.0
    %1484 = vmatprep.subr.mxu0 0.0
    %1485 = vmatpush1.msra.mxu0 0.0
    %1486 = vmatprep.subr.mxu0 0.0
    %1487 = vmatpush1.msra.mxu0 0.0
    %1488 = vmatprep.subr.mxu0 0.0
    %1489 = vmatpush1.msra.mxu0 0.0
    %1490 = vmatprep.mubr.f32.mxu0 0.0
    %1491 = vmatmul.mubr.f32.gmra.mrb[0].mxu0 %v1424
    %v1492 = vpop.f32.mrb[0].mxu0
    %v1493 = vadd.f32 0.0, %v1492
    %v1494 = vpop.f32.mrb[0].mxu0
    %1495 = vdwg.mxu0
    %v1496 = vmax.f32 %v1493, 0.0
    %v1497 = vld [vmem:[%s6] sm:$0xff]
    %v1499 = vcombine.high %v1497, %v1497
    %vm1500 = vcmask 31744
    %v1502 = vsel %vm1500, %v1496, 0
    %vm1504 = vcmask 1043456
    %v1505 = vsel %vm1504, %v1497, 0
    %v1507 = vsel %vm1504, %v1499, 0
    %1509 = vmatprep.subr.mxu0 %v1507
    %1510 = vmatpush1.msra.mxu0 %v1505
    %1511 = vmatprep.subr.mxu0 0.0
    %1512 = vmatpush1.msra.mxu0 0.0
    %1513 = vmatprep.subr.mxu0 0.0
    %1514 = vmatpush1.msra.mxu0 0.0
    %1515 = vmatprep.subr.mxu0 0.0
    %1516 = vmatpush1.msra.mxu0 0.0
    %1517 = vmatprep.subr.mxu0 0.0
    %1518 = vmatpush1.msra.mxu0 0.0
    %1519 = vmatprep.subr.mxu0 0.0
    %1520 = vmatpush1.msra.mxu0 0.0
    %1521 = vmatprep.subr.mxu0 0.0
    %1522 = vmatpush1.msra.mxu0 0.0
    %1523 = vmatprep.subr.mxu0 0.0
    %1524 = vmatpush1.msra.mxu0 0.0
    %1525 = vmatprep.subr.mxu0 0.0
    %1526 = vmatpush1.msra.mxu0 0.0
    %1527 = vmatprep.subr.mxu0 0.0
    %1528 = vmatpush1.msra.mxu0 0.0
    %1529 = vmatprep.subr.mxu0 0.0
    %1530 = vmatpush1.msra.mxu0 0.0
    %1531 = vmatprep.subr.mxu0 0.0
    %1532 = vmatpush1.msra.mxu0 0.0
    %1533 = vmatprep.subr.mxu0 0.0
    %1534 = vmatpush1.msra.mxu0 0.0
    %1535 = vmatprep.subr.mxu0 0.0
    %1536 = vmatpush1.msra.mxu0 0.0
    %1537 = vmatprep.subr.mxu0 0.0
    %1538 = vmatpush1.msra.mxu0 0.0
    %1539 = vmatprep.subr.mxu0 0.0
    %1540 = vmatpush1.msra.mxu0 0.0
    %1541 = vmatprep.subr.mxu0 0.0
    %1542 = vmatpush1.msra.mxu0 0.0
    %1543 = vmatprep.subr.mxu0 0.0
    %1544 = vmatpush1.msra.mxu0 0.0
    %1545 = vmatprep.subr.mxu0 0.0
    %1546 = vmatpush1.msra.mxu0 0.0
    %1547 = vmatprep.subr.mxu0 0.0
    %1548 = vmatpush1.msra.mxu0 0.0
    %1549 = vmatprep.subr.mxu0 0.0
    %1550 = vmatpush1.msra.mxu0 0.0
    %1551 = vmatprep.subr.mxu0 0.0
    %1552 = vmatpush1.msra.mxu0 0.0
    %1553 = vmatprep.subr.mxu0 0.0
    %1554 = vmatpush1.msra.mxu0 0.0
    %1555 = vmatprep.subr.mxu0 0.0
    %1556 = vmatpush1.msra.mxu0 0.0
    %1557 = vmatprep.subr.mxu0 0.0
    %1558 = vmatpush1.msra.mxu0 0.0
    %1559 = vmatprep.subr.mxu0 0.0
    %1560 = vmatpush1.msra.mxu0 0.0
    %1561 = vmatprep.subr.mxu0 0.0
    %1562 = vmatpush1.msra.mxu0 0.0
    %1563 = vmatprep.subr.mxu0 0.0
    %1564 = vmatpush1.msra.mxu0 0.0
    %1565 = vmatprep.subr.mxu0 0.0
    %1566 = vmatpush1.msra.mxu0 0.0
    %1567 = vmatprep.subr.mxu0 0.0
    %1568 = vmatpush1.msra.mxu0 0.0
    %1569 = vmatprep.subr.mxu0 0.0
    %1570 = vmatpush1.msra.mxu0 0.0
    %1571 = vmatprep.subr.mxu0 0.0
    %1572 = vmatpush1.msra.mxu0 0.0
    %1573 = vmatprep.mubr.f32.mxu0 0.0
    %1574 = vmatmul.mubr.f32.gmra.mrb[0].mxu0 %v1502
    %v1575 = vpop.f32.mrb[0].mxu0
    %v1576 = vadd.f32 0.0, %v1575
    %v1577 = vpop.f32.mrb[0].mxu0
    %v1578 = vadd.f32 0.0, %v1577
    %1579 = vdwg.mxu0
    %v1580 = vxor.u32 %v1576, 2147483648
    %v1581 = vxor.u32 %v1578, 2147483648
    %v1582 = vmul.f32 %v1580, 1.442695
    %v1583 = vpow.pop %v1582
    %v1584 = vmul.f32 %v1581, 1.442695
    %v1585 = vpow.pop %v1584
    %v1586 = vadd.f32 %v1583, 1.0
    %v1587 = vadd.f32 %v1585, 1.0
    %v1588 = vrcp.pop %v1586
    %v1589 = vmul.f32 1.0, %v1588
    %v1590 = vrcp.pop %v1587
    %v1591 = vmul.f32 1.0, %v1590
    %v1592 = vld [vmem:[%s7] ss:$2 sm:$0x3]
    %v1594 = vlaneseq
    %v1595 = vshrl.u32 %v1594, 7
    %v1596 = vsub.s32 0, %v1595
    %v1597 = vrot.slane %v1592, %v1596
    %v1598 = vlaneseq
    %v1599 = vshrl.u32 %v1598, 7
    %v1600 = vsub.s32 1, %v1599
    %v1601 = vrot.slane %v1592, %v1600
    %v1604 = vmul.f32 %v1589, %v1597
    %v1605 = vmul.f32 %v1591, %v1601
    %s1606 = scalar_lea.vmem %s7, 1
    %v1607 = vld [vmem:[%s1606] ss:$2 sm:$0x3]
    %v1609 = vlaneseq
    %v1610 = vshrl.u32 %v1609, 7
    %v1611 = vsub.s32 0, %v1610
    %v1612 = vrot.slane %v1607, %v1611
    %v1613 = vlaneseq
    %v1614 = vshrl.u32 %v1613, 7
    %v1615 = vsub.s32 1, %v1614
    %v1616 = vrot.slane %v1607, %v1615
    %v1619 = vadd.f32 %v1604, %v1612
    %v1620 = vadd.f32 %v1605, %v1616
    %v1622 = vsel %vm180, %v1055, 0
    %v1625 = vsel %vm180, %v1057, 0
    %v1628 = vsel %vm180, %v1059, 0
    %v1631 = vsel %vm180, %v1061, 0
    %v1634 = vsel %vm180, %v1063, 0
    %v1637 = vsel %vm180, %v1065, 0
    %v1640 = vsel %vm180, %v1067, 0
    %v1643 = vsel %vm180, %v1069, 0
    %1645 = vmatprep.subr.mxu0 0.0
    %1646 = vmatpush1.msra.mxu0 %v1070
    %1647 = vmatprep.subr.mxu0 0.0
    %1648 = vmatpush1.msra.mxu0 %v1071
    %1649 = vmatprep.subr.mxu0 0.0
    %1650 = vmatpush1.msra.mxu0 0.0
    %1651 = vmatprep.subr.mxu0 0.0
    %1652 = vmatpush1.msra.mxu0 0.0
    %1653 = vmatprep.subr.mxu0 0.0
    %1654 = vmatpush1.msra.mxu0 0.0
    %1655 = vmatprep.subr.mxu0 0.0
    %1656 = vmatpush1.msra.mxu0 0.0
    %1657 = vmatprep.subr.mxu0 0.0
    %1658 = vmatpush1.msra.mxu0 0.0
    %1659 = vmatprep.subr.mxu0 0.0
    %1660 = vmatpush1.msra.mxu0 0.0
    %1661 = vmatprep.subr.mxu0 0.0
    %1662 = vmatpush1.msra.mxu0 0.0
    %1663 = vmatprep.subr.mxu0 0.0
    %1664 = vmatpush1.msra.mxu0 0.0
    %1665 = vmatprep.subr.mxu0 0.0
    %1666 = vmatpush1.msra.mxu0 0.0
    %1667 = vmatprep.subr.mxu0 0.0
    %1668 = vmatpush1.msra.mxu0 0.0
    %1669 = vmatprep.subr.mxu0 0.0
    %1670 = vmatpush1.msra.mxu0 0.0
    %1671 = vmatprep.subr.mxu0 0.0
    %1672 = vmatpush1.msra.mxu0 0.0
    %1673 = vmatprep.subr.mxu0 0.0
    %1674 = vmatpush1.msra.mxu0 0.0
    %1675 = vmatprep.subr.mxu0 0.0
    %1676 = vmatpush1.msra.mxu0 0.0
    %1677 = vmatprep.subr.mxu0 0.0
    %1678 = vmatpush1.msra.mxu0 0.0
    %1679 = vmatprep.subr.mxu0 0.0
    %1680 = vmatpush1.msra.mxu0 0.0
    %1681 = vmatprep.subr.mxu0 0.0
    %1682 = vmatpush1.msra.mxu0 0.0
    %1683 = vmatprep.subr.mxu0 0.0
    %1684 = vmatpush1.msra.mxu0 0.0
    %1685 = vmatprep.subr.mxu0 0.0
    %1686 = vmatpush1.msra.mxu0 0.0
    %1687 = vmatprep.subr.mxu0 0.0
    %1688 = vmatpush1.msra.mxu0 0.0
    %1689 = vmatprep.subr.mxu0 0.0
    %1690 = vmatpush1.msra.mxu0 0.0
    %1691 = vmatprep.subr.mxu0 0.0
    %1692 = vmatpush1.msra.mxu0 0.0
    %1693 = vmatprep.subr.mxu0 0.0
    %1694 = vmatpush1.msra.mxu0 0.0
    %1695 = vmatprep.subr.mxu0 0.0
    %1696 = vmatpush1.msra.mxu0 0.0
    %1697 = vmatprep.subr.mxu0 0.0
    %1698 = vmatpush1.msra.mxu0 0.0
    %1699 = vmatprep.subr.mxu0 0.0
    %1700 = vmatpush1.msra.mxu0 0.0
    %1701 = vmatprep.subr.mxu0 0.0
    %1702 = vmatpush1.msra.mxu0 0.0
    %1703 = vmatprep.subr.mxu0 0.0
    %1704 = vmatpush1.msra.mxu0 0.0
    %1705 = vmatprep.subr.mxu0 0.0
    %1706 = vmatpush1.msra.mxu0 0.0
    %1707 = vmatprep.subr.mxu0 0.0
    %1708 = vmatpush1.msra.mxu0 0.0
    %1709 = vmatprep.mubr.f32.mxu0 0.0
    %1710 = vmatmul.mubr.f32.gmra.mrb[0].mxu0 %v1622
    %v1711 = vpop.f32.mrb[0].mxu0
    %v1712 = vadd.f32 %v1077, %v1711
    %v1713 = vpop.f32.mrb[0].mxu0
    %1714 = vmatprep.mubr.f32.mxu0 0.0
    %1715 = vmatmul.mubr.f32.gmra.mrb[0].mxu0 %v1625
    %v1716 = vpop.f32.mrb[0].mxu0
    %v1717 = vadd.f32 %v1077, %v1716
    %v1718 = vpop.f32.mrb[0].mxu0
    %1719 = vmatprep.mubr.f32.mxu0 0.0
    %1720 = vmatmul.mubr.f32.gmra.mrb[0].mxu0 %v1628
    %v1721 = vpop.f32.mrb[0].mxu0
    %v1722 = vadd.f32 %v1077, %v1721
    %v1723 = vpop.f32.mrb[0].mxu0
    %1724 = vmatprep.mubr.f32.mxu0 0.0
    %1725 = vmatmul.mubr.f32.gmra.mrb[0].mxu0 %v1631
    %v1726 = vpop.f32.mrb[0].mxu0
    %v1727 = vadd.f32 %v1077, %v1726
    %v1728 = vpop.f32.mrb[0].mxu0
    %1729 = vmatprep.mubr.f32.mxu0 0.0
    %1730 = vmatmul.mubr.f32.gmra.mrb[0].mxu0 %v1634
    %v1731 = vpop.f32.mrb[0].mxu0
    %v1732 = vadd.f32 %v1077, %v1731
    %v1733 = vpop.f32.mrb[0].mxu0
    %1734 = vmatprep.mubr.f32.mxu0 0.0
    %1735 = vmatmul.mubr.f32.gmra.mrb[0].mxu0 %v1637
    %v1736 = vpop.f32.mrb[0].mxu0
    %v1737 = vadd.f32 %v1077, %v1736
    %v1738 = vpop.f32.mrb[0].mxu0
    %1739 = vmatprep.mubr.f32.mxu0 0.0
    %1740 = vmatmul.mubr.f32.gmra.mrb[0].mxu0 %v1640
    %v1741 = vpop.f32.mrb[0].mxu0
    %v1742 = vadd.f32 %v1077, %v1741
    %v1743 = vpop.f32.mrb[0].mxu0
    %1744 = vmatprep.mubr.f32.mxu0 0.0
    %1745 = vmatmul.mubr.f32.gmra.mrb[0].mxu0 %v1643
    %v1746 = vpop.f32.mrb[0].mxu0
    %v1747 = vadd.f32 %v1077, %v1746
    %v1748 = vpop.f32.mrb[0].mxu0
    %1749 = vdwg.mxu0
    %v1750 = vmul.f32 %v1712, %v1235
    %v1751 = vmul.f32 %v1717, %v1240
    %v1752 = vmul.f32 %v1722, %v1245
    %v1753 = vmul.f32 %v1727, %v1250
    %v1754 = vmul.f32 %v1732, %v1255
    %v1755 = vmul.f32 %v1737, %v1260
    %v1756 = vmul.f32 %v1742, %v1265
    %v1757 = vmul.f32 %v1747, %v1270
    %v1758 = vadd.f32 %v1750, %v1290
    %v1759 = vadd.f32 %v1751, %v1294
    %v1760 = vadd.f32 %v1752, %v1298
    %v1761 = vadd.f32 %v1753, %v1302
    %v1762 = vadd.f32 %v1754, %v1306
    %v1763 = vadd.f32 %v1755, %v1310
    %v1764 = vadd.f32 %v1756, %v1314
    %v1765 = vadd.f32 %v1757, %v1318
    %v1766 = vmul.f32 %v1055, %v1352
    %v1767 = vmul.f32 %v1057, %v1353
    %v1768 = vmul.f32 %v1059, %v1354
    %v1769 = vmul.f32 %v1061, %v1355
    %v1770 = vmul.f32 %v1063, %v1356
    %v1771 = vmul.f32 %v1065, %v1357
    %v1772 = vmul.f32 %v1067, %v1358
    %v1773 = vmul.f32 %v1069, %v1359
    %v1774 = vsel %vm180, %v1766, 0.0
    %v1775 = vsel %vm180, %v1767, 0.0
    %v1776 = vadd.f32 %v1774, %v1775
    %v1777 = vsel %vm180, %v1768, 0.0
    %v1778 = vadd.f32 %v1776, %v1777
    %v1779 = vsel %vm180, %v1769, 0.0
    %v1780 = vadd.f32 %v1778, %v1779
    %v1781 = vsel %vm180, %v1770, 0.0
    %v1782 = vadd.f32 %v1780, %v1781
    %v1783 = vsel %vm180, %v1771, 0.0
    %v1784 = vadd.f32 %v1782, %v1783
    %v1785 = vsel %vm180, %v1772, 0.0
    %v1786 = vadd.f32 %v1784, %v1785
    %v1787 = vsel %vm180, %v1773, 0.0
    %v1788 = vadd.f32 %v1786, %v1787
    %v1789 = vrot.slane %v1788, 4
    %v1790 = vadd.f32 %v1788, %v1789
    %v1791 = vrot.slane %v1790, 2
    %v1792 = vadd.f32 %v1790, %v1791
    %v1793 = vrot.slane %v1792, 1
    %v1794 = vadd.f32 %v1792, %v1793
    %v1796 = vsel %vm180, %v1794, 0
    %1798 = vmatprep.subr.mxu0 0.0
    %1799 = vmatpush1.msra.mxu0 %v1418
    %1800 = vmatprep.subr.mxu0 0.0
    %1801 = vmatpush1.msra.mxu0 %v1419
    %1802 = vmatprep.subr.mxu0 0.0
    %1803 = vmatpush1.msra.mxu0 0.0
    %1804 = vmatprep.subr.mxu0 0.0
    %1805 = vmatpush1.msra.mxu0 0.0
    %1806 = vmatprep.subr.mxu0 0.0
    %1807 = vmatpush1.msra.mxu0 0.0
    %1808 = vmatprep.subr.mxu0 0.0
    %1809 = vmatpush1.msra.mxu0 0.0
    %1810 = vmatprep.subr.mxu0 0.0
    %1811 = vmatpush1.msra.mxu0 0.0
    %1812 = vmatprep.subr.mxu0 0.0
    %1813 = vmatpush1.msra.mxu0 0.0
    %1814 = vmatprep.subr.mxu0 0.0
    %1815 = vmatpush1.msra.mxu0 0.0
    %1816 = vmatprep.subr.mxu0 0.0
    %1817 = vmatpush1.msra.mxu0 0.0
    %1818 = vmatprep.subr.mxu0 0.0
    %1819 = vmatpush1.msra.mxu0 0.0
    %1820 = vmatprep.subr.mxu0 0.0
    %1821 = vmatpush1.msra.mxu0 0.0
    %1822 = vmatprep.subr.mxu0 0.0
    %1823 = vmatpush1.msra.mxu0 0.0
    %1824 = vmatprep.subr.mxu0 0.0
    %1825 = vmatpush1.msra.mxu0 0.0
    %1826 = vmatprep.subr.mxu0 0.0
    %1827 = vmatpush1.msra.mxu0 0.0
    %1828 = vmatprep.subr.mxu0 0.0
    %1829 = vmatpush1.msra.mxu0 0.0
    %1830 = vmatprep.subr.mxu0 0.0
    %1831 = vmatpush1.msra.mxu0 0.0
    %1832 = vmatprep.subr.mxu0 0.0
    %1833 = vmatpush1.msra.mxu0 0.0
    %1834 = vmatprep.subr.mxu0 0.0
    %1835 = vmatpush1.msra.mxu0 0.0
    %1836 = vmatprep.subr.mxu0 0.0
    %1837 = vmatpush1.msra.mxu0 0.0
    %1838 = vmatprep.subr.mxu0 0.0
    %1839 = vmatpush1.msra.mxu0 0.0
    %1840 = vmatprep.subr.mxu0 0.0
    %1841 = vmatpush1.msra.mxu0 0.0
    %1842 = vmatprep.subr.mxu0 0.0
    %1843 = vmatpush1.msra.mxu0 0.0
    %1844 = vmatprep.subr.mxu0 0.0
    %1845 = vmatpush1.msra.mxu0 0.0
    %1846 = vmatprep.subr.mxu0 0.0
    %1847 = vmatpush1.msra.mxu0 0.0
    %1848 = vmatprep.subr.mxu0 0.0
    %1849 = vmatpush1.msra.mxu0 0.0
    %1850 = vmatprep.subr.mxu0 0.0
    %1851 = vmatpush1.msra.mxu0 0.0
    %1852 = vmatprep.subr.mxu0 0.0
    %1853 = vmatpush1.msra.mxu0 0.0
    %1854 = vmatprep.subr.mxu0 0.0
    %1855 = vmatpush1.msra.mxu0 0.0
    %1856 = vmatprep.subr.mxu0 0.0
    %1857 = vmatpush1.msra.mxu0 0.0
    %1858 = vmatprep.subr.mxu0 0.0
    %1859 = vmatpush1.msra.mxu0 0.0
    %1860 = vmatprep.subr.mxu0 0.0
    %1861 = vmatpush1.msra.mxu0 0.0
    %1862 = vmatprep.mubr.f32.mxu0 0.0
    %1863 = vmatmul.mubr.f32.gmra.mrb[0].mxu0 %v1796
    %v1864 = vpop.f32.mrb[0].mxu0
    %v1865 = vadd.f32 0.0, %v1864
    %v1866 = vpop.f32.mrb[0].mxu0
    %1867 = vdwg.mxu0
    %v1868 = vmax.f32 %v1865, 0.0
    %v1870 = vsel %vm1500, %v1868, 0
    %1872 = vmatprep.subr.mxu0 %v1507
    %1873 = vmatpush1.msra.mxu0 %v1505
    %1874 = vmatprep.subr.mxu0 0.0
    %1875 = vmatpush1.msra.mxu0 0.0
    %1876 = vmatprep.subr.mxu0 0.0
    %1877 = vmatpush1.msra.mxu0 0.0
    %1878 = vmatprep.subr.mxu0 0.0
    %1879 = vmatpush1.msra.mxu0 0.0
    %1880 = vmatprep.subr.mxu0 0.0
    %1881 = vmatpush1.msra.mxu0 0.0
    %1882 = vmatprep.subr.mxu0 0.0
    %1883 = vmatpush1.msra.mxu0 0.0
    %1884 = vmatprep.subr.mxu0 0.0
    %1885 = vmatpush1.msra.mxu0 0.0
    %1886 = vmatprep.subr.mxu0 0.0
    %1887 = vmatpush1.msra.mxu0 0.0
    %1888 = vmatprep.subr.mxu0 0.0
    %1889 = vmatpush1.msra.mxu0 0.0
    %1890 = vmatprep.subr.mxu0 0.0
    %1891 = vmatpush1.msra.mxu0 0.0
    %1892 = vmatprep.subr.mxu0 0.0
    %1893 = vmatpush1.msra.mxu0 0.0
    %1894 = vmatprep.subr.mxu0 0.0
    %1895 = vmatpush1.msra.mxu0 0.0
    %1896 = vmatprep.subr.mxu0 0.0
    %1897 = vmatpush1.msra.mxu0 0.0
    %1898 = vmatprep.subr.mxu0 0.0
    %1899 = vmatpush1.msra.mxu0 0.0
    %1900 = vmatprep.subr.mxu0 0.0
    %1901 = vmatpush1.msra.mxu0 0.0
    %1902 = vmatprep.subr.mxu0 0.0
    %1903 = vmatpush1.msra.mxu0 0.0
    %1904 = vmatprep.subr.mxu0 0.0
    %1905 = vmatpush1.msra.mxu0 0.0
    %1906 = vmatprep.subr.mxu0 0.0
    %1907 = vmatpush1.msra.mxu0 0.0
    %1908 = vmatprep.subr.mxu0 0.0
    %1909 = vmatpush1.msra.mxu0 0.0
    %1910 = vmatprep.subr.mxu0 0.0
    %1911 = vmatpush1.msra.mxu0 0.0
    %1912 = vmatprep.subr.mxu0 0.0
    %1913 = vmatpush1.msra.mxu0 0.0
    %1914 = vmatprep.subr.mxu0 0.0
    %1915 = vmatpush1.msra.mxu0 0.0
    %1916 = vmatprep.subr.mxu0 0.0
    %1917 = vmatpush1.msra.mxu0 0.0
    %1918 = vmatprep.subr.mxu0 0.0
    %1919 = vmatpush1.msra.mxu0 0.0
    %1920 = vmatprep.subr.mxu0 0.0
    %1921 = vmatpush1.msra.mxu0 0.0
    %1922 = vmatprep.subr.mxu0 0.0
    %1923 = vmatpush1.msra.mxu0 0.0
    %1924 = vmatprep.subr.mxu0 0.0
    %1925 = vmatpush1.msra.mxu0 0.0
    %1926 = vmatprep.subr.mxu0 0.0
    %1927 = vmatpush1.msra.mxu0 0.0
    %1928 = vmatprep.subr.mxu0 0.0
    %1929 = vmatpush1.msra.mxu0 0.0
    %1930 = vmatprep.subr.mxu0 0.0
    %1931 = vmatpush1.msra.mxu0 0.0
    %1932 = vmatprep.subr.mxu0 0.0
    %1933 = vmatpush1.msra.mxu0 0.0
    %1934 = vmatprep.subr.mxu0 0.0
    %1935 = vmatpush1.msra.mxu0 0.0
    %1936 = vmatprep.mubr.f32.mxu0 0.0
    %1937 = vmatmul.mubr.f32.gmra.mrb[0].mxu0 %v1870
    %v1938 = vpop.f32.mrb[0].mxu0
    %v1939 = vadd.f32 0.0, %v1938
    %v1940 = vpop.f32.mrb[0].mxu0
    %v1941 = vadd.f32 0.0, %v1940
    %1942 = vdwg.mxu0
    %v1943 = vxor.u32 %v1939, 2147483648
    %v1944 = vxor.u32 %v1941, 2147483648
    %v1945 = vmul.f32 %v1943, 1.442695
    %v1946 = vpow.pop %v1945
    %v1947 = vmul.f32 %v1944, 1.442695
    %v1948 = vpow.pop %v1947
    %v1949 = vadd.f32 %v1946, 1.0
    %v1950 = vadd.f32 %v1948, 1.0
    %v1951 = vrcp.pop %v1949
    %v1952 = vmul.f32 1.0, %v1951
    %v1953 = vrcp.pop %v1950
    %v1954 = vmul.f32 1.0, %v1953
    %v1955 = vmul.f32 %v1952, %v1597
    %v1956 = vmul.f32 %v1954, %v1601
    %v1957 = vadd.f32 %v1955, %v1612
    %v1958 = vadd.f32 %v1956, %v1616
    %vm1959 = vcmask 72704
    %1960 = vst.msk [vmem:[%s17] sm:$0xff] %vm1959, %v1758
    %1961 = vst.msk [vmem:[%s17 + $0x8] sm:$0xff] %vm1959, %v1759
    %1962 = vst.msk [vmem:[%s17 + $0x10] sm:$0xff] %vm1959, %v1760
    %1963 = vst.msk [vmem:[%s17 + $0x18] sm:$0xff] %vm1959, %v1761
    %1964 = vst.msk [vmem:[%s17 + $0x20] sm:$0xff] %vm1959, %v1762
    %1965 = vst.msk [vmem:[%s17 + $0x28] sm:$0xff] %vm1959, %v1763
    %1966 = vst.msk [vmem:[%s17 + $0x30] sm:$0xff] %vm1959, %v1764
    %1967 = vst.msk [vmem:[%s17 + $0x38] sm:$0xff] %vm1959, %v1765
    %v1970 = vcombine.low %v1957, %v1958
    %v1972 = vunpack.c.l.s4 1966171168
    %v1973 = vunpack.c.0.s8 %v1972
    %v1974 = vlaneseq
    %v1975 = vshrl.u32 %v1974, 7
    %v1976 = vsub.s32 %v1973, %v1975
    %v1977 = vrot.slane %v1970, %v1976
    %v1979 = vunpack.c.l.s4 1966171168
    %v1980 = vunpack.c.0.s8 %v1979
    %v1981 = vlaneseq
    %v1982 = vshrl.u32 %v1981, 7
    %v1983 = vsub.s32 %v1980, %v1982
    %v1984 = vrot.slane %v1977, %v1983
    %v1986 = vlaneseq
    %vm1987 = vcmp.ge.s32.totalorder %v1986, 0
    %vm1988 = vcmp.lt.s32.totalorder %v1986, 144
    %vm1989 = vmand %vm1987, %vm1988
    %1990 = vst.msk [vmem:[%s18] sm:$0x3] %vm1989, %v1984
    %v1991 = vmul.f32 %v1320, %v1758
    %v1992 = vmul.f32 %v1321, %v1759
    %v1993 = vmul.f32 %v1322, %v1760
    %v1994 = vmul.f32 %v1323, %v1761
    %v1995 = vmul.f32 %v1324, %v1762
    %v1996 = vmul.f32 %v1325, %v1763
    %v1997 = vmul.f32 %v1326, %v1764
    %v1998 = vmul.f32 %v1327, %v1765
    %v1999 = vmul.f32 %v1328, %v1758
    %v2000 = vmul.f32 %v1329, %v1759
    %v2001 = vmul.f32 %v1330, %v1760
    %v2002 = vmul.f32 %v1331, %v1761
    %v2003 = vmul.f32 %v1332, %v1762
    %v2004 = vmul.f32 %v1333, %v1763
    %v2005 = vmul.f32 %v1334, %v1764
    %v2006 = vmul.f32 %v1335, %v1765
    %v2007 = vlaneseq
    %v2008 = vshrl.u32 %v2007, 7
    %v2009 = vsub.s32 0, %v2008
    %v2010 = vrot.slane %v1957, %v2009
    %v2011 = vlaneseq
    %v2012 = vshrl.u32 %v2011, 7
    %v2013 = vsub.s32 0, %v2012
    %v2014 = vrot.slane %v1958, %v2013
    %v2015 = vmul.f32 %v1619, %v2010
    %v2016 = vmul.f32 %v1620, %v2014
    %v2019 = vunpack.c.l.s4 1966171168
    %v2020 = vunpack.c.0.s8 %v2019
    %v2021 = vlaneseq
    %v2022 = vshrl.u32 %v2021, 7
    %v2023 = vsub.s32 %v2020, %v2022
    %v2024 = vrot.slane %v2015, %v2023
    %v2025 = vcombine.high %v2024, %v2024
    %v2027 = vunpack.c.l.s4 1966171168
    %v2028 = vunpack.c.0.s8 %v2027
    %v2029 = vlaneseq
    %v2030 = vshrl.u32 %v2029, 7
    %v2031 = vsub.s32 %v2028, %v2030
    %v2032 = vrot.slane %v2024, %v2031
    %v2034 = vunpack.c.l.s4 1966171168
    %v2035 = vunpack.c.0.s8 %v2034
    %v2036 = vlaneseq
    %v2037 = vshrl.u32 %v2036, 7
    %v2038 = vsub.s32 %v2035, %v2037
    %v2039 = vrot.slane %v2025, %v2038
    %2041 = vset.pattern.permute.xlu0 0
    %2042 = vperm.xlu0 %2041, %v1991
    %v2043 = vpop.permute.xlu0 %2042
    %2046 = vset.pattern.permute.xlu0 0
    %2047 = vperm.xlu0 %2046, %v1992
    %v2048 = vpop.permute.xlu0 %2047
    %2051 = vset.pattern.permute.xlu0 0
    %2052 = vperm.xlu0 %2051, %v1993
    %v2053 = vpop.permute.xlu0 %2052
    %2056 = vset.pattern.permute.xlu0 0
    %2057 = vperm.xlu0 %2056, %v1994
    %v2058 = vpop.permute.xlu0 %2057
    %2061 = vset.pattern.permute.xlu0 0
    %2062 = vperm.xlu0 %2061, %v1995
    %v2063 = vpop.permute.xlu0 %2062
    %2066 = vset.pattern.permute.xlu0 0
    %2067 = vperm.xlu0 %2066, %v1996
    %v2068 = vpop.permute.xlu0 %2067
    %2071 = vset.pattern.permute.xlu0 0
    %2072 = vperm.xlu0 %2071, %v1997
    %v2073 = vpop.permute.xlu0 %2072
    %2076 = vset.pattern.permute.xlu0 0
    %2077 = vperm.xlu0 %2076, %v1998
    %v2078 = vpop.permute.xlu0 %2077
    %2081 = vset.pattern.permute.xlu0 0
    %2082 = vperm.xlu0 %2081, %v1999
    %v2083 = vpop.permute.xlu0 %2082
    %2086 = vset.pattern.permute.xlu0 0
    %2087 = vperm.xlu0 %2086, %v2000
    %v2088 = vpop.permute.xlu0 %2087
    %2091 = vset.pattern.permute.xlu0 0
    %2092 = vperm.xlu0 %2091, %v2001
    %v2093 = vpop.permute.xlu0 %2092
    %2096 = vset.pattern.permute.xlu0 0
    %2097 = vperm.xlu0 %2096, %v2002
    %v2098 = vpop.permute.xlu0 %2097
    %2101 = vset.pattern.permute.xlu0 0
    %2102 = vperm.xlu0 %2101, %v2003
    %v2103 = vpop.permute.xlu0 %2102
    %2106 = vset.pattern.permute.xlu0 0
    %2107 = vperm.xlu0 %2106, %v2004
    %v2108 = vpop.permute.xlu0 %2107
    %2111 = vset.pattern.permute.xlu0 0
    %2112 = vperm.xlu0 %2111, %v2005
    %v2113 = vpop.permute.xlu0 %2112
    %2116 = vset.pattern.permute.xlu0 0
    %2117 = vperm.xlu0 %2116, %v2006
    %v2118 = vpop.permute.xlu0 %2117
    %v2120 = vmul.f32 %v57, %v2043
    %v2121 = vmul.f32 %v59, %v2048
    %v2122 = vmul.f32 %v61, %v2053
    %v2123 = vmul.f32 %v63, %v2058
    %v2124 = vmul.f32 %v65, %v2063
    %v2125 = vmul.f32 %v67, %v2068
    %v2126 = vmul.f32 %v69, %v2073
    %v2127 = vmul.f32 %v71, %v2078
    %v2128 = vmul.f32 %v77, %v2083
    %v2129 = vmul.f32 %v79, %v2088
    %v2130 = vmul.f32 %v81, %v2093
    %v2131 = vmul.f32 %v83, %v2098
    %v2132 = vmul.f32 %v85, %v2103
    %v2133 = vmul.f32 %v87, %v2108
    %v2134 = vmul.f32 %v89, %v2113
    %v2135 = vmul.f32 %v91, %v2118
    %v2136 = vlaneseq
    %v2137 = vshrl.u32 %v2136, 7
    %v2138 = vsub.s32 0, %v2137
    %v2139 = vrot.slane %v2032, %v2138
    %v2140 = vlaneseq
    %v2141 = vshrl.u32 %v2140, 7
    %v2142 = vsub.s32 0, %v2141
    %v2143 = vrot.slane %v2039, %v2142
    %v2146 = vmul.f32 %v2120, %v2139
    %v2147 = vmul.f32 %v2121, %v2139
    %v2148 = vmul.f32 %v2122, %v2139
    %v2149 = vmul.f32 %v2123, %v2139
    %v2150 = vmul.f32 %v2124, %v2139
    %v2151 = vmul.f32 %v2125, %v2139
    %v2152 = vmul.f32 %v2126, %v2139
    %v2153 = vmul.f32 %v2127, %v2139
    %v2154 = vmul.f32 %v2128, %v2143
    %v2155 = vmul.f32 %v2129, %v2143
    %v2156 = vmul.f32 %v2130, %v2143
    %v2157 = vmul.f32 %v2131, %v2143
    %v2158 = vmul.f32 %v2132, %v2143
    %v2159 = vmul.f32 %v2133, %v2143
    %v2160 = vmul.f32 %v2134, %v2143
    %v2161 = vmul.f32 %v2135, %v2143
    %v2162 = vadd.f32 %v2146, 0.0
    %v2163 = vadd.f32 %v2147, 0.0
    %v2164 = vadd.f32 %v2148, 0.0
    %v2165 = vadd.f32 %v2149, 0.0
    %v2166 = vadd.f32 %v2150, 0.0
    %v2167 = vadd.f32 %v2151, 0.0
    %v2168 = vadd.f32 %v2152, 0.0
    %v2169 = vadd.f32 %v2153, 0.0
    %v2170 = vadd.f32 %v2154, 0.0
    %v2171 = vadd.f32 %v2155, 0.0
    %v2172 = vadd.f32 %v2156, 0.0
    %v2173 = vadd.f32 %v2157, 0.0
    %v2174 = vadd.f32 %v2158, 0.0
    %v2175 = vadd.f32 %v2159, 0.0
    %v2176 = vadd.f32 %v2160, 0.0
    %v2177 = vadd.f32 %v2161, 0.0
    %2178 = vset.pattern.permute.xlu0 1
    %2179 = vperm.xlu0 %2178, %v1991
    %v2180 = vpop.permute.xlu0 %2179
    %2181 = vset.pattern.permute.xlu0 1
    %2182 = vperm.xlu0 %2181, %v1992
    %v2183 = vpop.permute.xlu0 %2182
    %2184 = vset.pattern.permute.xlu0 1
    %2185 = vperm.xlu0 %2184, %v1993
    %v2186 = vpop.permute.xlu0 %2185
    %2187 = vset.pattern.permute.xlu0 1
    %2188 = vperm.xlu0 %2187, %v1994
    %v2189 = vpop.permute.xlu0 %2188
    %2190 = vset.pattern.permute.xlu0 1
    %2191 = vperm.xlu0 %2190, %v1995
    %v2192 = vpop.permute.xlu0 %2191
    %2193 = vset.pattern.permute.xlu0 1
    %2194 = vperm.xlu0 %2193, %v1996
    %v2195 = vpop.permute.xlu0 %2194
    %2196 = vset.pattern.permute.xlu0 1
    %2197 = vperm.xlu0 %2196, %v1997
    %v2198 = vpop.permute.xlu0 %2197
    %2199 = vset.pattern.permute.xlu0 1
    %2200 = vperm.xlu0 %2199, %v1998
    %v2201 = vpop.permute.xlu0 %2200
    %2202 = vset.pattern.permute.xlu0 1
    %2203 = vperm.xlu0 %2202, %v1999
    %v2204 = vpop.permute.xlu0 %2203
    %2205 = vset.pattern.permute.xlu0 1
    %2206 = vperm.xlu0 %2205, %v2000
    %v2207 = vpop.permute.xlu0 %2206
    %2208 = vset.pattern.permute.xlu0 1
    %2209 = vperm.xlu0 %2208, %v2001
    %v2210 = vpop.permute.xlu0 %2209
    %2211 = vset.pattern.permute.xlu0 1
    %2212 = vperm.xlu0 %2211, %v2002
    %v2213 = vpop.permute.xlu0 %2212
    %2214 = vset.pattern.permute.xlu0 1
    %2215 = vperm.xlu0 %2214, %v2003
    %v2216 = vpop.permute.xlu0 %2215
    %2217 = vset.pattern.permute.xlu0 1
    %2218 = vperm.xlu0 %2217, %v2004
    %v2219 = vpop.permute.xlu0 %2218
    %2220 = vset.pattern.permute.xlu0 1
    %2221 = vperm.xlu0 %2220, %v2005
    %v2222 = vpop.permute.xlu0 %2221
    %2223 = vset.pattern.permute.xlu0 1
    %2224 = vperm.xlu0 %2223, %v2006
    %v2225 = vpop.permute.xlu0 %2224
    %v2226 = vrot.slane %v2180, 7
    %v2227 = vrot.slane %v2183, 7
    %v2228 = vrot.slane %v2186, 7
    %v2229 = vrot.slane %v2189, 7
    %v2230 = vrot.slane %v2192, 7
    %v2231 = vrot.slane %v2195, 7
    %v2232 = vrot.slane %v2198, 7
    %v2233 = vrot.slane %v2201, 7
    %v2234 = vrot.slane %v2204, 7
    %v2235 = vrot.slane %v2207, 7
    %v2236 = vrot.slane %v2210, 7
    %v2237 = vrot.slane %v2213, 7
    %v2238 = vrot.slane %v2216, 7
    %v2239 = vrot.slane %v2219, 7
    %v2240 = vrot.slane %v2222, 7
    %v2241 = vrot.slane %v2225, 7
    %v2258 = vmul.f32 %v57, %v2226
    %v2259 = vmul.f32 %v58, %v2226
    %v2260 = vmul.f32 %v59, %v2227
    %v2261 = vmul.f32 %v60, %v2227
    %v2262 = vmul.f32 %v61, %v2228
    %v2263 = vmul.f32 %v62, %v2228
    %v2264 = vmul.f32 %v63, %v2229
    %v2265 = vmul.f32 %v64, %v2229
    %v2266 = vmul.f32 %v65, %v2230
    %v2267 = vmul.f32 %v66, %v2230
    %v2268 = vmul.f32 %v67, %v2231
    %v2269 = vmul.f32 %v68, %v2231
    %v2270 = vmul.f32 %v69, %v2232
    %v2271 = vmul.f32 %v70, %v2232
    %v2272 = vmul.f32 %v71, %v2233
    %v2273 = vmul.f32 %v72, %v2233
    %v2274 = vmul.f32 %v77, %v2234
    %v2275 = vmul.f32 %v78, %v2234
    %v2276 = vmul.f32 %v79, %v2235
    %v2277 = vmul.f32 %v80, %v2235
    %v2278 = vmul.f32 %v81, %v2236
    %v2279 = vmul.f32 %v82, %v2236
    %v2280 = vmul.f32 %v83, %v2237
    %v2281 = vmul.f32 %v84, %v2237
    %v2282 = vmul.f32 %v85, %v2238
    %v2283 = vmul.f32 %v86, %v2238
    %v2284 = vmul.f32 %v87, %v2239
    %v2285 = vmul.f32 %v88, %v2239
    %v2286 = vmul.f32 %v89, %v2240
    %v2287 = vmul.f32 %v90, %v2240
    %v2288 = vmul.f32 %v91, %v2241
    %v2289 = vmul.f32 %v92, %v2241
    %2290 = vrot.lane.b32.xlu0 %v2139, 112
    %v2291 = vpop.permute.xlu0 %2290
    %2292 = vrot.lane.b32.xlu0 %v2143, 112
    %v2293 = vpop.permute.xlu0 %2292
    %v2296 = vmul.f32 %v2258, %v2291
    %v2297 = vmul.f32 %v2259, %v2291
    %v2298 = vmul.f32 %v2260, %v2291
    %v2299 = vmul.f32 %v2261, %v2291
    %v2300 = vmul.f32 %v2262, %v2291
    %v2301 = vmul.f32 %v2263, %v2291
    %v2302 = vmul.f32 %v2264, %v2291
    %v2303 = vmul.f32 %v2265, %v2291
    %v2304 = vmul.f32 %v2266, %v2291
    %v2305 = vmul.f32 %v2267, %v2291
    %v2306 = vmul.f32 %v2268, %v2291
    %v2307 = vmul.f32 %v2269, %v2291
    %v2308 = vmul.f32 %v2270, %v2291
    %v2309 = vmul.f32 %v2271, %v2291
    %v2310 = vmul.f32 %v2272, %v2291
    %v2311 = vmul.f32 %v2273, %v2291
    %v2312 = vmul.f32 %v2274, %v2293
    %v2313 = vmul.f32 %v2275, %v2293
    %v2314 = vmul.f32 %v2276, %v2293
    %v2315 = vmul.f32 %v2277, %v2293
    %v2316 = vmul.f32 %v2278, %v2293
    %v2317 = vmul.f32 %v2279, %v2293
    %v2318 = vmul.f32 %v2280, %v2293
    %v2319 = vmul.f32 %v2281, %v2293
    %v2320 = vmul.f32 %v2282, %v2293
    %v2321 = vmul.f32 %v2283, %v2293
    %v2322 = vmul.f32 %v2284, %v2293
    %v2323 = vmul.f32 %v2285, %v2293
    %v2324 = vmul.f32 %v2286, %v2293
    %v2325 = vmul.f32 %v2287, %v2293
    %v2326 = vmul.f32 %v2288, %v2293
    %v2327 = vmul.f32 %v2289, %v2293
    %v2360 = vrot.slane %v2296, 1
    %v2361 = vrot.slane %v2297, 1
    %v2362 = vsel %vm129, %v2360, %v2361
    %v2363 = vrot.slane %v2298, 1
    %v2364 = vrot.slane %v2299, 1
    %v2365 = vsel %vm129, %v2363, %v2364
    %v2366 = vrot.slane %v2300, 1
    %v2367 = vrot.slane %v2301, 1
    %v2368 = vsel %vm129, %v2366, %v2367
    %v2369 = vrot.slane %v2302, 1
    %v2370 = vrot.slane %v2303, 1
    %v2371 = vsel %vm129, %v2369, %v2370
    %v2372 = vrot.slane %v2304, 1
    %v2373 = vrot.slane %v2305, 1
    %v2374 = vsel %vm129, %v2372, %v2373
    %v2375 = vrot.slane %v2306, 1
    %v2376 = vrot.slane %v2307, 1
    %v2377 = vsel %vm129, %v2375, %v2376
    %v2378 = vrot.slane %v2308, 1
    %v2379 = vrot.slane %v2309, 1
    %v2380 = vsel %vm129, %v2378, %v2379
    %v2381 = vrot.slane %v2310, 1
    %v2382 = vrot.slane %v2311, 1
    %v2383 = vsel %vm129, %v2381, %v2382
    %v2384 = vrot.slane %v2312, 1
    %v2385 = vrot.slane %v2313, 1
    %v2386 = vsel %vm129, %v2384, %v2385
    %v2387 = vrot.slane %v2314, 1
    %v2388 = vrot.slane %v2315, 1
    %v2389 = vsel %vm129, %v2387, %v2388
    %v2390 = vrot.slane %v2316, 1
    %v2391 = vrot.slane %v2317, 1
    %v2392 = vsel %vm129, %v2390, %v2391
    %v2393 = vrot.slane %v2318, 1
    %v2394 = vrot.slane %v2319, 1
    %v2395 = vsel %vm129, %v2393, %v2394
    %v2396 = vrot.slane %v2320, 1
    %v2397 = vrot.slane %v2321, 1
    %v2398 = vsel %vm129, %v2396, %v2397
    %v2399 = vrot.slane %v2322, 1
    %v2400 = vrot.slane %v2323, 1
    %v2401 = vsel %vm129, %v2399, %v2400
    %v2402 = vrot.slane %v2324, 1
    %v2403 = vrot.slane %v2325, 1
    %v2404 = vsel %vm129, %v2402, %v2403
    %v2405 = vrot.slane %v2326, 1
    %v2406 = vrot.slane %v2327, 1
    %v2407 = vsel %vm129, %v2405, %v2406
    %v2424 = vadd.f32 %v2162, %v2362
    %v2425 = vadd.f32 %v2163, %v2365
    %v2426 = vadd.f32 %v2164, %v2368
    %v2427 = vadd.f32 %v2165, %v2371
    %v2428 = vadd.f32 %v2166, %v2374
    %v2429 = vadd.f32 %v2167, %v2377
    %v2430 = vadd.f32 %v2168, %v2380
    %v2431 = vadd.f32 %v2169, %v2383
    %v2432 = vadd.f32 %v2170, %v2386
    %v2433 = vadd.f32 %v2171, %v2389
    %v2434 = vadd.f32 %v2172, %v2392
    %v2435 = vadd.f32 %v2173, %v2395
    %v2436 = vadd.f32 %v2174, %v2398
    %v2437 = vadd.f32 %v2175, %v2401
    %v2438 = vadd.f32 %v2176, %v2404
    %v2439 = vadd.f32 %v2177, %v2407
    %2440 = vset.pattern.permute.xlu0 2
    %2441 = vperm.xlu0 %2440, %v1991
    %v2442 = vpop.permute.xlu0 %2441
    %2443 = vset.pattern.permute.xlu0 2
    %2444 = vperm.xlu0 %2443, %v1992
    %v2445 = vpop.permute.xlu0 %2444
    %2446 = vset.pattern.permute.xlu0 2
    %2447 = vperm.xlu0 %2446, %v1993
    %v2448 = vpop.permute.xlu0 %2447
    %2449 = vset.pattern.permute.xlu0 2
    %2450 = vperm.xlu0 %2449, %v1994
    %v2451 = vpop.permute.xlu0 %2450
    %2452 = vset.pattern.permute.xlu0 2
    %2453 = vperm.xlu0 %2452, %v1995
    %v2454 = vpop.permute.xlu0 %2453
    %2455 = vset.pattern.permute.xlu0 2
    %2456 = vperm.xlu0 %2455, %v1996
    %v2457 = vpop.permute.xlu0 %2456
    %2458 = vset.pattern.permute.xlu0 2
    %2459 = vperm.xlu0 %2458, %v1997
    %v2460 = vpop.permute.xlu0 %2459
    %2461 = vset.pattern.permute.xlu0 2
    %2462 = vperm.xlu0 %2461, %v1998
    %v2463 = vpop.permute.xlu0 %2462
    %2464 = vset.pattern.permute.xlu0 2
    %2465 = vperm.xlu0 %2464, %v1999
    %v2466 = vpop.permute.xlu0 %2465
    %2467 = vset.pattern.permute.xlu0 2
    %2468 = vperm.xlu0 %2467, %v2000
    %v2469 = vpop.permute.xlu0 %2468
    %2470 = vset.pattern.permute.xlu0 2
    %2471 = vperm.xlu0 %2470, %v2001
    %v2472 = vpop.permute.xlu0 %2471
    %2473 = vset.pattern.permute.xlu0 2
    %2474 = vperm.xlu0 %2473, %v2002
    %v2475 = vpop.permute.xlu0 %2474
    %2476 = vset.pattern.permute.xlu0 2
    %2477 = vperm.xlu0 %2476, %v2003
    %v2478 = vpop.permute.xlu0 %2477
    %2479 = vset.pattern.permute.xlu0 2
    %2480 = vperm.xlu0 %2479, %v2004
    %v2481 = vpop.permute.xlu0 %2480
    %2482 = vset.pattern.permute.xlu0 2
    %2483 = vperm.xlu0 %2482, %v2005
    %v2484 = vpop.permute.xlu0 %2483
    %2485 = vset.pattern.permute.xlu0 2
    %2486 = vperm.xlu0 %2485, %v2006
    %v2487 = vpop.permute.xlu0 %2486
    %v2488 = vrot.slane %v2442, 6
    %v2489 = vrot.slane %v2445, 6
    %v2490 = vrot.slane %v2448, 6
    %v2491 = vrot.slane %v2451, 6
    %v2492 = vrot.slane %v2454, 6
    %v2493 = vrot.slane %v2457, 6
    %v2494 = vrot.slane %v2460, 6
    %v2495 = vrot.slane %v2463, 6
    %v2496 = vrot.slane %v2466, 6
    %v2497 = vrot.slane %v2469, 6
    %v2498 = vrot.slane %v2472, 6
    %v2499 = vrot.slane %v2475, 6
    %v2500 = vrot.slane %v2478, 6
    %v2501 = vrot.slane %v2481, 6
    %v2502 = vrot.slane %v2484, 6
    %v2503 = vrot.slane %v2487, 6
    %v2520 = vmul.f32 %v57, %v2488
    %v2521 = vmul.f32 %v58, %v2488
    %v2522 = vmul.f32 %v59, %v2489
    %v2523 = vmul.f32 %v60, %v2489
    %v2524 = vmul.f32 %v61, %v2490
    %v2525 = vmul.f32 %v62, %v2490
    %v2526 = vmul.f32 %v63, %v2491
    %v2527 = vmul.f32 %v64, %v2491
    %v2528 = vmul.f32 %v65, %v2492
    %v2529 = vmul.f32 %v66, %v2492
    %v2530 = vmul.f32 %v67, %v2493
    %v2531 = vmul.f32 %v68, %v2493
    %v2532 = vmul.f32 %v69, %v2494
    %v2533 = vmul.f32 %v70, %v2494
    %v2534 = vmul.f32 %v71, %v2495
    %v2535 = vmul.f32 %v72, %v2495
    %v2536 = vmul.f32 %v77, %v2496
    %v2537 = vmul.f32 %v78, %v2496
    %v2538 = vmul.f32 %v79, %v2497
    %v2539 = vmul.f32 %v80, %v2497
    %v2540 = vmul.f32 %v81, %v2498
    %v2541 = vmul.f32 %v82, %v2498
    %v2542 = vmul.f32 %v83, %v2499
    %v2543 = vmul.f32 %v84, %v2499
    %v2544 = vmul.f32 %v85, %v2500
    %v2545 = vmul.f32 %v86, %v2500
    %v2546 = vmul.f32 %v87, %v2501
    %v2547 = vmul.f32 %v88, %v2501
    %v2548 = vmul.f32 %v89, %v2502
    %v2549 = vmul.f32 %v90, %v2502
    %v2550 = vmul.f32 %v91, %v2503
    %v2551 = vmul.f32 %v92, %v2503
    %2552 = vrot.lane.b32.xlu0 %v2139, 96
    %v2553 = vpop.permute.xlu0 %2552
    %2554 = vrot.lane.b32.xlu0 %v2143, 96
    %v2555 = vpop.permute.xlu0 %2554
    %v2558 = vmul.f32 %v2520, %v2553
    %v2559 = vmul.f32 %v2521, %v2553
    %v2560 = vmul.f32 %v2522, %v2553
    %v2561 = vmul.f32 %v2523, %v2553
    %v2562 = vmul.f32 %v2524, %v2553
    %v2563 = vmul.f32 %v2525, %v2553
    %v2564 = vmul.f32 %v2526, %v2553
    %v2565 = vmul.f32 %v2527, %v2553
    %v2566 = vmul.f32 %v2528, %v2553
    %v2567 = vmul.f32 %v2529, %v2553
    %v2568 = vmul.f32 %v2530, %v2553
    %v2569 = vmul.f32 %v2531, %v2553
    %v2570 = vmul.f32 %v2532, %v2553
    %v2571 = vmul.f32 %v2533, %v2553
    %v2572 = vmul.f32 %v2534, %v2553
    %v2573 = vmul.f32 %v2535, %v2553
    %v2574 = vmul.f32 %v2536, %v2555
    %v2575 = vmul.f32 %v2537, %v2555
    %v2576 = vmul.f32 %v2538, %v2555
    %v2577 = vmul.f32 %v2539, %v2555
    %v2578 = vmul.f32 %v2540, %v2555
    %v2579 = vmul.f32 %v2541, %v2555
    %v2580 = vmul.f32 %v2542, %v2555
    %v2581 = vmul.f32 %v2543, %v2555
    %v2582 = vmul.f32 %v2544, %v2555
    %v2583 = vmul.f32 %v2545, %v2555
    %v2584 = vmul.f32 %v2546, %v2555
    %v2585 = vmul.f32 %v2547, %v2555
    %v2586 = vmul.f32 %v2548, %v2555
    %v2587 = vmul.f32 %v2549, %v2555
    %v2588 = vmul.f32 %v2550, %v2555
    %v2589 = vmul.f32 %v2551, %v2555
    %vm2622 = vcmask 1045504
    %v2623 = vrot.slane %v2558, 2
    %v2624 = vrot.slane %v2559, 2
    %v2625 = vsel %vm2622, %v2623, %v2624
    %v2626 = vrot.slane %v2560, 2
    %v2627 = vrot.slane %v2561, 2
    %v2628 = vsel %vm2622, %v2626, %v2627
    %v2629 = vrot.slane %v2562, 2
    %v2630 = vrot.slane %v2563, 2
    %v2631 = vsel %vm2622, %v2629, %v2630
    %v2632 = vrot.slane %v2564, 2
    %v2633 = vrot.slane %v2565, 2
    %v2634 = vsel %vm2622, %v2632, %v2633
    %v2635 = vrot.slane %v2566, 2
    %v2636 = vrot.slane %v2567, 2
    %v2637 = vsel %vm2622, %v2635, %v2636
    %v2638 = vrot.slane %v2568, 2
    %v2639 = vrot.slane %v2569, 2
    %v2640 = vsel %vm2622, %v2638, %v2639
    %v2641 = vrot.slane %v2570, 2
    %v2642 = vrot.slane %v2571, 2
    %v2643 = vsel %vm2622, %v2641, %v2642
    %v2644 = vrot.slane %v2572, 2
    %v2645 = vrot.slane %v2573, 2
    %v2646 = vsel %vm2622, %v2644, %v2645
    %v2647 = vrot.slane %v2574, 2
    %v2648 = vrot.slane %v2575, 2
    %v2649 = vsel %vm2622, %v2647, %v2648
    %v2650 = vrot.slane %v2576, 2
    %v2651 = vrot.slane %v2577, 2
    %v2652 = vsel %vm2622, %v2650, %v2651
    %v2653 = vrot.slane %v2578, 2
    %v2654 = vrot.slane %v2579, 2
    %v2655 = vsel %vm2622, %v2653, %v2654
    %v2656 = vrot.slane %v2580, 2
    %v2657 = vrot.slane %v2581, 2
    %v2658 = vsel %vm2622, %v2656, %v2657
    %v2659 = vrot.slane %v2582, 2
    %v2660 = vrot.slane %v2583, 2
    %v2661 = vsel %vm2622, %v2659, %v2660
    %v2662 = vrot.slane %v2584, 2
    %v2663 = vrot.slane %v2585, 2
    %v2664 = vsel %vm2622, %v2662, %v2663
    %v2665 = vrot.slane %v2586, 2
    %v2666 = vrot.slane %v2587, 2
    %v2667 = vsel %vm2622, %v2665, %v2666
    %v2668 = vrot.slane %v2588, 2
    %v2669 = vrot.slane %v2589, 2
    %v2670 = vsel %vm2622, %v2668, %v2669
    %v2687 = vadd.f32 %v2424, %v2625
    %v2688 = vadd.f32 %v2425, %v2628
    %v2689 = vadd.f32 %v2426, %v2631
    %v2690 = vadd.f32 %v2427, %v2634
    %v2691 = vadd.f32 %v2428, %v2637
    %v2692 = vadd.f32 %v2429, %v2640
    %v2693 = vadd.f32 %v2430, %v2643
    %v2694 = vadd.f32 %v2431, %v2646
    %v2695 = vadd.f32 %v2432, %v2649
    %v2696 = vadd.f32 %v2433, %v2652
    %v2697 = vadd.f32 %v2434, %v2655
    %v2698 = vadd.f32 %v2435, %v2658
    %v2699 = vadd.f32 %v2436, %v2661
    %v2700 = vadd.f32 %v2437, %v2664
    %v2701 = vadd.f32 %v2438, %v2667
    %v2702 = vadd.f32 %v2439, %v2670
    %2703 = vset.pattern.permute.xlu0 3
    %2704 = vperm.xlu0 %2703, %v1991
    %v2705 = vpop.permute.xlu0 %2704
    %2707 = vset.pattern.permute.xlu0 3
    %2708 = vperm.xlu0 %2707, %v1992
    %v2709 = vpop.permute.xlu0 %2708
    %2711 = vset.pattern.permute.xlu0 3
    %2712 = vperm.xlu0 %2711, %v1993
    %v2713 = vpop.permute.xlu0 %2712
    %2715 = vset.pattern.permute.xlu0 3
    %2716 = vperm.xlu0 %2715, %v1994
    %v2717 = vpop.permute.xlu0 %2716
    %2719 = vset.pattern.permute.xlu0 3
    %2720 = vperm.xlu0 %2719, %v1995
    %v2721 = vpop.permute.xlu0 %2720
    %2723 = vset.pattern.permute.xlu0 3
    %2724 = vperm.xlu0 %2723, %v1996
    %v2725 = vpop.permute.xlu0 %2724
    %2727 = vset.pattern.permute.xlu0 3
    %2728 = vperm.xlu0 %2727, %v1997
    %v2729 = vpop.permute.xlu0 %2728
    %2731 = vset.pattern.permute.xlu0 3
    %2732 = vperm.xlu0 %2731, %v1998
    %v2733 = vpop.permute.xlu0 %2732
    %2735 = vset.pattern.permute.xlu0 3
    %2736 = vperm.xlu0 %2735, %v1999
    %v2737 = vpop.permute.xlu0 %2736
    %2739 = vset.pattern.permute.xlu0 3
    %2740 = vperm.xlu0 %2739, %v2000
    %v2741 = vpop.permute.xlu0 %2740
    %2743 = vset.pattern.permute.xlu0 3
    %2744 = vperm.xlu0 %2743, %v2001
    %v2745 = vpop.permute.xlu0 %2744
    %2747 = vset.pattern.permute.xlu0 3
    %2748 = vperm.xlu0 %2747, %v2002
    %v2749 = vpop.permute.xlu0 %2748
    %2751 = vset.pattern.permute.xlu0 3
    %2752 = vperm.xlu0 %2751, %v2003
    %v2753 = vpop.permute.xlu0 %2752
    %2755 = vset.pattern.permute.xlu0 3
    %2756 = vperm.xlu0 %2755, %v2004
    %v2757 = vpop.permute.xlu0 %2756
    %2759 = vset.pattern.permute.xlu0 3
    %2760 = vperm.xlu0 %2759, %v2005
    %v2761 = vpop.permute.xlu0 %2760
    %2763 = vset.pattern.permute.xlu0 3
    %2764 = vperm.xlu0 %2763, %v2006
    %v2765 = vpop.permute.xlu0 %2764
    %v2767 = vmul.f32 %v59, %v2705
    %v2768 = vmul.f32 %v61, %v2709
    %v2769 = vmul.f32 %v63, %v2713
    %v2770 = vmul.f32 %v65, %v2717
    %v2771 = vmul.f32 %v67, %v2721
    %v2772 = vmul.f32 %v69, %v2725
    %v2773 = vmul.f32 %v71, %v2729
    %v2774 = vmul.f32 %v73, %v2733
    %v2775 = vmul.f32 %v79, %v2737
    %v2776 = vmul.f32 %v81, %v2741
    %v2777 = vmul.f32 %v83, %v2745
    %v2778 = vmul.f32 %v85, %v2749
    %v2779 = vmul.f32 %v87, %v2753
    %v2780 = vmul.f32 %v89, %v2757
    %v2781 = vmul.f32 %v91, %v2761
    %v2782 = vmul.f32 %v93, %v2765
    %2783 = vrot.lane.b32.xlu0 %v2139, 80
    %v2784 = vpop.permute.xlu0 %2783
    %2785 = vrot.lane.b32.xlu0 %v2143, 80
    %v2786 = vpop.permute.xlu0 %2785
    %v2789 = vmul.f32 %v2767, %v2784
    %v2790 = vmul.f32 %v2768, %v2784
    %v2791 = vmul.f32 %v2769, %v2784
    %v2792 = vmul.f32 %v2770, %v2784
    %v2793 = vmul.f32 %v2771, %v2784
    %v2794 = vmul.f32 %v2772, %v2784
    %v2795 = vmul.f32 %v2773, %v2784
    %v2796 = vmul.f32 %v2774, %v2784
    %v2797 = vmul.f32 %v2775, %v2786
    %v2798 = vmul.f32 %v2776, %v2786
    %v2799 = vmul.f32 %v2777, %v2786
    %v2800 = vmul.f32 %v2778, %v2786
    %v2801 = vmul.f32 %v2779, %v2786
    %v2802 = vmul.f32 %v2780, %v2786
    %v2803 = vmul.f32 %v2781, %v2786
    %v2804 = vmul.f32 %v2782, %v2786
    %v2805 = vadd.f32 %v2687, %v2789
    %v2806 = vadd.f32 %v2688, %v2790
    %v2807 = vadd.f32 %v2689, %v2791
    %v2808 = vadd.f32 %v2690, %v2792
    %v2809 = vadd.f32 %v2691, %v2793
    %v2810 = vadd.f32 %v2692, %v2794
    %v2811 = vadd.f32 %v2693, %v2795
    %v2812 = vadd.f32 %v2694, %v2796
    %v2813 = vadd.f32 %v2695, %v2797
    %v2814 = vadd.f32 %v2696, %v2798
    %v2815 = vadd.f32 %v2697, %v2799
    %v2816 = vadd.f32 %v2698, %v2800
    %v2817 = vadd.f32 %v2699, %v2801
    %v2818 = vadd.f32 %v2700, %v2802
    %v2819 = vadd.f32 %v2701, %v2803
    %v2820 = vadd.f32 %v2702, %v2804
    %2821 = vset.pattern.permute.xlu0 4
    %2822 = vperm.xlu0 %2821, %v1991
    %v2823 = vpop.permute.xlu0 %2822
    %2824 = vset.pattern.permute.xlu0 4
    %2825 = vperm.xlu0 %2824, %v1992
    %v2826 = vpop.permute.xlu0 %2825
    %2827 = vset.pattern.permute.xlu0 4
    %2828 = vperm.xlu0 %2827, %v1993
    %v2829 = vpop.permute.xlu0 %2828
    %2830 = vset.pattern.permute.xlu0 4
    %2831 = vperm.xlu0 %2830, %v1994
    %v2832 = vpop.permute.xlu0 %2831
    %2833 = vset.pattern.permute.xlu0 4
    %2834 = vperm.xlu0 %2833, %v1995
    %v2835 = vpop.permute.xlu0 %2834
    %2836 = vset.pattern.permute.xlu0 4
    %2837 = vperm.xlu0 %2836, %v1996
    %v2838 = vpop.permute.xlu0 %2837
    %2839 = vset.pattern.permute.xlu0 4
    %2840 = vperm.xlu0 %2839, %v1997
    %v2841 = vpop.permute.xlu0 %2840
    %2842 = vset.pattern.permute.xlu0 4
    %2843 = vperm.xlu0 %2842, %v1998
    %v2844 = vpop.permute.xlu0 %2843
    %2845 = vset.pattern.permute.xlu0 4
    %2846 = vperm.xlu0 %2845, %v1999
    %v2847 = vpop.permute.xlu0 %2846
    %2848 = vset.pattern.permute.xlu0 4
    %2849 = vperm.xlu0 %2848, %v2000
    %v2850 = vpop.permute.xlu0 %2849
    %2851 = vset.pattern.permute.xlu0 4
    %2852 = vperm.xlu0 %2851, %v2001
    %v2853 = vpop.permute.xlu0 %2852
    %2854 = vset.pattern.permute.xlu0 4
    %2855 = vperm.xlu0 %2854, %v2002
    %v2856 = vpop.permute.xlu0 %2855
    %2857 = vset.pattern.permute.xlu0 4
    %2858 = vperm.xlu0 %2857, %v2003
    %v2859 = vpop.permute.xlu0 %2858
    %2860 = vset.pattern.permute.xlu0 4
    %2861 = vperm.xlu0 %2860, %v2004
    %v2862 = vpop.permute.xlu0 %2861
    %2863 = vset.pattern.permute.xlu0 4
    %2864 = vperm.xlu0 %2863, %v2005
    %v2865 = vpop.permute.xlu0 %2864
    %2866 = vset.pattern.permute.xlu0 4
    %2867 = vperm.xlu0 %2866, %v2006
    %v2868 = vpop.permute.xlu0 %2867
    %v2869 = vrot.slane %v2823, 7
    %v2870 = vrot.slane %v2826, 7
    %v2871 = vrot.slane %v2829, 7
    %v2872 = vrot.slane %v2832, 7
    %v2873 = vrot.slane %v2835, 7
    %v2874 = vrot.slane %v2838, 7
    %v2875 = vrot.slane %v2841, 7
    %v2876 = vrot.slane %v2844, 7
    %v2877 = vrot.slane %v2847, 7
    %v2878 = vrot.slane %v2850, 7
    %v2879 = vrot.slane %v2853, 7
    %v2880 = vrot.slane %v2856, 7
    %v2881 = vrot.slane %v2859, 7
    %v2882 = vrot.slane %v2862, 7
    %v2883 = vrot.slane %v2865, 7
    %v2884 = vrot.slane %v2868, 7
    %v2901 = vmul.f32 %v59, %v2869
    %v2902 = vmul.f32 %v60, %v2869
    %v2903 = vmul.f32 %v61, %v2870
    %v2904 = vmul.f32 %v62, %v2870
    %v2905 = vmul.f32 %v63, %v2871
    %v2906 = vmul.f32 %v64, %v2871
    %v2907 = vmul.f32 %v65, %v2872
    %v2908 = vmul.f32 %v66, %v2872
    %v2909 = vmul.f32 %v67, %v2873
    %v2910 = vmul.f32 %v68, %v2873
    %v2911 = vmul.f32 %v69, %v2874
    %v2912 = vmul.f32 %v70, %v2874
    %v2913 = vmul.f32 %v71, %v2875
    %v2914 = vmul.f32 %v72, %v2875
    %v2915 = vmul.f32 %v73, %v2876
    %v2916 = vmul.f32 %v74, %v2876
    %v2917 = vmul.f32 %v79, %v2877
    %v2918 = vmul.f32 %v80, %v2877
    %v2919 = vmul.f32 %v81, %v2878
    %v2920 = vmul.f32 %v82, %v2878
    %v2921 = vmul.f32 %v83, %v2879
    %v2922 = vmul.f32 %v84, %v2879
    %v2923 = vmul.f32 %v85, %v2880
    %v2924 = vmul.f32 %v86, %v2880
    %v2925 = vmul.f32 %v87, %v2881
    %v2926 = vmul.f32 %v88, %v2881
    %v2927 = vmul.f32 %v89, %v2882
    %v2928 = vmul.f32 %v90, %v2882
    %v2929 = vmul.f32 %v91, %v2883
    %v2930 = vmul.f32 %v92, %v2883
    %v2931 = vmul.f32 %v93, %v2884
    %v2932 = vmul.f32 %v94, %v2884
    %2933 = vrot.lane.b32.xlu0 %v2139, 64
    %v2934 = vpop.permute.xlu0 %2933
    %2935 = vrot.lane.b32.xlu0 %v2143, 64
    %v2936 = vpop.permute.xlu0 %2935
    %v2939 = vmul.f32 %v2901, %v2934
    %v2940 = vmul.f32 %v2902, %v2934
    %v2941 = vmul.f32 %v2903, %v2934
    %v2942 = vmul.f32 %v2904, %v2934
    %v2943 = vmul.f32 %v2905, %v2934
    %v2944 = vmul.f32 %v2906, %v2934
    %v2945 = vmul.f32 %v2907, %v2934
    %v2946 = vmul.f32 %v2908, %v2934
    %v2947 = vmul.f32 %v2909, %v2934
    %v2948 = vmul.f32 %v2910, %v2934
    %v2949 = vmul.f32 %v2911, %v2934
    %v2950 = vmul.f32 %v2912, %v2934
    %v2951 = vmul.f32 %v2913, %v2934
    %v2952 = vmul.f32 %v2914, %v2934
    %v2953 = vmul.f32 %v2915, %v2934
    %v2954 = vmul.f32 %v2916, %v2934
    %v2955 = vmul.f32 %v2917, %v2936
    %v2956 = vmul.f32 %v2918, %v2936
    %v2957 = vmul.f32 %v2919, %v2936
    %v2958 = vmul.f32 %v2920, %v2936
    %v2959 = vmul.f32 %v2921, %v2936
    %v2960 = vmul.f32 %v2922, %v2936
    %v2961 = vmul.f32 %v2923, %v2936
    %v2962 = vmul.f32 %v2924, %v2936
    %v2963 = vmul.f32 %v2925, %v2936
    %v2964 = vmul.f32 %v2926, %v2936
    %v2965 = vmul.f32 %v2927, %v2936
    %v2966 = vmul.f32 %v2928, %v2936
    %v2967 = vmul.f32 %v2929, %v2936
    %v2968 = vmul.f32 %v2930, %v2936
    %v2969 = vmul.f32 %v2931, %v2936
    %v2970 = vmul.f32 %v2932, %v2936
    %v3003 = vrot.slane %v2939, 1
    %v3004 = vrot.slane %v2940, 1
    %v3005 = vsel %vm129, %v3003, %v3004
    %v3006 = vrot.slane %v2941, 1
    %v3007 = vrot.slane %v2942, 1
    %v3008 = vsel %vm129, %v3006, %v3007
    %v3009 = vrot.slane %v2943, 1
    %v3010 = vrot.slane %v2944, 1
    %v3011 = vsel %vm129, %v3009, %v3010
    %v3012 = vrot.slane %v2945, 1
    %v3013 = vrot.slane %v2946, 1
    %v3014 = vsel %vm129, %v3012, %v3013
    %v3015 = vrot.slane %v2947, 1
    %v3016 = vrot.slane %v2948, 1
    %v3017 = vsel %vm129, %v3015, %v3016
    %v3018 = vrot.slane %v2949, 1
    %v3019 = vrot.slane %v2950, 1
    %v3020 = vsel %vm129, %v3018, %v3019
    %v3021 = vrot.slane %v2951, 1
    %v3022 = vrot.slane %v2952, 1
    %v3023 = vsel %vm129, %v3021, %v3022
    %v3024 = vrot.slane %v2953, 1
    %v3025 = vrot.slane %v2954, 1
    %v3026 = vsel %vm129, %v3024, %v3025
    %v3027 = vrot.slane %v2955, 1
    %v3028 = vrot.slane %v2956, 1
    %v3029 = vsel %vm129, %v3027, %v3028
    %v3030 = vrot.slane %v2957, 1
    %v3031 = vrot.slane %v2958, 1
    %v3032 = vsel %vm129, %v3030, %v3031
    %v3033 = vrot.slane %v2959, 1
    %v3034 = vrot.slane %v2960, 1
    %v3035 = vsel %vm129, %v3033, %v3034
    %v3036 = vrot.slane %v2961, 1
    %v3037 = vrot.slane %v2962, 1
    %v3038 = vsel %vm129, %v3036, %v3037
    %v3039 = vrot.slane %v2963, 1
    %v3040 = vrot.slane %v2964, 1
    %v3041 = vsel %vm129, %v3039, %v3040
    %v3042 = vrot.slane %v2965, 1
    %v3043 = vrot.slane %v2966, 1
    %v3044 = vsel %vm129, %v3042, %v3043
    %v3045 = vrot.slane %v2967, 1
    %v3046 = vrot.slane %v2968, 1
    %v3047 = vsel %vm129, %v3045, %v3046
    %v3048 = vrot.slane %v2969, 1
    %v3049 = vrot.slane %v2970, 1
    %v3050 = vsel %vm129, %v3048, %v3049
    %v3067 = vadd.f32 %v2805, %v3005
    %v3068 = vadd.f32 %v2806, %v3008
    %v3069 = vadd.f32 %v2807, %v3011
    %v3070 = vadd.f32 %v2808, %v3014
    %v3071 = vadd.f32 %v2809, %v3017
    %v3072 = vadd.f32 %v2810, %v3020
    %v3073 = vadd.f32 %v2811, %v3023
    %v3074 = vadd.f32 %v2812, %v3026
    %v3075 = vadd.f32 %v2813, %v3029
    %v3076 = vadd.f32 %v2814, %v3032
    %v3077 = vadd.f32 %v2815, %v3035
    %v3078 = vadd.f32 %v2816, %v3038
    %v3079 = vadd.f32 %v2817, %v3041
    %v3080 = vadd.f32 %v2818, %v3044
    %v3081 = vadd.f32 %v2819, %v3047
    %v3082 = vadd.f32 %v2820, %v3050
    %3083 = vset.pattern.permute.xlu0 5
    %3084 = vperm.xlu0 %3083, %v1991
    %v3085 = vpop.permute.xlu0 %3084
    %3086 = vset.pattern.permute.xlu0 5
    %3087 = vperm.xlu0 %3086, %v1992
    %v3088 = vpop.permute.xlu0 %3087
    %3089 = vset.pattern.permute.xlu0 5
    %3090 = vperm.xlu0 %3089, %v1993
    %v3091 = vpop.permute.xlu0 %3090
    %3092 = vset.pattern.permute.xlu0 5
    %3093 = vperm.xlu0 %3092, %v1994
    %v3094 = vpop.permute.xlu0 %3093
    %3095 = vset.pattern.permute.xlu0 5
    %3096 = vperm.xlu0 %3095, %v1995
    %v3097 = vpop.permute.xlu0 %3096
    %3098 = vset.pattern.permute.xlu0 5
    %3099 = vperm.xlu0 %3098, %v1996
    %v3100 = vpop.permute.xlu0 %3099
    %3101 = vset.pattern.permute.xlu0 5
    %3102 = vperm.xlu0 %3101, %v1997
    %v3103 = vpop.permute.xlu0 %3102
    %3104 = vset.pattern.permute.xlu0 5
    %3105 = vperm.xlu0 %3104, %v1998
    %v3106 = vpop.permute.xlu0 %3105
    %3107 = vset.pattern.permute.xlu0 5
    %3108 = vperm.xlu0 %3107, %v1999
    %v3109 = vpop.permute.xlu0 %3108
    %3110 = vset.pattern.permute.xlu0 5
    %3111 = vperm.xlu0 %3110, %v2000
    %v3112 = vpop.permute.xlu0 %3111
    %3113 = vset.pattern.permute.xlu0 5
    %3114 = vperm.xlu0 %3113, %v2001
    %v3115 = vpop.permute.xlu0 %3114
    %3116 = vset.pattern.permute.xlu0 5
    %3117 = vperm.xlu0 %3116, %v2002
    %v3118 = vpop.permute.xlu0 %3117
    %3119 = vset.pattern.permute.xlu0 5
    %3120 = vperm.xlu0 %3119, %v2003
    %v3121 = vpop.permute.xlu0 %3120
    %3122 = vset.pattern.permute.xlu0 5
    %3123 = vperm.xlu0 %3122, %v2004
    %v3124 = vpop.permute.xlu0 %3123
    %3125 = vset.pattern.permute.xlu0 5
    %3126 = vperm.xlu0 %3125, %v2005
    %v3127 = vpop.permute.xlu0 %3126
    %3128 = vset.pattern.permute.xlu0 5
    %3129 = vperm.xlu0 %3128, %v2006
    %v3130 = vpop.permute.xlu0 %3129
    %v3131 = vrot.slane %v3085, 6
    %v3132 = vrot.slane %v3088, 6
    %v3133 = vrot.slane %v3091, 6
    %v3134 = vrot.slane %v3094, 6
    %v3135 = vrot.slane %v3097, 6
    %v3136 = vrot.slane %v3100, 6
    %v3137 = vrot.slane %v3103, 6
    %v3138 = vrot.slane %v3106, 6
    %v3139 = vrot.slane %v3109, 6
    %v3140 = vrot.slane %v3112, 6
    %v3141 = vrot.slane %v3115, 6
    %v3142 = vrot.slane %v3118, 6
    %v3143 = vrot.slane %v3121, 6
    %v3144 = vrot.slane %v3124, 6
    %v3145 = vrot.slane %v3127, 6
    %v3146 = vrot.slane %v3130, 6
    %v3163 = vmul.f32 %v59, %v3131
    %v3164 = vmul.f32 %v60, %v3131
    %v3165 = vmul.f32 %v61, %v3132
    %v3166 = vmul.f32 %v62, %v3132
    %v3167 = vmul.f32 %v63, %v3133
    %v3168 = vmul.f32 %v64, %v3133
    %v3169 = vmul.f32 %v65, %v3134
    %v3170 = vmul.f32 %v66, %v3134
    %v3171 = vmul.f32 %v67, %v3135
    %v3172 = vmul.f32 %v68, %v3135
    %v3173 = vmul.f32 %v69, %v3136
    %v3174 = vmul.f32 %v70, %v3136
    %v3175 = vmul.f32 %v71, %v3137
    %v3176 = vmul.f32 %v72, %v3137
    %v3177 = vmul.f32 %v73, %v3138
    %v3178 = vmul.f32 %v74, %v3138
    %v3179 = vmul.f32 %v79, %v3139
    %v3180 = vmul.f32 %v80, %v3139
    %v3181 = vmul.f32 %v81, %v3140
    %v3182 = vmul.f32 %v82, %v3140
    %v3183 = vmul.f32 %v83, %v3141
    %v3184 = vmul.f32 %v84, %v3141
    %v3185 = vmul.f32 %v85, %v3142
    %v3186 = vmul.f32 %v86, %v3142
    %v3187 = vmul.f32 %v87, %v3143
    %v3188 = vmul.f32 %v88, %v3143
    %v3189 = vmul.f32 %v89, %v3144
    %v3190 = vmul.f32 %v90, %v3144
    %v3191 = vmul.f32 %v91, %v3145
    %v3192 = vmul.f32 %v92, %v3145
    %v3193 = vmul.f32 %v93, %v3146
    %v3194 = vmul.f32 %v94, %v3146
    %3195 = vrot.lane.b32.xlu0 %v2139, 48
    %v3196 = vpop.permute.xlu0 %3195
    %3197 = vrot.lane.b32.xlu0 %v2143, 48
    %v3198 = vpop.permute.xlu0 %3197
    %v3201 = vmul.f32 %v3163, %v3196
    %v3202 = vmul.f32 %v3164, %v3196
    %v3203 = vmul.f32 %v3165, %v3196
    %v3204 = vmul.f32 %v3166, %v3196
    %v3205 = vmul.f32 %v3167, %v3196
    %v3206 = vmul.f32 %v3168, %v3196
    %v3207 = vmul.f32 %v3169, %v3196
    %v3208 = vmul.f32 %v3170, %v3196
    %v3209 = vmul.f32 %v3171, %v3196
    %v3210 = vmul.f32 %v3172, %v3196
    %v3211 = vmul.f32 %v3173, %v3196
    %v3212 = vmul.f32 %v3174, %v3196
    %v3213 = vmul.f32 %v3175, %v3196
    %v3214 = vmul.f32 %v3176, %v3196
    %v3215 = vmul.f32 %v3177, %v3196
    %v3216 = vmul.f32 %v3178, %v3196
    %v3217 = vmul.f32 %v3179, %v3198
    %v3218 = vmul.f32 %v3180, %v3198
    %v3219 = vmul.f32 %v3181, %v3198
    %v3220 = vmul.f32 %v3182, %v3198
    %v3221 = vmul.f32 %v3183, %v3198
    %v3222 = vmul.f32 %v3184, %v3198
    %v3223 = vmul.f32 %v3185, %v3198
    %v3224 = vmul.f32 %v3186, %v3198
    %v3225 = vmul.f32 %v3187, %v3198
    %v3226 = vmul.f32 %v3188, %v3198
    %v3227 = vmul.f32 %v3189, %v3198
    %v3228 = vmul.f32 %v3190, %v3198
    %v3229 = vmul.f32 %v3191, %v3198
    %v3230 = vmul.f32 %v3192, %v3198
    %v3231 = vmul.f32 %v3193, %v3198
    %v3232 = vmul.f32 %v3194, %v3198
    %v3265 = vrot.slane %v3201, 2
    %v3266 = vrot.slane %v3202, 2
    %v3267 = vsel %vm2622, %v3265, %v3266
    %v3268 = vrot.slane %v3203, 2
    %v3269 = vrot.slane %v3204, 2
    %v3270 = vsel %vm2622, %v3268, %v3269
    %v3271 = vrot.slane %v3205, 2
    %v3272 = vrot.slane %v3206, 2
    %v3273 = vsel %vm2622, %v3271, %v3272
    %v3274 = vrot.slane %v3207, 2
    %v3275 = vrot.slane %v3208, 2
    %v3276 = vsel %vm2622, %v3274, %v3275
    %v3277 = vrot.slane %v3209, 2
    %v3278 = vrot.slane %v3210, 2
    %v3279 = vsel %vm2622, %v3277, %v3278
    %v3280 = vrot.slane %v3211, 2
    %v3281 = vrot.slane %v3212, 2
    %v3282 = vsel %vm2622, %v3280, %v3281
    %v3283 = vrot.slane %v3213, 2
    %v3284 = vrot.slane %v3214, 2
    %v3285 = vsel %vm2622, %v3283, %v3284
    %v3286 = vrot.slane %v3215, 2
    %v3287 = vrot.slane %v3216, 2
    %v3288 = vsel %vm2622, %v3286, %v3287
    %v3289 = vrot.slane %v3217, 2
    %v3290 = vrot.slane %v3218, 2
    %v3291 = vsel %vm2622, %v3289, %v3290
    %v3292 = vrot.slane %v3219, 2
    %v3293 = vrot.slane %v3220, 2
    %v3294 = vsel %vm2622, %v3292, %v3293
    %v3295 = vrot.slane %v3221, 2
    %v3296 = vrot.slane %v3222, 2
    %v3297 = vsel %vm2622, %v3295, %v3296
    %v3298 = vrot.slane %v3223, 2
    %v3299 = vrot.slane %v3224, 2
    %v3300 = vsel %vm2622, %v3298, %v3299
    %v3301 = vrot.slane %v3225, 2
    %v3302 = vrot.slane %v3226, 2
    %v3303 = vsel %vm2622, %v3301, %v3302
    %v3304 = vrot.slane %v3227, 2
    %v3305 = vrot.slane %v3228, 2
    %v3306 = vsel %vm2622, %v3304, %v3305
    %v3307 = vrot.slane %v3229, 2
    %v3308 = vrot.slane %v3230, 2
    %v3309 = vsel %vm2622, %v3307, %v3308
    %v3310 = vrot.slane %v3231, 2
    %v3311 = vrot.slane %v3232, 2
    %v3312 = vsel %vm2622, %v3310, %v3311
    %v3329 = vadd.f32 %v3067, %v3267
    %v3330 = vadd.f32 %v3068, %v3270
    %v3331 = vadd.f32 %v3069, %v3273
    %v3332 = vadd.f32 %v3070, %v3276
    %v3333 = vadd.f32 %v3071, %v3279
    %v3334 = vadd.f32 %v3072, %v3282
    %v3335 = vadd.f32 %v3073, %v3285
    %v3336 = vadd.f32 %v3074, %v3288
    %v3337 = vadd.f32 %v3075, %v3291
    %v3338 = vadd.f32 %v3076, %v3294
    %v3339 = vadd.f32 %v3077, %v3297
    %v3340 = vadd.f32 %v3078, %v3300
    %v3341 = vadd.f32 %v3079, %v3303
    %v3342 = vadd.f32 %v3080, %v3306
    %v3343 = vadd.f32 %v3081, %v3309
    %v3344 = vadd.f32 %v3082, %v3312
    %3345 = vset.pattern.permute.xlu0 6
    %3346 = vperm.xlu0 %3345, %v1991
    %v3347 = vpop.permute.xlu0 %3346
    %3349 = vset.pattern.permute.xlu0 6
    %3350 = vperm.xlu0 %3349, %v1992
    %v3351 = vpop.permute.xlu0 %3350
    %3353 = vset.pattern.permute.xlu0 6
    %3354 = vperm.xlu0 %3353, %v1993
    %v3355 = vpop.permute.xlu0 %3354
    %3357 = vset.pattern.permute.xlu0 6
    %3358 = vperm.xlu0 %3357, %v1994
    %v3359 = vpop.permute.xlu0 %3358
    %3361 = vset.pattern.permute.xlu0 6
    %3362 = vperm.xlu0 %3361, %v1995
    %v3363 = vpop.permute.xlu0 %3362
    %3365 = vset.pattern.permute.xlu0 6
    %3366 = vperm.xlu0 %3365, %v1996
    %v3367 = vpop.permute.xlu0 %3366
    %3369 = vset.pattern.permute.xlu0 6
    %3370 = vperm.xlu0 %3369, %v1997
    %v3371 = vpop.permute.xlu0 %3370
    %3373 = vset.pattern.permute.xlu0 6
    %3374 = vperm.xlu0 %3373, %v1998
    %v3375 = vpop.permute.xlu0 %3374
    %3377 = vset.pattern.permute.xlu0 6
    %3378 = vperm.xlu0 %3377, %v1999
    %v3379 = vpop.permute.xlu0 %3378
    %3381 = vset.pattern.permute.xlu0 6
    %3382 = vperm.xlu0 %3381, %v2000
    %v3383 = vpop.permute.xlu0 %3382
    %3385 = vset.pattern.permute.xlu0 6
    %3386 = vperm.xlu0 %3385, %v2001
    %v3387 = vpop.permute.xlu0 %3386
    %3389 = vset.pattern.permute.xlu0 6
    %3390 = vperm.xlu0 %3389, %v2002
    %v3391 = vpop.permute.xlu0 %3390
    %3393 = vset.pattern.permute.xlu0 6
    %3394 = vperm.xlu0 %3393, %v2003
    %v3395 = vpop.permute.xlu0 %3394
    %3397 = vset.pattern.permute.xlu0 6
    %3398 = vperm.xlu0 %3397, %v2004
    %v3399 = vpop.permute.xlu0 %3398
    %3401 = vset.pattern.permute.xlu0 6
    %3402 = vperm.xlu0 %3401, %v2005
    %v3403 = vpop.permute.xlu0 %3402
    %3405 = vset.pattern.permute.xlu0 6
    %3406 = vperm.xlu0 %3405, %v2006
    %v3407 = vpop.permute.xlu0 %3406
    %v3409 = vmul.f32 %v61, %v3347
    %v3410 = vmul.f32 %v63, %v3351
    %v3411 = vmul.f32 %v65, %v3355
    %v3412 = vmul.f32 %v67, %v3359
    %v3413 = vmul.f32 %v69, %v3363
    %v3414 = vmul.f32 %v71, %v3367
    %v3415 = vmul.f32 %v73, %v3371
    %v3416 = vmul.f32 %v75, %v3375
    %v3417 = vmul.f32 %v81, %v3379
    %v3418 = vmul.f32 %v83, %v3383
    %v3419 = vmul.f32 %v85, %v3387
    %v3420 = vmul.f32 %v87, %v3391
    %v3421 = vmul.f32 %v89, %v3395
    %v3422 = vmul.f32 %v91, %v3399
    %v3423 = vmul.f32 %v93, %v3403
    %v3424 = vmul.f32 %v95, %v3407
    %3425 = vrot.lane.b32.xlu0 %v2139, 32
    %v3426 = vpop.permute.xlu0 %3425
    %3427 = vrot.lane.b32.xlu0 %v2143, 32
    %v3428 = vpop.permute.xlu0 %3427
    %v3431 = vmul.f32 %v3409, %v3426
    %v3432 = vmul.f32 %v3410, %v3426
    %v3433 = vmul.f32 %v3411, %v3426
    %v3434 = vmul.f32 %v3412, %v3426
    %v3435 = vmul.f32 %v3413, %v3426
    %v3436 = vmul.f32 %v3414, %v3426
    %v3437 = vmul.f32 %v3415, %v3426
    %v3438 = vmul.f32 %v3416, %v3426
    %v3439 = vmul.f32 %v3417, %v3428
    %v3440 = vmul.f32 %v3418, %v3428
    %v3441 = vmul.f32 %v3419, %v3428
    %v3442 = vmul.f32 %v3420, %v3428
    %v3443 = vmul.f32 %v3421, %v3428
    %v3444 = vmul.f32 %v3422, %v3428
    %v3445 = vmul.f32 %v3423, %v3428
    %v3446 = vmul.f32 %v3424, %v3428
    %v3447 = vadd.f32 %v3329, %v3431
    %v3448 = vadd.f32 %v3330, %v3432
    %v3449 = vadd.f32 %v3331, %v3433
    %v3450 = vadd.f32 %v3332, %v3434
    %v3451 = vadd.f32 %v3333, %v3435
    %v3452 = vadd.f32 %v3334, %v3436
    %v3453 = vadd.f32 %v3335, %v3437
    %v3454 = vadd.f32 %v3336, %v3438
    %v3455 = vadd.f32 %v3337, %v3439
    %v3456 = vadd.f32 %v3338, %v3440
    %v3457 = vadd.f32 %v3339, %v3441
    %v3458 = vadd.f32 %v3340, %v3442
    %v3459 = vadd.f32 %v3341, %v3443
    %v3460 = vadd.f32 %v3342, %v3444
    %v3461 = vadd.f32 %v3343, %v3445
    %v3462 = vadd.f32 %v3344, %v3446
    %3463 = vset.pattern.permute.xlu0 7
    %3464 = vperm.xlu0 %3463, %v1991
    %v3465 = vpop.permute.xlu0 %3464
    %3466 = vset.pattern.permute.xlu0 7
    %3467 = vperm.xlu0 %3466, %v1992
    %v3468 = vpop.permute.xlu0 %3467
    %3469 = vset.pattern.permute.xlu0 7
    %3470 = vperm.xlu0 %3469, %v1993
    %v3471 = vpop.permute.xlu0 %3470
    %3472 = vset.pattern.permute.xlu0 7
    %3473 = vperm.xlu0 %3472, %v1994
    %v3474 = vpop.permute.xlu0 %3473
    %3475 = vset.pattern.permute.xlu0 7
    %3476 = vperm.xlu0 %3475, %v1995
    %v3477 = vpop.permute.xlu0 %3476
    %3478 = vset.pattern.permute.xlu0 7
    %3479 = vperm.xlu0 %3478, %v1996
    %v3480 = vpop.permute.xlu0 %3479
    %3481 = vset.pattern.permute.xlu0 7
    %3482 = vperm.xlu0 %3481, %v1997
    %v3483 = vpop.permute.xlu0 %3482
    %3484 = vset.pattern.permute.xlu0 7
    %3485 = vperm.xlu0 %3484, %v1998
    %v3486 = vpop.permute.xlu0 %3485
    %3487 = vset.pattern.permute.xlu0 7
    %3488 = vperm.xlu0 %3487, %v1999
    %v3489 = vpop.permute.xlu0 %3488
    %3490 = vset.pattern.permute.xlu0 7
    %3491 = vperm.xlu0 %3490, %v2000
    %v3492 = vpop.permute.xlu0 %3491
    %3493 = vset.pattern.permute.xlu0 7
    %3494 = vperm.xlu0 %3493, %v2001
    %v3495 = vpop.permute.xlu0 %3494
    %3496 = vset.pattern.permute.xlu0 7
    %3497 = vperm.xlu0 %3496, %v2002
    %v3498 = vpop.permute.xlu0 %3497
    %3499 = vset.pattern.permute.xlu0 7
    %3500 = vperm.xlu0 %3499, %v2003
    %v3501 = vpop.permute.xlu0 %3500
    %3502 = vset.pattern.permute.xlu0 7
    %3503 = vperm.xlu0 %3502, %v2004
    %v3504 = vpop.permute.xlu0 %3503
    %3505 = vset.pattern.permute.xlu0 7
    %3506 = vperm.xlu0 %3505, %v2005
    %v3507 = vpop.permute.xlu0 %3506
    %3508 = vset.pattern.permute.xlu0 7
    %3509 = vperm.xlu0 %3508, %v2006
    %v3510 = vpop.permute.xlu0 %3509
    %v3511 = vrot.slane %v3465, 7
    %v3512 = vrot.slane %v3468, 7
    %v3513 = vrot.slane %v3471, 7
    %v3514 = vrot.slane %v3474, 7
    %v3515 = vrot.slane %v3477, 7
    %v3516 = vrot.slane %v3480, 7
    %v3517 = vrot.slane %v3483, 7
    %v3518 = vrot.slane %v3486, 7
    %v3519 = vrot.slane %v3489, 7
    %v3520 = vrot.slane %v3492, 7
    %v3521 = vrot.slane %v3495, 7
    %v3522 = vrot.slane %v3498, 7
    %v3523 = vrot.slane %v3501, 7
    %v3524 = vrot.slane %v3504, 7
    %v3525 = vrot.slane %v3507, 7
    %v3526 = vrot.slane %v3510, 7
    %v3543 = vmul.f32 %v61, %v3511
    %v3544 = vmul.f32 %v62, %v3511
    %v3545 = vmul.f32 %v63, %v3512
    %v3546 = vmul.f32 %v64, %v3512
    %v3547 = vmul.f32 %v65, %v3513
    %v3548 = vmul.f32 %v66, %v3513
    %v3549 = vmul.f32 %v67, %v3514
    %v3550 = vmul.f32 %v68, %v3514
    %v3551 = vmul.f32 %v69, %v3515
    %v3552 = vmul.f32 %v70, %v3515
    %v3553 = vmul.f32 %v71, %v3516
    %v3554 = vmul.f32 %v72, %v3516
    %v3555 = vmul.f32 %v73, %v3517
    %v3556 = vmul.f32 %v74, %v3517
    %v3557 = vmul.f32 %v75, %v3518
    %v3558 = vmul.f32 %v76, %v3518
    %v3559 = vmul.f32 %v81, %v3519
    %v3560 = vmul.f32 %v82, %v3519
    %v3561 = vmul.f32 %v83, %v3520
    %v3562 = vmul.f32 %v84, %v3520
    %v3563 = vmul.f32 %v85, %v3521
    %v3564 = vmul.f32 %v86, %v3521
    %v3565 = vmul.f32 %v87, %v3522
    %v3566 = vmul.f32 %v88, %v3522
    %v3567 = vmul.f32 %v89, %v3523
    %v3568 = vmul.f32 %v90, %v3523
    %v3569 = vmul.f32 %v91, %v3524
    %v3570 = vmul.f32 %v92, %v3524
    %v3571 = vmul.f32 %v93, %v3525
    %v3572 = vmul.f32 %v94, %v3525
    %v3573 = vmul.f32 %v95, %v3526
    %v3574 = vmul.f32 %v96, %v3526
    %3575 = vrot.lane.b32.xlu0 %v2139, 16
    %v3576 = vpop.permute.xlu0 %3575
    %3577 = vrot.lane.b32.xlu0 %v2143, 16
    %v3578 = vpop.permute.xlu0 %3577
    %v3581 = vmul.f32 %v3543, %v3576
    %v3582 = vmul.f32 %v3544, %v3576
    %v3583 = vmul.f32 %v3545, %v3576
    %v3584 = vmul.f32 %v3546, %v3576
    %v3585 = vmul.f32 %v3547, %v3576
    %v3586 = vmul.f32 %v3548, %v3576
    %v3587 = vmul.f32 %v3549, %v3576
    %v3588 = vmul.f32 %v3550, %v3576
    %v3589 = vmul.f32 %v3551, %v3576
    %v3590 = vmul.f32 %v3552, %v3576
    %v3591 = vmul.f32 %v3553, %v3576
    %v3592 = vmul.f32 %v3554, %v3576
    %v3593 = vmul.f32 %v3555, %v3576
    %v3594 = vmul.f32 %v3556, %v3576
    %v3595 = vmul.f32 %v3557, %v3576
    %v3596 = vmul.f32 %v3558, %v3576
    %v3597 = vmul.f32 %v3559, %v3578
    %v3598 = vmul.f32 %v3560, %v3578
    %v3599 = vmul.f32 %v3561, %v3578
    %v3600 = vmul.f32 %v3562, %v3578
    %v3601 = vmul.f32 %v3563, %v3578
    %v3602 = vmul.f32 %v3564, %v3578
    %v3603 = vmul.f32 %v3565, %v3578
    %v3604 = vmul.f32 %v3566, %v3578
    %v3605 = vmul.f32 %v3567, %v3578
    %v3606 = vmul.f32 %v3568, %v3578
    %v3607 = vmul.f32 %v3569, %v3578
    %v3608 = vmul.f32 %v3570, %v3578
    %v3609 = vmul.f32 %v3571, %v3578
    %v3610 = vmul.f32 %v3572, %v3578
    %v3611 = vmul.f32 %v3573, %v3578
    %v3612 = vmul.f32 %v3574, %v3578
    %v3645 = vrot.slane %v3581, 1
    %v3646 = vrot.slane %v3582, 1
    %v3647 = vsel %vm129, %v3645, %v3646
    %v3648 = vrot.slane %v3583, 1
    %v3649 = vrot.slane %v3584, 1
    %v3650 = vsel %vm129, %v3648, %v3649
    %v3651 = vrot.slane %v3585, 1
    %v3652 = vrot.slane %v3586, 1
    %v3653 = vsel %vm129, %v3651, %v3652
    %v3654 = vrot.slane %v3587, 1
    %v3655 = vrot.slane %v3588, 1
    %v3656 = vsel %vm129, %v3654, %v3655
    %v3657 = vrot.slane %v3589, 1
    %v3658 = vrot.slane %v3590, 1
    %v3659 = vsel %vm129, %v3657, %v3658
    %v3660 = vrot.slane %v3591, 1
    %v3661 = vrot.slane %v3592, 1
    %v3662 = vsel %vm129, %v3660, %v3661
    %v3663 = vrot.slane %v3593, 1
    %v3664 = vrot.slane %v3594, 1
    %v3665 = vsel %vm129, %v3663, %v3664
    %v3666 = vrot.slane %v3595, 1
    %v3667 = vrot.slane %v3596, 1
    %v3668 = vsel %vm129, %v3666, %v3667
    %v3669 = vrot.slane %v3597, 1
    %v3670 = vrot.slane %v3598, 1
    %v3671 = vsel %vm129, %v3669, %v3670
    %v3672 = vrot.slane %v3599, 1
    %v3673 = vrot.slane %v3600, 1
    %v3674 = vsel %vm129, %v3672, %v3673
    %v3675 = vrot.slane %v3601, 1
    %v3676 = vrot.slane %v3602, 1
    %v3677 = vsel %vm129, %v3675, %v3676
    %v3678 = vrot.slane %v3603, 1
    %v3679 = vrot.slane %v3604, 1
    %v3680 = vsel %vm129, %v3678, %v3679
    %v3681 = vrot.slane %v3605, 1
    %v3682 = vrot.slane %v3606, 1
    %v3683 = vsel %vm129, %v3681, %v3682
    %v3684 = vrot.slane %v3607, 1
    %v3685 = vrot.slane %v3608, 1
    %v3686 = vsel %vm129, %v3684, %v3685
    %v3687 = vrot.slane %v3609, 1
    %v3688 = vrot.slane %v3610, 1
    %v3689 = vsel %vm129, %v3687, %v3688
    %v3690 = vrot.slane %v3611, 1
    %v3691 = vrot.slane %v3612, 1
    %v3692 = vsel %vm129, %v3690, %v3691
    %v3709 = vadd.f32 %v3447, %v3647
    %v3710 = vadd.f32 %v3448, %v3650
    %v3711 = vadd.f32 %v3449, %v3653
    %v3712 = vadd.f32 %v3450, %v3656
    %v3713 = vadd.f32 %v3451, %v3659
    %v3714 = vadd.f32 %v3452, %v3662
    %v3715 = vadd.f32 %v3453, %v3665
    %v3716 = vadd.f32 %v3454, %v3668
    %v3717 = vadd.f32 %v3455, %v3671
    %v3718 = vadd.f32 %v3456, %v3674
    %v3719 = vadd.f32 %v3457, %v3677
    %v3720 = vadd.f32 %v3458, %v3680
    %v3721 = vadd.f32 %v3459, %v3683
    %v3722 = vadd.f32 %v3460, %v3686
    %v3723 = vadd.f32 %v3461, %v3689
    %v3724 = vadd.f32 %v3462, %v3692
    %v3727 = vunpack.c.l.s4 1966171168
    %v3728 = vunpack.c.0.s8 %v3727
    %v3729 = vlaneseq
    %v3730 = vshrl.u32 %v3729, 7
    %v3731 = vsub.s32 %v3728, %v3730
    %v3732 = vrot.slane %v2016, %v3731
    %v3733 = vcombine.high %v3732, %v3732
    %v3735 = vunpack.c.l.s4 1966171168
    %v3736 = vunpack.c.0.s8 %v3735
    %v3737 = vlaneseq
    %v3738 = vshrl.u32 %v3737, 7
    %v3739 = vsub.s32 %v3736, %v3738
    %v3740 = vrot.slane %v3732, %v3739
    %v3742 = vunpack.c.l.s4 1966171168
    %v3743 = vunpack.c.0.s8 %v3742
    %v3744 = vlaneseq
    %v3745 = vshrl.u32 %v3744, 7
    %v3746 = vsub.s32 %v3743, %v3745
    %v3747 = vrot.slane %v3733, %v3746
    %3748 = vset.pattern.permute.xlu0 8
    %3749 = vperm.xlu0 %3748, %v1991
    %v3750 = vpop.permute.xlu0 %3749
    %3751 = vset.pattern.permute.xlu0 8
    %3752 = vperm.xlu0 %3751, %v1992
    %v3753 = vpop.permute.xlu0 %3752
    %3754 = vset.pattern.permute.xlu0 8
    %3755 = vperm.xlu0 %3754, %v1993
    %v3756 = vpop.permute.xlu0 %3755
    %3757 = vset.pattern.permute.xlu0 8
    %3758 = vperm.xlu0 %3757, %v1994
    %v3759 = vpop.permute.xlu0 %3758
    %3760 = vset.pattern.permute.xlu0 8
    %3761 = vperm.xlu0 %3760, %v1995
    %v3762 = vpop.permute.xlu0 %3761
    %3763 = vset.pattern.permute.xlu0 8
    %3764 = vperm.xlu0 %3763, %v1996
    %v3765 = vpop.permute.xlu0 %3764
    %3766 = vset.pattern.permute.xlu0 8
    %3767 = vperm.xlu0 %3766, %v1997
    %v3768 = vpop.permute.xlu0 %3767
    %3769 = vset.pattern.permute.xlu0 8
    %3770 = vperm.xlu0 %3769, %v1998
    %v3771 = vpop.permute.xlu0 %3770
    %3772 = vset.pattern.permute.xlu0 8
    %3773 = vperm.xlu0 %3772, %v1999
    %v3774 = vpop.permute.xlu0 %3773
    %3775 = vset.pattern.permute.xlu0 8
    %3776 = vperm.xlu0 %3775, %v2000
    %v3777 = vpop.permute.xlu0 %3776
    %3778 = vset.pattern.permute.xlu0 8
    %3779 = vperm.xlu0 %3778, %v2001
    %v3780 = vpop.permute.xlu0 %3779
    %3781 = vset.pattern.permute.xlu0 8
    %3782 = vperm.xlu0 %3781, %v2002
    %v3783 = vpop.permute.xlu0 %3782
    %3784 = vset.pattern.permute.xlu0 8
    %3785 = vperm.xlu0 %3784, %v2003
    %v3786 = vpop.permute.xlu0 %3785
    %3787 = vset.pattern.permute.xlu0 8
    %3788 = vperm.xlu0 %3787, %v2004
    %v3789 = vpop.permute.xlu0 %3788
    %3790 = vset.pattern.permute.xlu0 8
    %3791 = vperm.xlu0 %3790, %v2005
    %v3792 = vpop.permute.xlu0 %3791
    %3793 = vset.pattern.permute.xlu0 8
    %3794 = vperm.xlu0 %3793, %v2006
    %v3795 = vpop.permute.xlu0 %3794
    %v3796 = vrot.slane %v3750, 6
    %v3797 = vrot.slane %v3753, 6
    %v3798 = vrot.slane %v3756, 6
    %v3799 = vrot.slane %v3759, 6
    %v3800 = vrot.slane %v3762, 6
    %v3801 = vrot.slane %v3765, 6
    %v3802 = vrot.slane %v3768, 6
    %v3803 = vrot.slane %v3771, 6
    %v3804 = vrot.slane %v3774, 6
    %v3805 = vrot.slane %v3777, 6
    %v3806 = vrot.slane %v3780, 6
    %v3807 = vrot.slane %v3783, 6
    %v3808 = vrot.slane %v3786, 6
    %v3809 = vrot.slane %v3789, 6
    %v3810 = vrot.slane %v3792, 6
    %v3811 = vrot.slane %v3795, 6
    %v3828 = vmul.f32 %v61, %v3796
    %v3829 = vmul.f32 %v62, %v3796
    %v3830 = vmul.f32 %v63, %v3797
    %v3831 = vmul.f32 %v64, %v3797
    %v3832 = vmul.f32 %v65, %v3798
    %v3833 = vmul.f32 %v66, %v3798
    %v3834 = vmul.f32 %v67, %v3799
    %v3835 = vmul.f32 %v68, %v3799
    %v3836 = vmul.f32 %v69, %v3800
    %v3837 = vmul.f32 %v70, %v3800
    %v3838 = vmul.f32 %v71, %v3801
    %v3839 = vmul.f32 %v72, %v3801
    %v3840 = vmul.f32 %v73, %v3802
    %v3841 = vmul.f32 %v74, %v3802
    %v3842 = vmul.f32 %v75, %v3803
    %v3843 = vmul.f32 %v76, %v3803
    %v3844 = vmul.f32 %v81, %v3804
    %v3845 = vmul.f32 %v82, %v3804
    %v3846 = vmul.f32 %v83, %v3805
    %v3847 = vmul.f32 %v84, %v3805
    %v3848 = vmul.f32 %v85, %v3806
    %v3849 = vmul.f32 %v86, %v3806
    %v3850 = vmul.f32 %v87, %v3807
    %v3851 = vmul.f32 %v88, %v3807
    %v3852 = vmul.f32 %v89, %v3808
    %v3853 = vmul.f32 %v90, %v3808
    %v3854 = vmul.f32 %v91, %v3809
    %v3855 = vmul.f32 %v92, %v3809
    %v3856 = vmul.f32 %v93, %v3810
    %v3857 = vmul.f32 %v94, %v3810
    %v3858 = vmul.f32 %v95, %v3811
    %v3859 = vmul.f32 %v96, %v3811
    %v3860 = vlaneseq
    %v3861 = vshrl.u32 %v3860, 7
    %v3862 = vsub.s32 0, %v3861
    %v3863 = vrot.slane %v3740, %v3862
    %v3864 = vlaneseq
    %v3865 = vshrl.u32 %v3864, 7
    %v3866 = vsub.s32 0, %v3865
    %v3867 = vrot.slane %v3747, %v3866
    %v3870 = vmul.f32 %v3828, %v3863
    %v3871 = vmul.f32 %v3829, %v3863
    %v3872 = vmul.f32 %v3830, %v3863
    %v3873 = vmul.f32 %v3831, %v3863
    %v3874 = vmul.f32 %v3832, %v3863
    %v3875 = vmul.f32 %v3833, %v3863
    %v3876 = vmul.f32 %v3834, %v3863
    %v3877 = vmul.f32 %v3835, %v3863
    %v3878 = vmul.f32 %v3836, %v3863
    %v3879 = vmul.f32 %v3837, %v3863
    %v3880 = vmul.f32 %v3838, %v3863
    %v3881 = vmul.f32 %v3839, %v3863
    %v3882 = vmul.f32 %v3840, %v3863
    %v3883 = vmul.f32 %v3841, %v3863
    %v3884 = vmul.f32 %v3842, %v3863
    %v3885 = vmul.f32 %v3843, %v3863
    %v3886 = vmul.f32 %v3844, %v3867
    %v3887 = vmul.f32 %v3845, %v3867
    %v3888 = vmul.f32 %v3846, %v3867
    %v3889 = vmul.f32 %v3847, %v3867
    %v3890 = vmul.f32 %v3848, %v3867
    %v3891 = vmul.f32 %v3849, %v3867
    %v3892 = vmul.f32 %v3850, %v3867
    %v3893 = vmul.f32 %v3851, %v3867
    %v3894 = vmul.f32 %v3852, %v3867
    %v3895 = vmul.f32 %v3853, %v3867
    %v3896 = vmul.f32 %v3854, %v3867
    %v3897 = vmul.f32 %v3855, %v3867
    %v3898 = vmul.f32 %v3856, %v3867
    %v3899 = vmul.f32 %v3857, %v3867
    %v3900 = vmul.f32 %v3858, %v3867
    %v3901 = vmul.f32 %v3859, %v3867
    %v3934 = vrot.slane %v3870, 2
    %v3935 = vrot.slane %v3871, 2
    %v3936 = vsel %vm2622, %v3934, %v3935
    %v3937 = vrot.slane %v3872, 2
    %v3938 = vrot.slane %v3873, 2
    %v3939 = vsel %vm2622, %v3937, %v3938
    %v3940 = vrot.slane %v3874, 2
    %v3941 = vrot.slane %v3875, 2
    %v3942 = vsel %vm2622, %v3940, %v3941
    %v3943 = vrot.slane %v3876, 2
    %v3944 = vrot.slane %v3877, 2
    %v3945 = vsel %vm2622, %v3943, %v3944
    %v3946 = vrot.slane %v3878, 2
    %v3947 = vrot.slane %v3879, 2
    %v3948 = vsel %vm2622, %v3946, %v3947
    %v3949 = vrot.slane %v3880, 2
    %v3950 = vrot.slane %v3881, 2
    %v3951 = vsel %vm2622, %v3949, %v3950
    %v3952 = vrot.slane %v3882, 2
    %v3953 = vrot.slane %v3883, 2
    %v3954 = vsel %vm2622, %v3952, %v3953
    %v3955 = vrot.slane %v3884, 2
    %v3956 = vrot.slane %v3885, 2
    %v3957 = vsel %vm2622, %v3955, %v3956
    %v3958 = vrot.slane %v3886, 2
    %v3959 = vrot.slane %v3887, 2
    %v3960 = vsel %vm2622, %v3958, %v3959
    %v3961 = vrot.slane %v3888, 2
    %v3962 = vrot.slane %v3889, 2
    %v3963 = vsel %vm2622, %v3961, %v3962
    %v3964 = vrot.slane %v3890, 2
    %v3965 = vrot.slane %v3891, 2
    %v3966 = vsel %vm2622, %v3964, %v3965
    %v3967 = vrot.slane %v3892, 2
    %v3968 = vrot.slane %v3893, 2
    %v3969 = vsel %vm2622, %v3967, %v3968
    %v3970 = vrot.slane %v3894, 2
    %v3971 = vrot.slane %v3895, 2
    %v3972 = vsel %vm2622, %v3970, %v3971
    %v3973 = vrot.slane %v3896, 2
    %v3974 = vrot.slane %v3897, 2
    %v3975 = vsel %vm2622, %v3973, %v3974
    %v3976 = vrot.slane %v3898, 2
    %v3977 = vrot.slane %v3899, 2
    %v3978 = vsel %vm2622, %v3976, %v3977
    %v3979 = vrot.slane %v3900, 2
    %v3980 = vrot.slane %v3901, 2
    %v3981 = vsel %vm2622, %v3979, %v3980
    %v3998 = vadd.f32 %v3709, %v3936
    %v3999 = vadd.f32 %v3710, %v3939
    %v4000 = vadd.f32 %v3711, %v3942
    %v4001 = vadd.f32 %v3712, %v3945
    %v4002 = vadd.f32 %v3713, %v3948
    %v4003 = vadd.f32 %v3714, %v3951
    %v4004 = vadd.f32 %v3715, %v3954
    %v4005 = vadd.f32 %v3716, %v3957
    %v4006 = vadd.f32 %v3717, %v3960
    %v4007 = vadd.f32 %v3718, %v3963
    %v4008 = vadd.f32 %v3719, %v3966
    %v4009 = vadd.f32 %v3720, %v3969
    %v4010 = vadd.f32 %v3721, %v3972
    %v4011 = vadd.f32 %v3722, %v3975
    %v4012 = vadd.f32 %v3723, %v3978
    %v4013 = vadd.f32 %v3724, %v3981
    %v4014 = vmul.f32 %v3998, 0.11111111
    %v4015 = vmul.f32 %v3999, 0.11111111
    %v4016 = vmul.f32 %v4000, 0.11111111
    %v4017 = vmul.f32 %v4001, 0.11111111
    %v4018 = vmul.f32 %v4002, 0.11111111
    %v4019 = vmul.f32 %v4003, 0.11111111
    %v4020 = vmul.f32 %v4004, 0.11111111
    %v4021 = vmul.f32 %v4005, 0.11111111
    %v4022 = vmul.f32 %v4006, 0.11111111
    %v4023 = vmul.f32 %v4007, 0.11111111
    %v4024 = vmul.f32 %v4008, 0.11111111
    %v4025 = vmul.f32 %v4009, 0.11111111
    %v4026 = vmul.f32 %v4010, 0.11111111
    %v4027 = vmul.f32 %v4011, 0.11111111
    %v4028 = vmul.f32 %v4012, 0.11111111
    %v4029 = vmul.f32 %v4013, 0.11111111
    %v4030 = vadd.f32 %v4014, %v132
    %v4031 = vadd.f32 %v4015, %v135
    %v4032 = vadd.f32 %v4016, %v138
    %v4033 = vadd.f32 %v4017, %v141
    %v4034 = vadd.f32 %v4018, %v144
    %v4035 = vadd.f32 %v4019, %v147
    %v4036 = vadd.f32 %v4020, %v150
    %v4037 = vadd.f32 %v4021, %v153
    %v4038 = vadd.f32 %v4022, %v156
    %v4039 = vadd.f32 %v4023, %v159
    %v4040 = vadd.f32 %v4024, %v162
    %v4041 = vadd.f32 %v4025, %v165
    %v4042 = vadd.f32 %v4026, %v168
    %v4043 = vadd.f32 %v4027, %v171
    %v4044 = vadd.f32 %v4028, %v174
    %v4045 = vadd.f32 %v4029, %v177
    %4046 = vst.msk [vmem:[#allocation2] sm:$0xff] %vm180, %v4030
    %4047 = vst.msk [vmem:[#allocation2 + $0x8] sm:$0xff] %vm180, %v4031
    %4048 = vst.msk [vmem:[#allocation2 + $0x10] sm:$0xff] %vm180, %v4032
    %4049 = vst.msk [vmem:[#allocation2 + $0x18] sm:$0xff] %vm180, %v4033
    %4050 = vst.msk [vmem:[#allocation2 + $0x20] sm:$0xff] %vm180, %v4034
    %4051 = vst.msk [vmem:[#allocation2 + $0x28] sm:$0xff] %vm180, %v4035
    %4052 = vst.msk [vmem:[#allocation2 + $0x30] sm:$0xff] %vm180, %v4036
    %4053 = vst.msk [vmem:[#allocation2 + $0x38] sm:$0xff] %vm180, %v4037
    %4054 = vst.msk [vmem:[#allocation2 + $0x40] sm:$0xff] %vm180, %v4038
    %4055 = vst.msk [vmem:[#allocation2 + $0x48] sm:$0xff] %vm180, %v4039
    %4056 = vst.msk [vmem:[#allocation2 + $0x50] sm:$0xff] %vm180, %v4040
    %4057 = vst.msk [vmem:[#allocation2 + $0x58] sm:$0xff] %vm180, %v4041
    %4058 = vst.msk [vmem:[#allocation2 + $0x60] sm:$0xff] %vm180, %v4042
    %4059 = vst.msk [vmem:[#allocation2 + $0x68] sm:$0xff] %vm180, %v4043
    %4060 = vst.msk [vmem:[#allocation2 + $0x70] sm:$0xff] %vm180, %v4044
    %4061 = vst.msk [vmem:[#allocation2 + $0x78] sm:$0xff] %vm180, %v4045
    // Predicated region
    $region66: #{_lambda_.1} parent=1 // pred_check
      _
    $region67: #{_lambda_.1} parent=1 // pred_check_branch
      %4063 = sbr.rel (0) target = $region69
    $region68: #{_lambda_.1} parent=1 // pred_region
      %s4065 = ssub.s32 2048, 2048
      %4066 = vsyncadd [#allocation3], %s4065
      %s4067 = sshll.u32 [#allocation2], 4
      %s4068 = int_to_ptr.vmem [resolvable:$true] %s4067
      %4073 = dma.vmem_to_hbm [thread:$0]  %s4068, 2048, %s16, [#allocation3], 128, 128, 8
    $region69: #{_lambda_.1} parent=1 // pred_fallthru
      _
    // Predicated region
    $region70: #{_lambda_.1} parent=1 // pred_check
      _
    $region71: #{_lambda_.1} parent=1 // pred_check_branch
      %4075 = sbr.rel (0) target = $region73
    $region72: #{_lambda_.1} parent=1 // pred_region
      _
    $region73: #{_lambda_.1} parent=1 // pred_fallthru
      _
    // Predicated region
    $region74: #{_lambda_.1} parent=1 // pred_check
      _
    $region75: #{_lambda_.1} parent=1 // pred_check_branch
      %4077 = sbr.rel (0) target = $region77
    $region76: #{_lambda_.1} parent=1 // pred_region
      _
    $region77: #{_lambda_.1} parent=1 // pred_fallthru
      _
    // Predicated region
    $region78: #{_lambda_.1} parent=1 // pred_check
      _
    $region79: #{_lambda_.1} parent=1 // pred_check_branch
      %4079 = sbr.rel (0) target = $region81
    $region80: #{_lambda_.1} parent=1 // pred_region
      %4080 = dma.done [#allocation3], 2048
    $region81: #{_lambda_.1} parent=1 // pred_fallthru
      _
    // Predicated region
    $region82: #{_lambda_.1} parent=1 // pred_check
      _
    $region83: #{_lambda_.1} parent=1 // pred_check_branch
      %4082 = sbr.rel (0) target = $region85
    $region84: #{_lambda_.1} parent=1 // pred_region
      _
    $region85: #{_lambda_.1} parent=1 // pred_fallthru
      _
    // Predicated region
    $region86: #{_lambda_.1} parent=1 // pred_check
      _
    $region87: #{_lambda_.1} parent=1 // pred_check_branch
      %4084 = sbr.rel (0) target = $region89
    $region88: #{_lambda_.1} parent=1 // pred_region
      _
    $region89: #{_lambda_.1} parent=1 // pred_fallthru
      _
    %4085 = vsyncpa [#allocation3], 1

</llo_original>
